<compile_context>
chip_gen: v7x
topology: tpu7x:2x2x1
jax: 0.10.0
libtpu: 0.0.40
codegen_flags: <defaults>
</compile_context>

<pallas_src>
import math
import numpy as np

import jax
import jax.numpy as jnp
from jax.experimental import pallas as pl
from jax.experimental.pallas import tpu as pltpu

DIM = 4              # feature dim of x / y
HIDDEN = 32          # hidden_dim
NUM_STEPS = 100      # diffusion num_steps
I_MAX_VALUE = 100.0  # i_emb = PositionalEncoding(hidden_dim, max_value=100)
PACK = 4             # points per 128-lane row (PACK * HIDDEN == 128)
PT_W = 16            # lanes per point in the packed input slab:
                     #   [0:4] y_noisy, [4:8] noise, [8] (1-pad), [9] t, rest 0

# Rows of the packed `consts` (16, 128) slab (each row is lane-group tiled).
C_L1B, C_L2B, C_IPB1, C_IPB2, C_ZPB1, C_ZPB2 = 0, 1, 2, 3, 4, 5
C_NB1, C_NB2, C_NB3, C_PLW, C_PLB, C_PSC, C_PSH = 6, 7, 8, 9, 10, 11, 12
# Slices of the block-diagonal hidden-weight stack (6, 128, 128).
W_L2, W_IP1, W_IP2, W_N1, W_N2, W_N3 = 0, 1, 2, 3, 4, 5


def _ndp_loss_kernel(pt_ref, z_ref, ctx_ref, w_in_ref, w_hh_ref, w_zp_ref,
                     consts_ref, scal_ref, out_ref):
    f32, bf16 = jnp.float32, jnp.bfloat16
    BT, _, M = ctx_ref.shape
    R = pt_ref.shape[0]                       # BT * N // PACK packed rows
    N4 = R // BT
    H = HIDDEN

    slab = pt_ref[...]                        # (R, 64) f32 packed point data
    slab_b = slab.astype(bf16)                # bf16 copy for the MXU

    def crow(r):                              # one (1, 128) tiled constant row
        return consts_ref[r:r + 1, :]

    inv_s2 = scal_ref[0]                      # 1/sigma^2 as an SMEM scalar

    # ---- z_proj on the context points (plain 32-lane path, M is tiny) -------
    zw1 = w_zp_ref[0:8, :].astype(bf16)                        # (8, H)
    zw2 = w_zp_ref[8:8 + H, :].astype(bf16)                    # (H, H)
    zp = jnp.dot(z_ref[...].astype(bf16), zw1, preferred_element_type=f32)
    zp = jnp.tanh(zp + crow(C_ZPB1)[:, :H])
    zp = jnp.dot(zp.astype(bf16), zw2, preferred_element_type=f32) \
        + crow(C_ZPB2)[:, :H]
    zp3 = zp.reshape(BT, M, H).astype(bf16)                    # (BT, M, H)

    # ---- RBF kernel + context contraction, one lane group at a time ---------
    # (1 - z_pad) is folded into the kernel columns: k @ diag(m) @ z.
    tz = ctx_ref[:, 0:1, :]                                    # (BT, 1, M)
    zm = ctx_ref[:, 1:2, :]                                    # (BT, 1, M)
    zc_parts = []
    for g in range(PACK):
        t_g = slab[:, PT_W * g + 9: PT_W * g + 10].reshape(BT, N4, 1)
        d = t_g - tz                                           # (BT, N4, M)
        k_g = jnp.exp(-(d * d) * inv_s2) * zm
        zc_parts.append(jnp.einsum('bnm,bmh->bnh', k_g.astype(bf16), zp3,
                                   preferred_element_type=f32))
    zc = jnp.concatenate(zc_parts, axis=-1).reshape(R, PACK * H)

    # ---- diffusion-step embedding (per batch element, lane-group tiled) -----
    ii = ctx_ref[:, 2:3, 0:1].reshape(BT, 1)                   # (BT, 1)
    lane = jax.lax.broadcasted_iota(jnp.int32, (1, PACK * H), 1) % H
    lin = (ii * (1.0 / I_MAX_VALUE)) * crow(C_PLW) + crow(C_PLB)
    per = jnp.sin(ii * crow(C_PSC) + crow(C_PSH))
    emb = jnp.where(lane < (H // 2), lin, per)                 # (BT, 128)
    ip = jnp.tanh(jnp.dot(emb.astype(bf16), w_hh_ref[W_IP1],
                          preferred_element_type=f32) + crow(C_IPB1))
    ip = jnp.dot(ip.astype(bf16), w_hh_ref[W_IP2],
                 preferred_element_type=f32) + crow(C_IPB2)    # (BT, 128)

    # ---- denoiser trunk on the packed, lane-dense (R, 128) slab -------------
    h = jnp.dot(slab_b, w_in_ref[...], preferred_element_type=f32) \
        + crow(C_L1B) + zc
    h = jnp.maximum(h, 0.0)
    h = jnp.dot(h.astype(bf16), w_hh_ref[W_L2], preferred_element_type=f32) \
        + crow(C_L2B)
    h = h.reshape(BT, N4, PACK * H) + ip[:, None, :]           # sublane bcast add
    h = jnp.maximum(h, 0.0).reshape(R, PACK * H)
    h = jnp.tanh(jnp.dot(h.astype(bf16), w_hh_ref[W_N1],
                         preferred_element_type=f32) + crow(C_NB1))
    h = jnp.tanh(jnp.dot(h.astype(bf16), w_hh_ref[W_N2],
                         preferred_element_type=f32) + crow(C_NB2))
    pred = jnp.dot(h.astype(bf16), w_hh_ref[W_N3],
                   preferred_element_type=f32) + crow(C_NB3)
    # group g of `pred` holds the D model outputs at lanes [H*g : H*g + DIM].

    # ---- masked squared-error loss, reduced to one scalar per tile ----------
    tot = jnp.zeros((1, 1), f32)
    for g in range(PACK):
        pred_g = pred[:, H * g: H * g + DIM]                   # explicit [:, :D]
        noise_g = slab[:, PT_W * g + 4: PT_W * g + 8]
        mask_g = slab[:, PT_W * g + 8: PT_W * g + 9]           # (1 - pad)
        e = mask_g * (pred_g - noise_g)
        s = jnp.sum(e * e, axis=0, keepdims=True)              # (1, DIM)
        tot = tot + jnp.sum(s, axis=1, keepdims=True)          # (1, 1)
    out_ref[0] = tot * (1.0 / DIM)


def init_params(key, dim=DIM, hidden=HIDDEN):
    """Deterministic parameter init mimicking torch.nn.Linear defaults."""
    keys = jax.random.split(key, 32)
    it = iter(keys)

    def linear(in_f, out_f):
        k1, k2 = next(it), next(it)
        bound = 1.0 / math.sqrt(in_f)
        w = jax.random.uniform(k1, (in_f, out_f), jnp.float32, -bound, bound)
        b = jax.random.uniform(k2, (1, out_f), jnp.float32, -bound, bound)
        return w, b

    p = {}
    p["l1_w"], p["l1_b"] = linear(dim, hidden)
    p["l2_w"], p["l2_b"] = linear(hidden, hidden)
    p["ip_w1"], p["ip_b1"] = linear(hidden, hidden)
    p["ip_w2"], p["ip_b2"] = linear(hidden, hidden)
    p["zp_w1"], p["zp_b1"] = linear(dim, hidden)
    p["zp_w2"], p["zp_b2"] = linear(hidden, hidden)
    p["net_w1"], p["net_b1"] = linear(hidden, hidden)
    p["net_w2"], p["net_b2"] = linear(hidden, hidden)
    p["net_w3"], p["net_b3"] = linear(hidden, dim)
    p["sigma"] = jax.random.normal(next(it), (1, 1), jnp.float32)

    # tsdiff-style PositionalEncoding constants: half linear, half periodic.
    lin_dim = hidden // 2
    per_dim = hidden - lin_dim
    scale = np.exp(-2.0 * np.arange(per_dim) * np.log(I_MAX_VALUE) / per_dim)
    shift = np.zeros(per_dim)
    shift[::2] = 0.5 * np.pi
    p["pe_scale"] = jnp.asarray(scale, jnp.float32).reshape(1, per_dim)
    p["pe_shift"] = jnp.asarray(shift, jnp.float32).reshape(1, per_dim)
    p["pe_lw"], p["pe_lb"] = linear(1, lin_dim)
    return p


def pack_params(p, dim=DIM, hidden=HIDDEN):
    """Pack parameters into lane-dense kernel slabs (built once)."""
    f32, bf16 = jnp.float32, jnp.bfloat16
    H, D, P = hidden, dim, PACK

    def bd(w):                          # (H, H) -> (P*H, P*H) block diagonal
        return jnp.kron(jnp.eye(P, dtype=f32), jnp.asarray(w, f32))

    # Input-side weight: rows [0:D] of each 16-lane point slot -> l1_w.
    l1p = jnp.zeros((PT_W, H), f32).at[0:D, :].set(p["l1_w"])
    w_in = jnp.kron(jnp.eye(P, dtype=f32), l1p).astype(bf16)          # (64, 128)

    net_w3_pad = jnp.zeros((H, H), f32).at[:, :D].set(p["net_w3"])
    w_hh = jnp.stack([bd(p["l2_w"]), bd(p["ip_w1"]), bd(p["ip_w2"]),
                      bd(p["net_w1"]), bd(p["net_w2"]), bd(net_w3_pad)],
                     axis=0).astype(bf16)                             # (6, 128, 128)

    zp1p = jnp.zeros((8, H), f32).at[0:D, :].set(p["zp_w1"])
    w_zp = jnp.concatenate([zp1p, jnp.asarray(p["zp_w2"], f32)], axis=0)  # (40, 32)

    def t4(v):                          # (<=H,) -> (1, P*H) lane-group tiled row
        v = jnp.asarray(v, f32).reshape(-1)
        v = jnp.zeros((H,), f32).at[:v.shape[0]].set(v)
        return jnp.tile(v.reshape(1, H), (1, P))

    zeros_half = jnp.zeros((H // 2,), f32)
    rows = [
        t4(p["l1_b"]), t4(p["l2_b"]), t4(p["ip_b1"]), t4(p["ip_b2"]),
        t4(p["zp_b1"]), t4(p["zp_b2"]), t4(p["net_b1"]), t4(p["net_b2"]),
        t4(p["net_b3"]),
        t4(jnp.concatenate([p["pe_lw"].reshape(-1), zeros_half])),   # linear half
        t4(jnp.concatenate([p["pe_lb"].reshape(-1), zeros_half])),
        t4(jnp.concatenate([zeros_half, p["pe_scale"].reshape(-1)])),  # periodic half
        t4(jnp.concatenate([zeros_half, p["pe_shift"].reshape(-1)])),
        jnp.zeros((1, P * H), f32), jnp.zeros((1, P * H), f32),
        jnp.zeros((1, P * H), f32),
    ]
    consts = jnp.concatenate(rows, axis=0)                            # (16, 128)

    # TODO(synk): the reference divides by sigma**2 with no clamp; the 1e-12
    # floor only changes behaviour at exactly sigma == 0 (benign).
    inv_s2 = 1.0 / jnp.maximum(jnp.asarray(p["sigma"], f32).reshape(()) ** 2, 1e-12)
    inv_s2 = inv_s2.reshape(1)                                        # SMEM scalar

    return w_in, w_hh, w_zp, consts, inv_s2


def neural_denoising_process_forward(params, x, y, tx, ty, x_pad, y_pad, key):
    """Returns the scalar training loss (forward of NeuralDenoisingProcess)."""
    f32 = jnp.float32
    x = x.astype(f32)
    y = y.astype(f32)
    B, Mc, D = x.shape
    L = y.shape[1]
    N0 = Mc + L

    y_full = jnp.concatenate([x, y], axis=1)                        # (B, N0, D)
    t_full = jnp.concatenate([tx, ty], axis=1).astype(f32)          # (B, N0, 1)
    pad_full = jnp.concatenate([x_pad, y_pad], axis=1).astype(f32)  # (B, N0)

    # ---- diffusion glue: sample step i + noise, forward-noise the targets ---
    betas = jnp.linspace(1e-4, 0.2, NUM_STEPS)                      # BetaLinear(1e-4, 0.2)
    alpha_bars = jnp.cumprod(1.0 - betas)
    k_i, k_n = jax.random.split(key)
    # TODO(synk): some tsdiff variants embed i+1 / index alpha_bar at i+1;
    # i in [0, num_steps) is used here.
    i_idx = jax.random.randint(k_i, (B,), 0, NUM_STEPS)
    ab = alpha_bars[i_idx].astype(f32)                              # (B,)
    # TODO(synk): tsdiff OU/GP-correlated diffusion-noise covariance is not
    # reproduced; iid standard-normal noise is used for the synthetic loss.
    noise = jax.random.normal(k_n, (B, N0, D), f32)
    y_noisy = (jnp.sqrt(ab)[:, None, None] * y_full
               + jnp.sqrt(1.0 - ab)[:, None, None] * noise)

    def rup(v, m):
        return ((v + m - 1) // m) * m

    N = rup(N0, 8)
    M = rup(Mc, 8)

    # Always >= 2 batch tiles: pipeline overlap + v7x dual-TC sharding.
    B_tile = 4 if B <= 8 else 8
    B_pad = rup(B, B_tile)
    n_tiles = B_pad // B_tile
    if n_tiles < 2:
        B_pad *= 2
        n_tiles = 2

    def pad_to(a, shape):
        return jnp.pad(a, [(0, s - d) for s, d in zip(shape, a.shape)])

    # ---- packed point slab: 16 lanes/point, 4 points per 64-lane row --------
    point = jnp.zeros((B, N0, PT_W), f32)
    point = point.at[..., 0:D].set(y_noisy)
    point = point.at[..., D:2 * D].set(noise)
    point = point.at[..., 8].set(1.0 - pad_full)      # padded points -> mask 0
    point = point.at[..., 9].set(t_full[..., 0])
    point = pad_to(point, (B_pad, N, PT_W))
    pt_slab = point.reshape(B_pad * N // PACK, PACK * PT_W)

    # ---- context values + tiny aux slab (tz / (1 - z_pad) / i) --------------
    zv = jnp.zeros((B, Mc, 8), f32).at[..., 0:D].set(x)
    z_slab = pad_to(zv, (B_pad, M, 8)).reshape(B_pad * M, 8)

    tz_row = pad_to(jnp.swapaxes(tx.astype(f32), -1, -2), (B, 1, M))
    zm_row = pad_to((1.0 - x_pad.astype(f32))[:, None, :], (B, 1, M))
    i_row = jnp.broadcast_to(i_idx.astype(f32)[:, None, None], (B, 1, M))
    ctx = jnp.concatenate([tz_row, zm_row, i_row, jnp.zeros((B, 5, M), f32)],
                          axis=1)
    ctx = pad_to(ctx, (B_pad, 8, M))

    w_in, w_hh, w_zp, consts, inv_s2 = pack_params(params)

    RT = B_tile * N // PACK
    in_specs = [
        pl.BlockSpec((RT, PACK * PT_W), lambda t: (t, 0)),             # point slab
        pl.BlockSpec((B_tile * M, 8), lambda t: (t, 0)),               # context z
        pl.BlockSpec((B_tile, 8, M), lambda t: (t, 0, 0)),             # ctx aux
        pl.BlockSpec((PACK * PT_W, PACK * HIDDEN), lambda t: (0, 0)),  # w_in (shared)
        pl.BlockSpec((6, PACK * HIDDEN, PACK * HIDDEN),
                     lambda t: (0, 0, 0)),                             # w_hh (shared)
        pl.BlockSpec((8 + HIDDEN, HIDDEN), lambda t: (0, 0)),          # w_zp (shared)
        pl.BlockSpec((16, PACK * HIDDEN), lambda t: (0, 0)),           # consts (shared)
        pl.BlockSpec(memory_space=pltpu.MemorySpace.SMEM),             # 1/sigma^2
    ]

    tile_sums = pl.pallas_call(
        _ndp_loss_kernel,
        out_shape=jax.ShapeDtypeStruct((n_tiles, 1, 1), f32),
        grid=(n_tiles,),
        in_specs=in_specs,
        out_specs=pl.BlockSpec((1, 1, 1), lambda t: (t, 0, 0)),
        compiler_params=pltpu.CompilerParams(
            dimension_semantics=("parallel",),
            vmem_limit_bytes=32 * 1024 * 1024),
    )(pt_slab, z_slab, ctx, w_in, w_hh, w_zp, consts, inv_s2)

    # Reference: loss.mean(-1) * (1 - pad), then mean over ALL B*N0 points
    # (masked points included), so the denominator is B * N0 by construction.
    return jnp.sum(tile_sums) / (B * N0)


if __name__ == "__main__":
    key = jax.random.PRNGKey(0)
    k_p, k_x, k_y, k_t, k_t2, k_d = jax.random.split(key, 6)

    B, M_ctx, M_tgt = 2, 8, 8
    params = init_params(k_p)

    x = jax.random.normal(k_x, (B, M_ctx, DIM), jnp.float32)
    y = jax.random.normal(k_y, (B, M_tgt, DIM), jnp.float32)
    tx = jnp.sort(jax.random.uniform(k_t, (B, M_ctx, 1), jnp.float32), axis=1)
    ty = jnp.sort(jax.random.uniform(k_t2, (B, M_tgt, 1), jnp.float32), axis=1)
    x_pad = jnp.zeros((B, M_ctx), jnp.float32)
    y_pad = jnp.zeros((B, M_tgt), jnp.float32).at[1, -1].set(1.0)  # one padded point

    loss = neural_denoising_process_forward(params, x, y, tx, ty, x_pad, y_pad, k_d)
    loss = jax.block_until_ready(loss)
    assert jnp.isfinite(loss), "loss is not finite"
    print("KERNEL_OK")
</pallas_src>

<mosaic_0001>
module attributes {stable_mosaic.version = 11 : i64} {
  func.func @_ndp_loss_kernel(%arg0: i32, %arg1: memref<16x64xf32, #tpu.memory_space<vmem>>, %arg2: memref<32x8xf32, #tpu.memory_space<vmem>>, %arg3: memref<4x8x8xf32, #tpu.memory_space<vmem>>, %arg4: memref<64x128xbf16, #tpu.memory_space<vmem>>, %arg5: memref<6x128x128xbf16, #tpu.memory_space<vmem>>, %arg6: memref<40x32xf32, #tpu.memory_space<vmem>>, %arg7: memref<16x128xf32, #tpu.memory_space<vmem>>, %arg8: memref<1xf32, #tpu.memory_space<smem>>, %arg9: memref<1x1x1xf32, #tpu.memory_space<vmem>>) attributes {dimension_semantics = [#tpu.dimension_semantics<parallel>], iteration_bounds = array<i64: 2>, scalar_prefetch = 0 : i64, scratch_operands = 0 : i64, tpu.core_type = #tpu.core_type<tc>, window_params = [{transform_indices = @transform_0, window_bounds = array<i64: 16, 64>}, {transform_indices = @transform_1, window_bounds = array<i64: 32, 8>}, {transform_indices = @transform_2, window_bounds = array<i64: 4, 8, 8>}, {pipeline_mode = #tpu.pipeline_mode<synchronous>, transform_indices = @transform_3, window_bounds = array<i64: 64, 128>}, {pipeline_mode = #tpu.pipeline_mode<synchronous>, transform_indices = @transform_4, window_bounds = array<i64: 6, 128, 128>}, {pipeline_mode = #tpu.pipeline_mode<synchronous>, transform_indices = @transform_5, window_bounds = array<i64: 40, 32>}, {pipeline_mode = #tpu.pipeline_mode<synchronous>, transform_indices = @transform_6, window_bounds = array<i64: 16, 128>}, {transform_indices = @transform_7, window_bounds = array<i64: 1>}, {transform_indices = @transform_8, window_bounds = array<i64: 1, 1, 1>}]} {
    %c0 = arith.constant 0 : index
    %c0_0 = arith.constant 0 : index
    %0 = vector.load %arg1[%c0, %c0_0] : memref<16x64xf32, #tpu.memory_space<vmem>>, vector<16x64xf32>
    %1 = arith.truncf %0 : vector<16x64xf32> to vector<16x64xbf16>
    %c0_1 = arith.constant 0 : index
    %2 = memref.load %arg8[%c0_1] : memref<1xf32, #tpu.memory_space<smem>>
    %c0_2 = arith.constant 0 : index
    %c0_3 = arith.constant 0 : index
    %3 = vector.load %arg6[%c0_2, %c0_3] : memref<40x32xf32, #tpu.memory_space<vmem>>, vector<8x32xf32>
    %4 = arith.truncf %3 : vector<8x32xf32> to vector<8x32xbf16>
    %c8 = arith.constant 8 : index
    %c0_4 = arith.constant 0 : index
    %5 = vector.load %arg6[%c8, %c0_4] : memref<40x32xf32, #tpu.memory_space<vmem>>, vector<32x32xf32>
    %6 = arith.truncf %5 : vector<32x32xf32> to vector<32x32xbf16>
    %c0_5 = arith.constant 0 : index
    %c0_6 = arith.constant 0 : index
    %7 = vector.load %arg2[%c0_5, %c0_6] : memref<32x8xf32, #tpu.memory_space<vmem>>, vector<32x8xf32>
    %8 = arith.truncf %7 : vector<32x8xf32> to vector<32x8xbf16>
    %cst = arith.constant dense<0.000000e+00> : vector<32x32xf32>
    %9 = tpu.matmul %8, %4, %cst {dimension_numbers = #tpu.dot_dimension_numbers<[1], [0], [0], [1], [0, 0, 1, 1], [], []>} : vector<32x8xbf16>, vector<8x32xbf16>, vector<32x32xf32> -> vector<32x32xf32>
    %c4 = arith.constant 4 : index
    %c0_7 = arith.constant 0 : index
    %10 = vector.load %arg7[%c4, %c0_7] : memref<16x128xf32, #tpu.memory_space<vmem>>, vector<1x128xf32>
    %11 = vector.extract_strided_slice %10 {offsets = [0, 0], sizes = [1, 32], strides = [1, 1]} : vector<1x128xf32> to vector<1x32xf32>
    %12 = vector.broadcast %11 : vector<1x32xf32> to vector<32x32xf32>
    %13 = arith.addf %9, %12 : vector<32x32xf32>
    %14 = math.tanh %13 : vector<32x32xf32>
    %15 = arith.truncf %14 : vector<32x32xf32> to vector<32x32xbf16>
    %cst_8 = arith.constant dense<0.000000e+00> : vector<32x32xf32>
    %16 = tpu.matmul %15, %6, %cst_8 {dimension_numbers = #tpu.dot_dimension_numbers<[1], [0], [0], [1], [0, 0, 1, 1], [], []>} : vector<32x32xbf16>, vector<32x32xbf16>, vector<32x32xf32> -> vector<32x32xf32>
    %c5 = arith.constant 5 : index
    %c0_9 = arith.constant 0 : index
    %17 = vector.load %arg7[%c5, %c0_9] : memref<16x128xf32, #tpu.memory_space<vmem>>, vector<1x128xf32>
    %18 = vector.extract_strided_slice %17 {offsets = [0, 0], sizes = [1, 32], strides = [1, 1]} : vector<1x128xf32> to vector<1x32xf32>
    %19 = vector.broadcast %18 : vector<1x32xf32> to vector<32x32xf32>
    %20 = arith.addf %16, %19 : vector<32x32xf32>
    %21 = vector.shape_cast %20 : vector<32x32xf32> to vector<4x8x32xf32>
    %22 = arith.truncf %21 : vector<4x8x32xf32> to vector<4x8x32xbf16>
    %c0_10 = arith.constant 0 : index
    %c0_11 = arith.constant 0 : index
    %c0_12 = arith.constant 0 : index
    %23 = vector.load %arg3[%c0_10, %c0_11, %c0_12] : memref<4x8x8xf32, #tpu.memory_space<vmem>>, vector<4x1x8xf32>
    %c0_13 = arith.constant 0 : index
    %c1 = arith.constant 1 : index
    %c0_14 = arith.constant 0 : index
    %24 = vector.load %arg3[%c0_13, %c1, %c0_14] : memref<4x8x8xf32, #tpu.memory_space<vmem>>, vector<4x1x8xf32>
    %25 = vector.extract_strided_slice %0 {offsets = [0, 9], sizes = [16, 1], strides = [1, 1]} : vector<16x64xf32> to vector<16x1xf32>
    %26 = vector.shape_cast %25 : vector<16x1xf32> to vector<4x4x1xf32>
    %27 = vector.broadcast %26 : vector<4x4x1xf32> to vector<4x4x8xf32>
    %28 = vector.broadcast %23 : vector<4x1x8xf32> to vector<4x4x8xf32>
    %29 = arith.subf %27, %28 : vector<4x4x8xf32>
    %30 = arith.mulf %29, %29 : vector<4x4x8xf32>
    %cst_15 = arith.constant 0.000000e+00 : f32
    %31 = vector.broadcast %cst_15 : f32 to vector<4x4x8xf32>
    %32 = arith.subf %31, %30 : vector<4x4x8xf32>
    %33 = vector.broadcast %2 : f32 to vector<4x4x8xf32>
    %34 = arith.mulf %32, %33 : vector<4x4x8xf32>
    %35 = math.exp %34 : vector<4x4x8xf32>
    %36 = vector.broadcast %24 : vector<4x1x8xf32> to vector<4x4x8xf32>
    %37 = arith.mulf %35, %36 : vector<4x4x8xf32>
    %38 = arith.truncf %37 : vector<4x4x8xf32> to vector<4x4x8xbf16>
    "tpu.trace_start"() <{level = 10 : i32, message = "bnm,bmh->bnh"}> : () -> ()
    %cst_16 = arith.constant dense<0.000000e+00> : vector<4x4x32xf32>
    %39 = tpu.matmul %38, %22, %cst_16 {dimension_numbers = #tpu.dot_dimension_numbers<[2], [1], [1], [2], [0, 0, 0, 1, 1, 2], [0], [0]>} : vector<4x4x8xbf16>, vector<4x8x32xbf16>, vector<4x4x32xf32> -> vector<4x4x32xf32>
    "tpu.trace_stop"() : () -> ()
    %40 = vector.extract_strided_slice %0 {offsets = [0, 25], sizes = [16, 1], strides = [1, 1]} : vector<16x64xf32> to vector<16x1xf32>
    %41 = vector.shape_cast %40 : vector<16x1xf32> to vector<4x4x1xf32>
    %42 = vector.broadcast %41 : vector<4x4x1xf32> to vector<4x4x8xf32>
    %43 = vector.broadcast %23 : vector<4x1x8xf32> to vector<4x4x8xf32>
    %44 = arith.subf %42, %43 : vector<4x4x8xf32>
    %45 = arith.mulf %44, %44 : vector<4x4x8xf32>
    %cst_17 = arith.constant 0.000000e+00 : f32
    %46 = vector.broadcast %cst_17 : f32 to vector<4x4x8xf32>
    %47 = arith.subf %46, %45 : vector<4x4x8xf32>
    %48 = vector.broadcast %2 : f32 to vector<4x4x8xf32>
    %49 = arith.mulf %47, %48 : vector<4x4x8xf32>
    %50 = math.exp %49 : vector<4x4x8xf32>
    %51 = vector.broadcast %24 : vector<4x1x8xf32> to vector<4x4x8xf32>
    %52 = arith.mulf %50, %51 : vector<4x4x8xf32>
    %53 = arith.truncf %52 : vector<4x4x8xf32> to vector<4x4x8xbf16>
    "tpu.trace_start"() <{level = 10 : i32, message = "bnm,bmh->bnh"}> : () -> ()
    %cst_18 = arith.constant dense<0.000000e+00> : vector<4x4x32xf32>
    %54 = tpu.matmul %53, %22, %cst_18 {dimension_numbers = #tpu.dot_dimension_numbers<[2], [1], [1], [2], [0, 0, 0, 1, 1, 2], [0], [0]>} : vector<4x4x8xbf16>, vector<4x8x32xbf16>, vector<4x4x32xf32> -> vector<4x4x32xf32>
    "tpu.trace_stop"() : () -> ()
    %55 = vector.extract_strided_slice %0 {offsets = [0, 41], sizes = [16, 1], strides = [1, 1]} : vector<16x64xf32> to vector<16x1xf32>
    %56 = vector.shape_cast %55 : vector<16x1xf32> to vector<4x4x1xf32>
    %57 = vector.broadcast %56 : vector<4x4x1xf32> to vector<4x4x8xf32>
    %58 = vector.broadcast %23 : vector<4x1x8xf32> to vector<4x4x8xf32>
    %59 = arith.subf %57, %58 : vector<4x4x8xf32>
    %60 = arith.mulf %59, %59 : vector<4x4x8xf32>
    %cst_19 = arith.constant 0.000000e+00 : f32
    %61 = vector.broadcast %cst_19 : f32 to vector<4x4x8xf32>
    %62 = arith.subf %61, %60 : vector<4x4x8xf32>
    %63 = vector.broadcast %2 : f32 to vector<4x4x8xf32>
    %64 = arith.mulf %62, %63 : vector<4x4x8xf32>
    %65 = math.exp %64 : vector<4x4x8xf32>
    %66 = vector.broadcast %24 : vector<4x1x8xf32> to vector<4x4x8xf32>
    %67 = arith.mulf %65, %66 : vector<4x4x8xf32>
    %68 = arith.truncf %67 : vector<4x4x8xf32> to vector<4x4x8xbf16>
    "tpu.trace_start"() <{level = 10 : i32, message = "bnm,bmh->bnh"}> : () -> ()
    %cst_20 = arith.constant dense<0.000000e+00> : vector<4x4x32xf32>
    %69 = tpu.matmul %68, %22, %cst_20 {dimension_numbers = #tpu.dot_dimension_numbers<[2], [1], [1], [2], [0, 0, 0, 1, 1, 2], [0], [0]>} : vector<4x4x8xbf16>, vector<4x8x32xbf16>, vector<4x4x32xf32> -> vector<4x4x32xf32>
    "tpu.trace_stop"() : () -> ()
    %70 = vector.extract_strided_slice %0 {offsets = [0, 57], sizes = [16, 1], strides = [1, 1]} : vector<16x64xf32> to vector<16x1xf32>
    %71 = vector.shape_cast %70 : vector<16x1xf32> to vector<4x4x1xf32>
    %72 = vector.broadcast %71 : vector<4x4x1xf32> to vector<4x4x8xf32>
    %73 = vector.broadcast %23 : vector<4x1x8xf32> to vector<4x4x8xf32>
    %74 = arith.subf %72, %73 : vector<4x4x8xf32>
    %75 = arith.mulf %74, %74 : vector<4x4x8xf32>
    %cst_21 = arith.constant 0.000000e+00 : f32
    %76 = vector.broadcast %cst_21 : f32 to vector<4x4x8xf32>
    %77 = arith.subf %76, %75 : vector<4x4x8xf32>
    %78 = vector.broadcast %2 : f32 to vector<4x4x8xf32>
    %79 = arith.mulf %77, %78 : vector<4x4x8xf32>
    %80 = math.exp %79 : vector<4x4x8xf32>
    %81 = vector.broadcast %24 : vector<4x1x8xf32> to vector<4x4x8xf32>
    %82 = arith.mulf %80, %81 : vector<4x4x8xf32>
    %83 = arith.truncf %82 : vector<4x4x8xf32> to vector<4x4x8xbf16>
    "tpu.trace_start"() <{level = 10 : i32, message = "bnm,bmh->bnh"}> : () -> ()
    %cst_22 = arith.constant dense<0.000000e+00> : vector<4x4x32xf32>
    %84 = tpu.matmul %83, %22, %cst_22 {dimension_numbers = #tpu.dot_dimension_numbers<[2], [1], [1], [2], [0, 0, 0, 1, 1, 2], [0], [0]>} : vector<4x4x8xbf16>, vector<4x8x32xbf16>, vector<4x4x32xf32> -> vector<4x4x32xf32>
    "tpu.trace_stop"() : () -> ()
    %85 = tpu.concatenate %39, %54, %69, %84 in 2 : vector<4x4x32xf32>, vector<4x4x32xf32>, vector<4x4x32xf32>, vector<4x4x32xf32> -> vector<4x4x128xf32>
    %86 = vector.shape_cast %85 : vector<4x4x128xf32> to vector<16x128xf32>
    %c0_23 = arith.constant 0 : index
    %c2 = arith.constant 2 : index
    %c0_24 = arith.constant 0 : index
    %87 = vector.load %arg3[%c0_23, %c2, %c0_24] : memref<4x8x8xf32, #tpu.memory_space<vmem>>, vector<4x1x1xf32>
    %88 = vector.shape_cast %87 : vector<4x1x1xf32> to vector<4x1xf32>
    %89 = tpu.iota {dimensions = array<i32: 1>} : vector<1x128xi32>
    %c32_i32 = arith.constant 32 : i32
    %c0_i32 = arith.constant 0 : i32
    %90 = arith.cmpi eq, %c32_i32, %c0_i32 : i32
    %c1_i32 = arith.constant 1 : i32
    %91 = arith.select %90, %c1_i32, %c32_i32 : i32
    %92 = vector.broadcast %91 : i32 to vector<1x128xi32>
    %93 = arith.remsi %89, %92 : vector<1x128xi32>
    %c0_i32_25 = arith.constant 0 : i32
    %94 = vector.broadcast %c0_i32_25 : i32 to vector<1x128xi32>
    %95 = arith.cmpi ne, %93, %94 : vector<1x128xi32>
    %c0_i32_26 = arith.constant 0 : i32
    %96 = vector.broadcast %c0_i32_26 : i32 to vector<1x128xi32>
    %97 = arith.cmpi slt, %93, %96 : vector<1x128xi32>
    %c0_i32_27 = arith.constant 0 : i32
    %98 = arith.cmpi slt, %91, %c0_i32_27 : i32
    %99 = vector.broadcast %98 : i1 to vector<1x128xi1>
    %100 = vector.broadcast %99 : vector<1x128xi1> to vector<1x128xi1>
    %101 = arith.xori %97, %100 : vector<1x128xi1>
    %102 = arith.andi %101, %95 : vector<1x128xi1>
    %103 = vector.broadcast %91 : i32 to vector<1x128xi32>
    %104 = arith.addi %93, %103 : vector<1x128xi32>
    %105 = arith.select %102, %104, %93 : vector<1x128xi1>, vector<1x128xi32>
    %cst_28 = arith.constant 0.00999999977 : f32
    %106 = vector.broadcast %cst_28 : f32 to vector<4x1xf32>
    %107 = arith.mulf %88, %106 : vector<4x1xf32>
    %c9 = arith.constant 9 : index
    %c0_29 = arith.constant 0 : index
    %108 = vector.load %arg7[%c9, %c0_29] : memref<16x128xf32, #tpu.memory_space<vmem>>, vector<1x128xf32>
    %109 = vector.broadcast %107 : vector<4x1xf32> to vector<4x128xf32>
    %110 = vector.broadcast %108 : vector<1x128xf32> to vector<4x128xf32>
    %111 = arith.mulf %109, %110 : vector<4x128xf32>
    %c10 = arith.constant 10 : index
    %c0_30 = arith.constant 0 : index
    %112 = vector.load %arg7[%c10, %c0_30] : memref<16x128xf32, #tpu.memory_space<vmem>>, vector<1x128xf32>
    %113 = vector.broadcast %112 : vector<1x128xf32> to vector<4x128xf32>
    %114 = arith.addf %111, %113 : vector<4x128xf32>
    %c11 = arith.constant 11 : index
    %c0_31 = arith.constant 0 : index
    %115 = vector.load %arg7[%c11, %c0_31] : memref<16x128xf32, #tpu.memory_space<vmem>>, vector<1x128xf32>
    %116 = vector.broadcast %88 : vector<4x1xf32> to vector<4x128xf32>
    %117 = vector.broadcast %115 : vector<1x128xf32> to vector<4x128xf32>
    %118 = arith.mulf %116, %117 : vector<4x128xf32>
    %c12 = arith.constant 12 : index
    %c0_32 = arith.constant 0 : index
    %119 = vector.load %arg7[%c12, %c0_32] : memref<16x128xf32, #tpu.memory_space<vmem>>, vector<1x128xf32>
    %120 = vector.broadcast %119 : vector<1x128xf32> to vector<4x128xf32>
    %121 = arith.addf %118, %120 : vector<4x128xf32>
    %122 = math.sin %121 : vector<4x128xf32>
    %c16_i32 = arith.constant 16 : i32
    %123 = vector.broadcast %c16_i32 : i32 to vector<1x128xi32>
    %124 = arith.cmpi slt, %105, %123 : vector<1x128xi32>
    %125 = vector.shape_cast %124 : vector<1x128xi1> to vector<1x128xi1>
    %126 = vector.broadcast %125 : vector<1x128xi1> to vector<4x128xi1>
    %127 = arith.select %126, %114, %122 : vector<4x128xi1>, vector<4x128xf32>
    %128 = arith.truncf %127 : vector<4x128xf32> to vector<4x128xbf16>
    %c1_33 = arith.constant 1 : index
    %c0_34 = arith.constant 0 : index
    %c0_35 = arith.constant 0 : index
    %129 = vector.load %arg5[%c1_33, %c0_34, %c0_35] : memref<6x128x128xbf16, #tpu.memory_space<vmem>>, vector<1x128x128xbf16>
    %130 = vector.shape_cast %129 : vector<1x128x128xbf16> to vector<128x128xbf16>
    %cst_36 = arith.constant dense<0.000000e+00> : vector<4x128xf32>
    %131 = tpu.matmul %128, %130, %cst_36 {dimension_numbers = #tpu.dot_dimension_numbers<[1], [0], [0], [1], [0, 0, 1, 1], [], []>} : vector<4x128xbf16>, vector<128x128xbf16>, vector<4x128xf32> -> vector<4x128xf32>
    %c2_37 = arith.constant 2 : index
    %c0_38 = arith.constant 0 : index
    %132 = vector.load %arg7[%c2_37, %c0_38] : memref<16x128xf32, #tpu.memory_space<vmem>>, vector<1x128xf32>
    %133 = vector.broadcast %132 : vector<1x128xf32> to vector<4x128xf32>
    %134 = arith.addf %131, %133 : vector<4x128xf32>
    %135 = math.tanh %134 : vector<4x128xf32>
    %136 = arith.truncf %135 : vector<4x128xf32> to vector<4x128xbf16>
    %c2_39 = arith.constant 2 : index
    %c0_40 = arith.constant 0 : index
    %c0_41 = arith.constant 0 : index
    %137 = vector.load %arg5[%c2_39, %c0_40, %c0_41] : memref<6x128x128xbf16, #tpu.memory_space<vmem>>, vector<1x128x128xbf16>
    %138 = vector.shape_cast %137 : vector<1x128x128xbf16> to vector<128x128xbf16>
    %cst_42 = arith.constant dense<0.000000e+00> : vector<4x128xf32>
    %139 = tpu.matmul %136, %138, %cst_42 {dimension_numbers = #tpu.dot_dimension_numbers<[1], [0], [0], [1], [0, 0, 1, 1], [], []>} : vector<4x128xbf16>, vector<128x128xbf16>, vector<4x128xf32> -> vector<4x128xf32>
    %c3 = arith.constant 3 : index
    %c0_43 = arith.constant 0 : index
    %140 = vector.load %arg7[%c3, %c0_43] : memref<16x128xf32, #tpu.memory_space<vmem>>, vector<1x128xf32>
    %141 = vector.broadcast %140 : vector<1x128xf32> to vector<4x128xf32>
    %142 = arith.addf %139, %141 : vector<4x128xf32>
    %c0_44 = arith.constant 0 : index
    %c0_45 = arith.constant 0 : index
    %143 = vector.load %arg4[%c0_44, %c0_45] : memref<64x128xbf16, #tpu.memory_space<vmem>>, vector<64x128xbf16>
    %cst_46 = arith.constant dense<0.000000e+00> : vector<16x128xf32>
    %144 = tpu.matmul %1, %143, %cst_46 {dimension_numbers = #tpu.dot_dimension_numbers<[1], [0], [0], [1], [0, 0, 1, 1], [], []>} : vector<16x64xbf16>, vector<64x128xbf16>, vector<16x128xf32> -> vector<16x128xf32>
    %c0_47 = arith.constant 0 : index
    %c0_48 = arith.constant 0 : index
    %145 = vector.load %arg7[%c0_47, %c0_48] : memref<16x128xf32, #tpu.memory_space<vmem>>, vector<1x128xf32>
    %146 = vector.broadcast %145 : vector<1x128xf32> to vector<16x128xf32>
    %147 = arith.addf %144, %146 : vector<16x128xf32>
    %148 = arith.addf %147, %86 : vector<16x128xf32>
    %cst_49 = arith.constant 0.000000e+00 : f32
    %149 = vector.broadcast %cst_49 : f32 to vector<16x128xf32>
    %150 = arith.maximumf %148, %149 : vector<16x128xf32>
    %151 = arith.truncf %150 : vector<16x128xf32> to vector<16x128xbf16>
    %c0_50 = arith.constant 0 : index
    %c0_51 = arith.constant 0 : index
    %c0_52 = arith.constant 0 : index
    %152 = vector.load %arg5[%c0_50, %c0_51, %c0_52] : memref<6x128x128xbf16, #tpu.memory_space<vmem>>, vector<1x128x128xbf16>
    %153 = vector.shape_cast %152 : vector<1x128x128xbf16> to vector<128x128xbf16>
    %cst_53 = arith.constant dense<0.000000e+00> : vector<16x128xf32>
    %154 = tpu.matmul %151, %153, %cst_53 {dimension_numbers = #tpu.dot_dimension_numbers<[1], [0], [0], [1], [0, 0, 1, 1], [], []>} : vector<16x128xbf16>, vector<128x128xbf16>, vector<16x128xf32> -> vector<16x128xf32>
    %c1_54 = arith.constant 1 : index
    %c0_55 = arith.constant 0 : index
    %155 = vector.load %arg7[%c1_54, %c0_55] : memref<16x128xf32, #tpu.memory_space<vmem>>, vector<1x128xf32>
    %156 = vector.broadcast %155 : vector<1x128xf32> to vector<16x128xf32>
    %157 = arith.addf %154, %156 : vector<16x128xf32>
    %158 = vector.shape_cast %157 : vector<16x128xf32> to vector<4x4x128xf32>
    %159 = vector.shape_cast %142 : vector<4x128xf32> to vector<4x1x128xf32>
    %160 = vector.broadcast %159 : vector<4x1x128xf32> to vector<4x4x128xf32>
    %161 = arith.addf %158, %160 : vector<4x4x128xf32>
    %cst_56 = arith.constant 0.000000e+00 : f32
    %162 = vector.broadcast %cst_56 : f32 to vector<4x4x128xf32>
    %163 = arith.maximumf %161, %162 : vector<4x4x128xf32>
    %164 = vector.shape_cast %163 : vector<4x4x128xf32> to vector<16x128xf32>
    %165 = arith.truncf %164 : vector<16x128xf32> to vector<16x128xbf16>
    %c3_57 = arith.constant 3 : index
    %c0_58 = arith.constant 0 : index
    %c0_59 = arith.constant 0 : index
    %166 = vector.load %arg5[%c3_57, %c0_58, %c0_59] : memref<6x128x128xbf16, #tpu.memory_space<vmem>>, vector<1x128x128xbf16>
    %167 = vector.shape_cast %166 : vector<1x128x128xbf16> to vector<128x128xbf16>
    %cst_60 = arith.constant dense<0.000000e+00> : vector<16x128xf32>
    %168 = tpu.matmul %165, %167, %cst_60 {dimension_numbers = #tpu.dot_dimension_numbers<[1], [0], [0], [1], [0, 0, 1, 1], [], []>} : vector<16x128xbf16>, vector<128x128xbf16>, vector<16x128xf32> -> vector<16x128xf32>
    %c6 = arith.constant 6 : index
    %c0_61 = arith.constant 0 : index
    %169 = vector.load %arg7[%c6, %c0_61] : memref<16x128xf32, #tpu.memory_space<vmem>>, vector<1x128xf32>
    %170 = vector.broadcast %169 : vector<1x128xf32> to vector<16x128xf32>
    %171 = arith.addf %168, %170 : vector<16x128xf32>
    %172 = math.tanh %171 : vector<16x128xf32>
    %173 = arith.truncf %172 : vector<16x128xf32> to vector<16x128xbf16>
    %c4_62 = arith.constant 4 : index
    %c0_63 = arith.constant 0 : index
    %c0_64 = arith.constant 0 : index
    %174 = vector.load %arg5[%c4_62, %c0_63, %c0_64] : memref<6x128x128xbf16, #tpu.memory_space<vmem>>, vector<1x128x128xbf16>
    %175 = vector.shape_cast %174 : vector<1x128x128xbf16> to vector<128x128xbf16>
    %cst_65 = arith.constant dense<0.000000e+00> : vector<16x128xf32>
    %176 = tpu.matmul %173, %175, %cst_65 {dimension_numbers = #tpu.dot_dimension_numbers<[1], [0], [0], [1], [0, 0, 1, 1], [], []>} : vector<16x128xbf16>, vector<128x128xbf16>, vector<16x128xf32> -> vector<16x128xf32>
    %c7 = arith.constant 7 : index
    %c0_66 = arith.constant 0 : index
    %177 = vector.load %arg7[%c7, %c0_66] : memref<16x128xf32, #tpu.memory_space<vmem>>, vector<1x128xf32>
    %178 = vector.broadcast %177 : vector<1x128xf32> to vector<16x128xf32>
    %179 = arith.addf %176, %178 : vector<16x128xf32>
    %180 = math.tanh %179 : vector<16x128xf32>
    %181 = arith.truncf %180 : vector<16x128xf32> to vector<16x128xbf16>
    %c5_67 = arith.constant 5 : index
    %c0_68 = arith.constant 0 : index
    %c0_69 = arith.constant 0 : index
    %182 = vector.load %arg5[%c5_67, %c0_68, %c0_69] : memref<6x128x128xbf16, #tpu.memory_space<vmem>>, vector<1x128x128xbf16>
    %183 = vector.shape_cast %182 : vector<1x128x128xbf16> to vector<128x128xbf16>
    %cst_70 = arith.constant dense<0.000000e+00> : vector<16x128xf32>
    %184 = tpu.matmul %181, %183, %cst_70 {dimension_numbers = #tpu.dot_dimension_numbers<[1], [0], [0], [1], [0, 0, 1, 1], [], []>} : vector<16x128xbf16>, vector<128x128xbf16>, vector<16x128xf32> -> vector<16x128xf32>
    %c8_71 = arith.constant 8 : index
    %c0_72 = arith.constant 0 : index
    %185 = vector.load %arg7[%c8_71, %c0_72] : memref<16x128xf32, #tpu.memory_space<vmem>>, vector<1x128xf32>
    %186 = vector.broadcast %185 : vector<1x128xf32> to vector<16x128xf32>
    %187 = arith.addf %184, %186 : vector<16x128xf32>
    %cst_73 = arith.constant 0.000000e+00 : f32
    %188 = vector.broadcast %cst_73 : f32 to vector<1x1xf32>
    %189 = vector.extract_strided_slice %187 {offsets = [0, 0], sizes = [16, 4], strides = [1, 1]} : vector<16x128xf32> to vector<16x4xf32>
    %190 = vector.extract_strided_slice %0 {offsets = [0, 4], sizes = [16, 4], strides = [1, 1]} : vector<16x64xf32> to vector<16x4xf32>
    %191 = vector.extract_strided_slice %0 {offsets = [0, 8], sizes = [16, 1], strides = [1, 1]} : vector<16x64xf32> to vector<16x1xf32>
    %192 = arith.subf %189, %190 : vector<16x4xf32>
    %193 = vector.broadcast %191 : vector<16x1xf32> to vector<16x4xf32>
    %194 = arith.mulf %193, %192 : vector<16x4xf32>
    %195 = arith.mulf %194, %194 : vector<16x4xf32>
    %cst_74 = arith.constant dense<0.000000e+00> : vector<4xf32>
    %196 = vector.multi_reduction <add>, %195, %cst_74 [0] : vector<16x4xf32> to vector<4xf32>
    %197 = vector.shape_cast %196 : vector<4xf32> to vector<1x4xf32>
    %cst_75 = arith.constant dense<0.000000e+00> : vector<1xf32>
    %198 = vector.multi_reduction <add>, %197, %cst_75 [1] : vector<1x4xf32> to vector<1xf32>
    %199 = vector.shape_cast %198 : vector<1xf32> to vector<1x1xf32>
    %200 = arith.addf %188, %199 : vector<1x1xf32>
    %201 = vector.extract_strided_slice %187 {offsets = [0, 32], sizes = [16, 4], strides = [1, 1]} : vector<16x128xf32> to vector<16x4xf32>
    %202 = vector.extract_strided_slice %0 {offsets = [0, 20], sizes = [16, 4], strides = [1, 1]} : vector<16x64xf32> to vector<16x4xf32>
    %203 = vector.extract_strided_slice %0 {offsets = [0, 24], sizes = [16, 1], strides = [1, 1]} : vector<16x64xf32> to vector<16x1xf32>
    %204 = arith.subf %201, %202 : vector<16x4xf32>
    %205 = vector.broadcast %203 : vector<16x1xf32> to vector<16x4xf32>
    %206 = arith.mulf %205, %204 : vector<16x4xf32>
    %207 = arith.mulf %206, %206 : vector<16x4xf32>
    %cst_76 = arith.constant dense<0.000000e+00> : vector<4xf32>
    %208 = vector.multi_reduction <add>, %207, %cst_76 [0] : vector<16x4xf32> to vector<4xf32>
    %209 = vector.shape_cast %208 : vector<4xf32> to vector<1x4xf32>
    %cst_77 = arith.constant dense<0.000000e+00> : vector<1xf32>
    %210 = vector.multi_reduction <add>, %209, %cst_77 [1] : vector<1x4xf32> to vector<1xf32>
    %211 = vector.shape_cast %210 : vector<1xf32> to vector<1x1xf32>
    %212 = arith.addf %200, %211 : vector<1x1xf32>
    %213 = vector.extract_strided_slice %187 {offsets = [0, 64], sizes = [16, 4], strides = [1, 1]} : vector<16x128xf32> to vector<16x4xf32>
    %214 = vector.extract_strided_slice %0 {offsets = [0, 36], sizes = [16, 4], strides = [1, 1]} : vector<16x64xf32> to vector<16x4xf32>
    %215 = vector.extract_strided_slice %0 {offsets = [0, 40], sizes = [16, 1], strides = [1, 1]} : vector<16x64xf32> to vector<16x1xf32>
    %216 = arith.subf %213, %214 : vector<16x4xf32>
    %217 = vector.broadcast %215 : vector<16x1xf32> to vector<16x4xf32>
    %218 = arith.mulf %217, %216 : vector<16x4xf32>
    %219 = arith.mulf %218, %218 : vector<16x4xf32>
    %cst_78 = arith.constant dense<0.000000e+00> : vector<4xf32>
    %220 = vector.multi_reduction <add>, %219, %cst_78 [0] : vector<16x4xf32> to vector<4xf32>
    %221 = vector.shape_cast %220 : vector<4xf32> to vector<1x4xf32>
    %cst_79 = arith.constant dense<0.000000e+00> : vector<1xf32>
    %222 = vector.multi_reduction <add>, %221, %cst_79 [1] : vector<1x4xf32> to vector<1xf32>
    %223 = vector.shape_cast %222 : vector<1xf32> to vector<1x1xf32>
    %224 = arith.addf %212, %223 : vector<1x1xf32>
    %225 = vector.extract_strided_slice %187 {offsets = [0, 96], sizes = [16, 4], strides = [1, 1]} : vector<16x128xf32> to vector<16x4xf32>
    %226 = vector.extract_strided_slice %0 {offsets = [0, 52], sizes = [16, 4], strides = [1, 1]} : vector<16x64xf32> to vector<16x4xf32>
    %227 = vector.extract_strided_slice %0 {offsets = [0, 56], sizes = [16, 1], strides = [1, 1]} : vector<16x64xf32> to vector<16x1xf32>
    %228 = arith.subf %225, %226 : vector<16x4xf32>
    %229 = vector.broadcast %227 : vector<16x1xf32> to vector<16x4xf32>
    %230 = arith.mulf %229, %228 : vector<16x4xf32>
    %231 = arith.mulf %230, %230 : vector<16x4xf32>
    %cst_80 = arith.constant dense<0.000000e+00> : vector<4xf32>
    %232 = vector.multi_reduction <add>, %231, %cst_80 [0] : vector<16x4xf32> to vector<4xf32>
    %233 = vector.shape_cast %232 : vector<4xf32> to vector<1x4xf32>
    %cst_81 = arith.constant dense<0.000000e+00> : vector<1xf32>
    %234 = vector.multi_reduction <add>, %233, %cst_81 [1] : vector<1x4xf32> to vector<1xf32>
    %235 = vector.shape_cast %234 : vector<1xf32> to vector<1x1xf32>
    %236 = arith.addf %224, %235 : vector<1x1xf32>
    %cst_82 = arith.constant 2.500000e-01 : f32
    %237 = vector.broadcast %cst_82 : f32 to vector<1x1xf32>
    %238 = arith.mulf %236, %237 : vector<1x1xf32>
    %c0_83 = arith.constant 0 : index
    %c0_84 = arith.constant 0 : index
    %c0_85 = arith.constant 0 : index
    %239 = vector.load %arg9[%c0_83, %c0_84, %c0_85] : memref<1x1x1xf32, #tpu.memory_space<vmem>>, vector<1x1x1xf32>
    %240 = vector.shape_cast %239 : vector<1x1x1xf32> to vector<1x1xf32>
    %241 = vector.shape_cast %238 : vector<1x1xf32> to vector<1x1x1xf32>
    tpu.vector_store %arg9[%c0_83, %c0_84, %c0_85], %241 {strides = array<i32>} : memref<1x1x1xf32, #tpu.memory_space<vmem>>, vector<1x1x1xf32>,
    return
  }
  func.func @transform_0(%arg0: i32) -> (i32, i32) {
    %c0_i32 = arith.constant 0 : i32
    %c0_i32_0 = arith.constant 0 : i32
    return %arg0, %c0_i32 : i32, i32
  }
  func.func @transform_1(%arg0: i32) -> (i32, i32) {
    %c0_i32 = arith.constant 0 : i32
    %c0_i32_0 = arith.constant 0 : i32
    return %arg0, %c0_i32 : i32, i32
  }
  func.func @transform_2(%arg0: i32) -> (i32, i32, i32) {
    %c0_i32 = arith.constant 0 : i32
    %c0_i32_0 = arith.constant 0 : i32
    %c0_i32_1 = arith.constant 0 : i32
    return %arg0, %c0_i32, %c0_i32_0 : i32, i32, i32
  }
  func.func @transform_3(%arg0: i32) -> (i32, i32) {
    %c0_i32 = arith.constant 0 : i32
    %c0_i32_0 = arith.constant 0 : i32
    %c0_i32_1 = arith.constant 0 : i32
    return %c0_i32, %c0_i32_0 : i32, i32
  }
  func.func @transform_4(%arg0: i32) -> (i32, i32, i32) {
    %c0_i32 = arith.constant 0 : i32
    %c0_i32_0 = arith.constant 0 : i32
    %c0_i32_1 = arith.constant 0 : i32
    %c0_i32_2 = arith.constant 0 : i32
    return %c0_i32, %c0_i32_0, %c0_i32_1 : i32, i32, i32
  }
  func.func @transform_5(%arg0: i32) -> (i32, i32) {
    %c0_i32 = arith.constant 0 : i32
    %c0_i32_0 = arith.constant 0 : i32
    %c0_i32_1 = arith.constant 0 : i32
    return %c0_i32, %c0_i32_0 : i32, i32
  }
  func.func @transform_6(%arg0: i32) -> (i32, i32) {
    %c0_i32 = arith.constant 0 : i32
    %c0_i32_0 = arith.constant 0 : i32
    %c0_i32_1 = arith.constant 0 : i32
    return %c0_i32, %c0_i32_0 : i32, i32
  }
  func.func @transform_7(%arg0: i32) -> i32 {
    %c0_i32 = arith.constant 0 : i32
    %c0_i32_0 = arith.constant 0 : i32
    return %c0_i32 : i32
  }
  func.func @transform_8(%arg0: i32) -> (i32, i32, i32) {
    %c0_i32 = arith.constant 0 : i32
    %c0_i32_0 = arith.constant 0 : i32
    %c0_i32_1 = arith.constant 0 : i32
    return %arg0, %c0_i32, %c0_i32_0 : i32, i32, i32
  }
}

</mosaic_0001>

<llo_original>
// kernel: tpu_custom_call.1
$region0: #{tpu_custom_call.1}
  #allocation0 [shape = 'u32[]', space=smem, size = 0x4, offset = 0x4, fixed_abs, tag = 'smem constant byte address 0x4 - core index']
  #allocation1 [shape = 'u32[144,128]{1,0:T(1,128)}', space=vmem, size = 0x12000, scoped, tag = 'internal scratch']
  #allocation2 [shape = 'f32[1]{0:T(128)S(6)}', space=smem, size = 0x200, scoped, tag = 'scoped memory for tpu_custom_call.1']
  %s0 = inlined_call_operand.vmem [shape: f32[32,64], index: 0, kind: input, shape index: {}]
  %s1 = inlined_call_operand.vmem [shape: f32[64,8], index: 1, kind: input, shape index: {}]
  %s2 = inlined_call_operand.vmem [shape: f32[8,8,8], index: 2, kind: input, shape index: {}]
  %s3 = inlined_call_operand.vmem [shape: bf16[64,128], index: 3, kind: input, shape index: {}]
  %s4 = inlined_call_operand.hbm [shape: bf16[6,128,128], index: 4, kind: input, shape index: {}]
  %s5 = inlined_call_operand.vmem [shape: f32[40,32], index: 5, kind: input, shape index: {}]
  %s6 = inlined_call_operand.vmem [shape: f32[16,128], index: 6, kind: input, shape index: {}]
  %s7 = inlined_call_operand.<no memory space> [shape: f32[1], index: 7, kind: input, shape index: {}]
  %s8 = inlined_call_operand.vmem [shape: f32[2,1,1], index: 8, kind: output, shape index: {}]
  %s9 = sld [smem:[#allocation0]]
  $region69: #{tpu_custom_call.1} parent=0
    _
  %s11 = ssub.s32 1, %s9
  %s12 = scalar_select 0, %s11, %s9
  %13 = sst [smem:[#allocation2]] %s7
  $region1: #{tpu_custom_call.1} parent=0
    #allocation3 [shape = 'u8[196608]{0}', space=vmem, size = 0x30000, scoped, tag = 'input window, operand 4, single buffered']
    #allocation4 [shape = 's32[2]{0}', space=sflag, size = 0x8, scoped, tag = 'scoped memory for tpu_custom_call.1']
    %14 = vsyncpa [#allocation4], 0
    loop: start=0, step=1, limit=4
    $region2: #{tpu_custom_call.1} parent=1 // loop_pre_header
      _
    $region3: #{tpu_custom_call.1} parent=1 // loop_header
      %s16 = sphi 0, %s20
      %p17 = scmp.ge.s32.totalorder %s16, 4
      %s26 = sphi 0, %s28
      %s29 = sphi 0, %s26
      %s30 = sphi 0, %s29
      %s46 = sphi 0, %s30
      %s52 = sphi 0, %s54
      %s55 = sphi 0, %s52
      %s56 = sphi 0, %s55
      %s72 = sphi 0, %s56
      %s78 = sphi 0, %s80
      %s81 = sphi 0, %s78
      %s82 = sphi 0, %s81
      %s98 = sphi 0, %s82
      %s102 = sphi 0, %s102
      %s104 = sphi 0, %s102
      %s105 = sphi 0, %s104
      %s119 = sphi 0, %s105
      %s123 = sphi 0, %s123
      %s125 = sphi 0, %s123
      %s126 = sphi 0, %s125
      %s140 = sphi 0, %s126
      %s144 = sphi 0, %s144
      %s146 = sphi 0, %s144
      %s147 = sphi 0, %s146
      %s161 = sphi 0, %s147
      %s165 = sphi 0, %s165
      %s167 = sphi 0, %s165
      %s168 = sphi 0, %s167
      %s182 = sphi 0, %s168
      %s186 = sphi 0, %s186
      %s188 = sphi 0, %s186
      %s189 = sphi 0, %s188
      %s203 = sphi 0, %s189
      %s209 = sphi 0, %s211
      %s212 = sphi 0, %s209
      %s213 = sphi 0, %s212
      %s229 = sphi 0, %s213
    $region4: #{tpu_custom_call.1} parent=1 // loop_header_branch
      %19 = sbr.rel (%p17) target = $region8
    $region5: #{tpu_custom_call.1} parent=1 // loop_body
      %s21 = ssub.s32 %s16, 1
      %s22 = ssub.s32 %s16, 2
      %s23 = sadd.s32 %s16, 1
      %s24 = ssub.s32 %s16, %s23
      %p25 = scmp.eq.s32.totalorder %s24, 0
      %s27 = sadd.s32 %s26, 1
      %s28 = scalar_select %p25, %s26, %s27
      %p31 = pneg %p25
      %p32 = scmp.eq.s32.totalorder %s16, 1
      %p33 = por %p31, %p32
      %p34 = scmp.ne.s32.totalorder %s26, %s29
      %p35 = scmp.eq.s32.totalorder %s16, 0
      %p36 = por %p34, %p35
      %p37 = scmp.ne.s32.totalorder %s26, %s29
      %p38 = scmp.eq.s32.totalorder %s21, 1
      %p39 = por %p37, %p38
      %p40 = scmp.ne.s32.totalorder %s29, %s30
      %p41 = scmp.eq.s32.totalorder %s21, 0
      %p42 = por %p40, %p41
      %p43 = scmp.ne.s32.totalorder %s29, %s30
      %p44 = scmp.eq.s32.totalorder %s22, 1
      %p45 = por %p43, %p44
      %p47 = scmp.ne.s32.totalorder %s30, %s46
      %p48 = scmp.eq.s32.totalorder %s22, 0
      %p49 = por %p47, %p48
      %s50 = ssub.s32 %s16, %s23
      %p51 = scmp.eq.s32.totalorder %s50, 0
      %s53 = sadd.s32 %s52, 1
      %s54 = scalar_select %p51, %s52, %s53
      %p57 = pneg %p51
      %p58 = scmp.eq.s32.totalorder %s16, 1
      %p59 = por %p57, %p58
      %p60 = scmp.ne.s32.totalorder %s52, %s55
      %p61 = scmp.eq.s32.totalorder %s16, 0
      %p62 = por %p60, %p61
      %p63 = scmp.ne.s32.totalorder %s52, %s55
      %p64 = scmp.eq.s32.totalorder %s21, 1
      %p65 = por %p63, %p64
      %p66 = scmp.ne.s32.totalorder %s55, %s56
      %p67 = scmp.eq.s32.totalorder %s21, 0
      %p68 = por %p66, %p67
      %p69 = scmp.ne.s32.totalorder %s55, %s56
      %p70 = scmp.eq.s32.totalorder %s22, 1
      %p71 = por %p69, %p70
      %p73 = scmp.ne.s32.totalorder %s56, %s72
      %p74 = scmp.eq.s32.totalorder %s22, 0
      %p75 = por %p73, %p74
      %s76 = ssub.s32 %s16, %s23
      %p77 = scmp.eq.s32.totalorder %s76, 0
      %s79 = sadd.s32 %s78, 1
      %s80 = scalar_select %p77, %s78, %s79
      %p83 = pneg %p77
      %p84 = scmp.eq.s32.totalorder %s16, 1
      %p85 = por %p83, %p84
      %p86 = scmp.ne.s32.totalorder %s78, %s81
      %p87 = scmp.eq.s32.totalorder %s16, 0
      %p88 = por %p86, %p87
      %p89 = scmp.ne.s32.totalorder %s78, %s81
      %p90 = scmp.eq.s32.totalorder %s21, 1
      %p91 = por %p89, %p90
      %p92 = scmp.ne.s32.totalorder %s81, %s82
      %p93 = scmp.eq.s32.totalorder %s21, 0
      %p94 = por %p92, %p93
      %p95 = scmp.ne.s32.totalorder %s81, %s82
      %p96 = scmp.eq.s32.totalorder %s22, 1
      %p97 = por %p95, %p96
      %p99 = scmp.ne.s32.totalorder %s82, %s98
      %p100 = scmp.eq.s32.totalorder %s22, 0
      %p101 = por %p99, %p100
      %s103 = sadd.s32 %s102, 1
      %p106 = scmp.eq.s32.totalorder %s16, 1
      %p107 = scmp.ne.s32.totalorder %s102, %s104
      %p108 = scmp.eq.s32.totalorder %s16, 0
      %p109 = por %p107, %p108
      %p110 = scmp.ne.s32.totalorder %s102, %s104
      %p111 = scmp.eq.s32.totalorder %s21, 1
      %p112 = por %p110, %p111
      %p113 = scmp.ne.s32.totalorder %s104, %s105
      %p114 = scmp.eq.s32.totalorder %s21, 0
      %p115 = por %p113, %p114
      %p116 = scmp.ne.s32.totalorder %s104, %s105
      %p117 = scmp.eq.s32.totalorder %s22, 1
      %p118 = por %p116, %p117
      %p120 = scmp.ne.s32.totalorder %s105, %s119
      %p121 = scmp.eq.s32.totalorder %s22, 0
      %p122 = por %p120, %p121
      %s124 = sadd.s32 %s123, 1
      %p127 = scmp.eq.s32.totalorder %s16, 1
      %p128 = scmp.ne.s32.totalorder %s123, %s125
      %p129 = scmp.eq.s32.totalorder %s16, 0
      %p130 = por %p128, %p129
      %p131 = scmp.ne.s32.totalorder %s123, %s125
      %p132 = scmp.eq.s32.totalorder %s21, 1
      %p133 = por %p131, %p132
      %p134 = scmp.ne.s32.totalorder %s125, %s126
      %p135 = scmp.eq.s32.totalorder %s21, 0
      %p136 = por %p134, %p135
      %p137 = scmp.ne.s32.totalorder %s125, %s126
      %p138 = scmp.eq.s32.totalorder %s22, 1
      %p139 = por %p137, %p138
      %p141 = scmp.ne.s32.totalorder %s126, %s140
      %p142 = scmp.eq.s32.totalorder %s22, 0
      %p143 = por %p141, %p142
      %s145 = sadd.s32 %s144, 1
      %p148 = scmp.eq.s32.totalorder %s16, 1
      %p149 = scmp.ne.s32.totalorder %s144, %s146
      %p150 = scmp.eq.s32.totalorder %s16, 0
      %p151 = por %p149, %p150
      %p152 = scmp.ne.s32.totalorder %s144, %s146
      %p153 = scmp.eq.s32.totalorder %s21, 1
      %p154 = por %p152, %p153
      %p155 = scmp.ne.s32.totalorder %s146, %s147
      %p156 = scmp.eq.s32.totalorder %s21, 0
      %p157 = por %p155, %p156
      %p158 = scmp.ne.s32.totalorder %s146, %s147
      %p159 = scmp.eq.s32.totalorder %s22, 1
      %p160 = por %p158, %p159
      %p162 = scmp.ne.s32.totalorder %s147, %s161
      %p163 = scmp.eq.s32.totalorder %s22, 0
      %p164 = por %p162, %p163
      %s166 = sadd.s32 %s165, 1
      %p169 = scmp.eq.s32.totalorder %s16, 1
      %p170 = scmp.ne.s32.totalorder %s165, %s167
      %p171 = scmp.eq.s32.totalorder %s16, 0
      %p172 = por %p170, %p171
      %p173 = scmp.ne.s32.totalorder %s165, %s167
      %p174 = scmp.eq.s32.totalorder %s21, 1
      %p175 = por %p173, %p174
      %p176 = scmp.ne.s32.totalorder %s167, %s168
      %p177 = scmp.eq.s32.totalorder %s21, 0
      %p178 = por %p176, %p177
      %p179 = scmp.ne.s32.totalorder %s167, %s168
      %p180 = scmp.eq.s32.totalorder %s22, 1
      %p181 = por %p179, %p180
      %p183 = scmp.ne.s32.totalorder %s168, %s182
      %p184 = scmp.eq.s32.totalorder %s22, 0
      %p185 = por %p183, %p184
      %s187 = sadd.s32 %s186, 1
      %p190 = scmp.eq.s32.totalorder %s16, 1
      %p191 = scmp.ne.s32.totalorder %s186, %s188
      %p192 = scmp.eq.s32.totalorder %s16, 0
      %p193 = por %p191, %p192
      %p194 = scmp.ne.s32.totalorder %s186, %s188
      %p195 = scmp.eq.s32.totalorder %s21, 1
      %p196 = por %p194, %p195
      %p197 = scmp.ne.s32.totalorder %s188, %s189
      %p198 = scmp.eq.s32.totalorder %s21, 0
      %p199 = por %p197, %p198
      %p200 = scmp.ne.s32.totalorder %s188, %s189
      %p201 = scmp.eq.s32.totalorder %s22, 1
      %p202 = por %p200, %p201
      %p204 = scmp.ne.s32.totalorder %s189, %s203
      %p205 = scmp.eq.s32.totalorder %s22, 0
      %p206 = por %p204, %p205
      %s207 = ssub.s32 %s16, %s23
      %p208 = scmp.eq.s32.totalorder %s207, 0
      %s210 = sadd.s32 %s209, 1
      %s211 = scalar_select %p208, %s209, %s210
      %p214 = pneg %p208
      %p215 = scmp.eq.s32.totalorder %s16, 1
      %p216 = por %p214, %p215
      %p217 = scmp.ne.s32.totalorder %s209, %s212
      %p218 = scmp.eq.s32.totalorder %s16, 0
      %p219 = por %p217, %p218
      %p220 = scmp.ne.s32.totalorder %s209, %s212
      %p221 = scmp.eq.s32.totalorder %s21, 1
      %p222 = por %p220, %p221
      %p223 = scmp.ne.s32.totalorder %s212, %s213
      %p224 = scmp.eq.s32.totalorder %s21, 0
      %p225 = por %p223, %p224
      %p226 = scmp.ne.s32.totalorder %s212, %s213
      %p227 = scmp.eq.s32.totalorder %s22, 1
      %p228 = por %p226, %p227
      %p230 = scmp.ne.s32.totalorder %s213, %s229
      %p231 = scmp.eq.s32.totalorder %s22, 0
      %p232 = por %p230, %p231
      %p233 = scmp.le.s32.totalorder 1, %s16
      %p234 = scmp.lt.s32.totalorder %s16, 3
      %p235 = pnand %p233, %p234
      %p236 = pneg %p235
      // Predicated region
      $region9: #{tpu_custom_call.1} parent=5 // pred_check
        _
      $region10: #{tpu_custom_call.1} parent=5 // pred_check_branch
        %238 = sbr.rel (%p235) target = $region12
      $region11: #{tpu_custom_call.1} parent=5 // pred_region
        %s239 = ssub.s32 %s16, 1
        // Predicated region
        $region13: #{tpu_custom_call.1} parent=11 // pred_check
          %p240 = pneg %p115
        $region14: #{tpu_custom_call.1} parent=11 // pred_check_branch
          %242 = sbr.rel (%p240) target = $region16
        $region15: #{tpu_custom_call.1} parent=11 // pred_region
          _
        $region16: #{tpu_custom_call.1} parent=11 // pred_fallthru
          _
        // Predicated region
        $region17: #{tpu_custom_call.1} parent=11 // pred_check
          %p243 = pneg %p136
        $region18: #{tpu_custom_call.1} parent=11 // pred_check_branch
          %245 = sbr.rel (%p243) target = $region20
        $region19: #{tpu_custom_call.1} parent=11 // pred_region
          %s247 = ssub.s32 6144, 6144
          %248 = vsyncadd [#allocation4], %s247
          %s249 = sshll.u32 [#allocation3], 4
          %s250 = int_to_ptr.vmem [resolvable:$true] %s249
          %255 = dma.hbm_to_vmem [thread:$0]  %s4, 6144, %s250, [#allocation4], 64, 64, 4
        $region20: #{tpu_custom_call.1} parent=11 // pred_fallthru
          _
        // Predicated region
        $region21: #{tpu_custom_call.1} parent=11 // pred_check
          %p256 = pneg %p157
        $region22: #{tpu_custom_call.1} parent=11 // pred_check_branch
          %258 = sbr.rel (%p256) target = $region24
        $region23: #{tpu_custom_call.1} parent=11 // pred_region
          _
        $region24: #{tpu_custom_call.1} parent=11 // pred_fallthru
          _
        // Predicated region
        $region25: #{tpu_custom_call.1} parent=11 // pred_check
          %p259 = pneg %p178
        $region26: #{tpu_custom_call.1} parent=11 // pred_check_branch
          %261 = sbr.rel (%p259) target = $region28
        $region27: #{tpu_custom_call.1} parent=11 // pred_region
          _
        $region28: #{tpu_custom_call.1} parent=11 // pred_fallthru
          _
        // Predicated region
        $region29: #{tpu_custom_call.1} parent=11 // pred_check
          %p262 = pneg %p199
        $region30: #{tpu_custom_call.1} parent=11 // pred_check_branch
          %264 = sbr.rel (%p262) target = $region32
        $region31: #{tpu_custom_call.1} parent=11 // pred_region
          _
        $region32: #{tpu_custom_call.1} parent=11 // pred_fallthru
          _
      $region12: #{tpu_custom_call.1} parent=5 // pred_fallthru
        _
      %p265 = scmp.lt.s32.totalorder %s16, 2
      // Predicated region
      $region33: #{tpu_custom_call.1} parent=5 // pred_check
        %p266 = pneg %p265
      $region34: #{tpu_custom_call.1} parent=5 // pred_check_branch
        %268 = sbr.rel (%p266) target = $region36
      $region35: #{tpu_custom_call.1} parent=5 // pred_region
        // Predicated region
        $region37: #{tpu_custom_call.1} parent=35 // pred_check
          %p269 = pneg %p36
        $region38: #{tpu_custom_call.1} parent=35 // pred_check_branch
          %271 = sbr.rel (%p269) target = $region40
        $region39: #{tpu_custom_call.1} parent=35 // pred_region
          %s272 = smul.u32 2, %s16
          %p273 = scmp.lt.s32.totalorder %s272, 3
          %s274 = scalar_select %p273, %s272, 3
          %s275 = smul.addr %s274, 8
          %s276 = scalar_lea.vmem %s0, %s275
          %s277 = smul.u32 2, %s16
        $region40: #{tpu_custom_call.1} parent=35 // pred_fallthru
          _
        // Predicated region
        $region41: #{tpu_custom_call.1} parent=35 // pred_check
          %p278 = pneg %p62
        $region42: #{tpu_custom_call.1} parent=35 // pred_check_branch
          %280 = sbr.rel (%p278) target = $region44
        $region43: #{tpu_custom_call.1} parent=35 // pred_region
          %s281 = smul.u32 4, %s16
          %p282 = scmp.lt.s32.totalorder %s281, 7
          %s283 = scalar_select %p282, %s281, 7
          %s284 = smul.addr %s283, 8
          %s285 = scalar_lea.vmem %s1, %s284
          %s286 = smul.u32 4, %s16
        $region44: #{tpu_custom_call.1} parent=35 // pred_fallthru
          _
        // Predicated region
        $region45: #{tpu_custom_call.1} parent=35 // pred_check
          %p287 = pneg %p88
        $region46: #{tpu_custom_call.1} parent=35 // pred_check_branch
          %289 = sbr.rel (%p287) target = $region48
        $region47: #{tpu_custom_call.1} parent=35 // pred_region
          %s290 = smul.u32 4, %s16
          %p291 = scmp.lt.s32.totalorder %s290, 7
          %s292 = scalar_select %p291, %s290, 7
          %s293 = smul.addr %s292, 8
          %s294 = scalar_lea.vmem %s2, %s293
          %s295 = smul.u32 4, %s16
        $region48: #{tpu_custom_call.1} parent=35 // pred_fallthru
          _
      $region36: #{tpu_custom_call.1} parent=5 // pred_fallthru
        _
      %p296 = scmp.le.s32.totalorder 1, %s16
      %p297 = scmp.lt.s32.totalorder %s16, 3
      %p298 = pnand %p296, %p297
      %p299 = pneg %p298
      // Predicated region
      $region49: #{tpu_custom_call.1} parent=5 // pred_check
        _
      $region50: #{tpu_custom_call.1} parent=5 // pred_check_branch
        %301 = sbr.rel (%p298) target = $region52
      $region51: #{tpu_custom_call.1} parent=5 // pred_region
        %s302 = ssub.s32 %s16, 1
        // Predicated region
        $region53: #{tpu_custom_call.1} parent=51 // pred_check
          %p303 = pneg %p136
        $region54: #{tpu_custom_call.1} parent=51 // pred_check_branch
          %305 = sbr.rel (%p303) target = $region56
        $region55: #{tpu_custom_call.1} parent=51 // pred_region
          %306 = dma.done [#allocation4], 6144
        $region56: #{tpu_custom_call.1} parent=51 // pred_fallthru
          _
        %s307 = smul.u32 2, %s21
        %p308 = scmp.lt.s32.totalorder %s307, 3
        %s309 = scalar_select %p308, %s307, 3
        %s310 = smul.addr %s309, 8
        %s311 = scalar_lea.vmem %s0, %s310
        %p312 = pneg %p42
        %p313 = pneg %p39
        %s314 = smul.u32 4, %s21
        %p315 = scmp.lt.s32.totalorder %s314, 7
        %s316 = scalar_select %p315, %s314, 7
        %s317 = smul.addr %s316, 8
        %s318 = scalar_lea.vmem %s1, %s317
        %p319 = pneg %p68
        %p320 = pneg %p65
        %s321 = smul.u32 4, %s21
        %p322 = scmp.lt.s32.totalorder %s321, 7
        %s323 = scalar_select %p322, %s321, 7
        %s324 = smul.addr %s323, 8
        %s325 = scalar_lea.vmem %s2, %s324
        %p326 = pneg %p94
        %p327 = pneg %p91
        %p328 = pneg %p115
        %p329 = pneg %p112
        %p330 = pneg %p136
        %p331 = pneg %p133
        %p332 = pneg %p157
        %p333 = pneg %p154
        %p334 = pneg %p178
        %p335 = pneg %p175
        %p336 = pneg %p199
        %p337 = pneg %p196
        %p338 = pneg %p225
        %p339 = pneg %p222
        %p340 = scmp.lt.s32.totalorder %s21, 1
        %s341 = scalar_select %p340, %s21, 1
        %s342 = scalar_lea.vmem %s8, %s341
        %s343 = smul.u32 2, %s21
        %p344 = scmp.lt.s32.totalorder %s343, 3
        %s345 = scalar_select %p344, %s343, 3
        %s346 = smul.addr %s345, 8
        %s347 = scalar_lea.vmem %s0, %s346
        %s348 = smul.u32 2, %s21
        %s349 = smul.u32 4, %s21
        %p350 = scmp.lt.s32.totalorder %s349, 7
        %s351 = scalar_select %p350, %s349, 7
        %s352 = smul.addr %s351, 8
        %s353 = scalar_lea.vmem %s1, %s352
        %s354 = smul.u32 4, %s21
        %s355 = smul.u32 4, %s21
        %p356 = scmp.lt.s32.totalorder %s355, 7
        %s357 = scalar_select %p356, %s355, 7
        %s358 = smul.addr %s357, 8
        %s359 = scalar_lea.vmem %s2, %s358
        %s360 = smul.u32 4, %s21
        %p361 = scmp.lt.s32.totalorder %s21, 1
        %s362 = scalar_select %p361, %s21, 1
        %s363 = scalar_lea.vmem %s8, %s362
        %v365 = vld [vmem:[%s347] sm:$0xff]
        %v366 = vld [vmem:[%s347 + $0x8] sm:$0xff]
        %v367 = vpack.c.bf16 %v366, %v365
        %s368 = sld [smem:[#allocation2]]
        %v369 = vld [vmem:[%s5] sm:$0xff]
        %v370 = vpack.c.bf16 %v369, %v369
        %v371 = vld [vmem:[%s5 + $0x8] sm:$0xff]
        %v372 = vld [vmem:[%s5 + $0x10] sm:$0xff]
        %v373 = vld [vmem:[%s5 + $0x18] sm:$0xff]
        %v374 = vld [vmem:[%s5 + $0x20] sm:$0xff]
        %v375 = vpack.c.bf16 %v372, %v371
        %v376 = vpack.c.bf16 %v374, %v373
        %v377 = vld [vmem:[%s353] sm:$0xff]
        %v378 = vld [vmem:[%s353 + $0x8] sm:$0xff]
        %v379 = vld [vmem:[%s353 + $0x10] sm:$0xff]
        %v380 = vld [vmem:[%s353 + $0x18] sm:$0xff]
        %v381 = vpack.c.bf16 %v378, %v377
        %v382 = vpack.c.bf16 %v380, %v379
        %v383 = vld [vmem:[%s6 + $0x4] sm:$0x1]
        %v384 = vlaneseq
        %v385 = vshrl.u32 %v384, 7
        %v386 = vsub.s32 0, %v385
        %v387 = vrot.slane %v383, %v386
        %vm388 = vcmask 64512
        %v390 = vsel %vm388, %v381, 0
        %v393 = vsel %vm388, %v382, 0
        %vm395 = vcmask 1043456
        %v397 = vsel %vm395, %v370, 0
        %399 = vmatprep.subr.bf16.mxu0 0
        %400 = vmatpush1.bf16.msra.mxu0 %v397
        %401 = vmatprep.subr.bf16.mxu0 0
        %402 = vmatpush1.bf16.msra.mxu0 0
        %403 = vmatprep.subr.bf16.mxu0 0
        %404 = vmatpush1.bf16.msra.mxu0 0
        %405 = vmatprep.subr.bf16.mxu0 0
        %406 = vmatpush1.bf16.msra.mxu0 0
        %407 = vmatprep.subr.bf16.mxu0 0
        %408 = vmatpush1.bf16.msra.mxu0 0
        %409 = vmatprep.subr.bf16.mxu0 0
        %410 = vmatpush1.bf16.msra.mxu0 0
        %411 = vmatprep.subr.bf16.mxu0 0
        %412 = vmatpush1.bf16.msra.mxu0 0
        %413 = vmatprep.subr.bf16.mxu0 0
        %414 = vmatpush1.bf16.msra.mxu0 0
        %415 = vmatprep.subr.bf16.mxu0 0
        %416 = vmatpush1.bf16.msra.mxu0 0
        %417 = vmatprep.subr.bf16.mxu0 0
        %418 = vmatpush1.bf16.msra.mxu0 0
        %419 = vmatprep.subr.bf16.mxu0 0
        %420 = vmatpush1.bf16.msra.mxu0 0
        %421 = vmatprep.subr.bf16.mxu0 0
        %422 = vmatpush1.bf16.msra.mxu0 0
        %423 = vmatprep.subr.bf16.mxu0 0
        %424 = vmatpush1.bf16.msra.mxu0 0
        %425 = vmatprep.subr.bf16.mxu0 0
        %426 = vmatpush1.bf16.msra.mxu0 0
        %427 = vmatprep.subr.bf16.mxu0 0
        %428 = vmatpush1.bf16.msra.mxu0 0
        %429 = vmatprep.subr.bf16.mxu0 0
        %430 = vmatpush1.bf16.msra.mxu0 0
        %431 = vmatprep.mubr.bf16.mxu0 0
        %432 = vmatmul.mubr.bf16.gmra.mrb[0].mxu0 %v390
        %v433 = vpop.f32.mrb[0].mxu0
        %v434 = vadd.f32 %v387, %v433
        %v435 = vpop.f32.mrb[0].mxu0
        %v436 = vpop.f32.mrb[0].mxu0
        %v437 = vadd.f32 %v387, %v436
        %v438 = vpop.f32.mrb[0].mxu0
        %439 = vmatprep.mubr.bf16.mxu0 0
        %440 = vmatmul.mubr.bf16.gmra.mrb[0].mxu0 %v393
        %v441 = vpop.f32.mrb[0].mxu0
        %v442 = vadd.f32 %v387, %v441
        %v443 = vpop.f32.mrb[0].mxu0
        %v444 = vpop.f32.mrb[0].mxu0
        %v445 = vadd.f32 %v387, %v444
        %v446 = vpop.f32.mrb[0].mxu0
        %447 = vdwg.mxu0
        %v448 = vtanh.pop %v434
        %v449 = vtanh.pop %v437
        %v450 = vtanh.pop %v442
        %v451 = vtanh.pop %v445
        %v452 = vpack.c.bf16 %v449, %v448
        %v453 = vpack.c.bf16 %v451, %v450
        %v454 = vld [vmem:[%s6 + $0x5] sm:$0x1]
        %v455 = vlaneseq
        %v456 = vshrl.u32 %v455, 7
        %v457 = vsub.s32 0, %v456
        %v458 = vrot.slane %v454, %v457
        %vm459 = vcmask 261120
        %v461 = vsel %vm459, %v452, 0
        %v464 = vsel %vm459, %v453, 0
        %466 = vmatprep.subr.bf16.mxu0 0
        %467 = vmatpush1.bf16.msra.mxu0 %v375
        %468 = vmatprep.subr.bf16.mxu0 0
        %469 = vmatpush1.bf16.msra.mxu0 %v376
        %470 = vmatprep.subr.bf16.mxu0 0
        %471 = vmatpush1.bf16.msra.mxu0 0
        %472 = vmatprep.subr.bf16.mxu0 0
        %473 = vmatpush1.bf16.msra.mxu0 0
        %474 = vmatprep.subr.bf16.mxu0 0
        %475 = vmatpush1.bf16.msra.mxu0 0
        %476 = vmatprep.subr.bf16.mxu0 0
        %477 = vmatpush1.bf16.msra.mxu0 0
        %478 = vmatprep.subr.bf16.mxu0 0
        %479 = vmatpush1.bf16.msra.mxu0 0
        %480 = vmatprep.subr.bf16.mxu0 0
        %481 = vmatpush1.bf16.msra.mxu0 0
        %482 = vmatprep.subr.bf16.mxu0 0
        %483 = vmatpush1.bf16.msra.mxu0 0
        %484 = vmatprep.subr.bf16.mxu0 0
        %485 = vmatpush1.bf16.msra.mxu0 0
        %486 = vmatprep.subr.bf16.mxu0 0
        %487 = vmatpush1.bf16.msra.mxu0 0
        %488 = vmatprep.subr.bf16.mxu0 0
        %489 = vmatpush1.bf16.msra.mxu0 0
        %490 = vmatprep.subr.bf16.mxu0 0
        %491 = vmatpush1.bf16.msra.mxu0 0
        %492 = vmatprep.subr.bf16.mxu0 0
        %493 = vmatpush1.bf16.msra.mxu0 0
        %494 = vmatprep.subr.bf16.mxu0 0
        %495 = vmatpush1.bf16.msra.mxu0 0
        %496 = vmatprep.subr.bf16.mxu0 0
        %497 = vmatpush1.bf16.msra.mxu0 0
        %498 = vmatprep.mubr.bf16.mxu0 0
        %499 = vmatmul.mubr.bf16.gmra.mrb[0].mxu0 %v461
        %v500 = vpop.f32.mrb[0].mxu0
        %v501 = vadd.f32 %v458, %v500
        %v502 = vpop.f32.mrb[0].mxu0
        %v503 = vpop.f32.mrb[0].mxu0
        %v504 = vadd.f32 %v458, %v503
        %v505 = vpop.f32.mrb[0].mxu0
        %506 = vmatprep.mubr.bf16.mxu0 0
        %507 = vmatmul.mubr.bf16.gmra.mrb[0].mxu0 %v464
        %v508 = vpop.f32.mrb[0].mxu0
        %v509 = vadd.f32 %v458, %v508
        %v510 = vpop.f32.mrb[0].mxu0
        %v511 = vpop.f32.mrb[0].mxu0
        %v512 = vadd.f32 %v458, %v511
        %v513 = vpop.f32.mrb[0].mxu0
        %514 = vdwg.mxu0
        %v515 = vpack.c.bf16 %v501, %v501
        %v516 = vpack.c.bf16 %v504, %v504
        %v517 = vpack.c.bf16 %v509, %v509
        %v518 = vpack.c.bf16 %v512, %v512
        %v519 = vld [vmem:[%s359] sm:$0x1]
        %v520 = vld [vmem:[%s359 + $0x8] sm:$0x1]
        %v521 = vld [vmem:[%s359 + $0x10] sm:$0x1]
        %v522 = vld [vmem:[%s359 + $0x18] sm:$0x1]
        %v523 = vld [vmem:[%s359 + $0x1] sm:$0x1]
        %v524 = vld [vmem:[%s359 + $0x9] sm:$0x1]
        %v525 = vld [vmem:[%s359 + $0x11] sm:$0x1]
        %v526 = vld [vmem:[%s359 + $0x19] sm:$0x1]
        %v529 = vcombine.high %v365, %v365
        %v530 = vcombine.high %v366, %v366
        %531 = vset.pattern.permute.xlu0 9
        %532 = vperm.xlu0 %531, %v365
        %v533 = vpop.permute.xlu0 %532
        %v536 = vunpack.c.l.s4 839922192
        %v537 = vunpack.c.0.s8 %v536
        %v538 = vlaneseq
        %v539 = vshrl.u32 %v538, 7
        %v540 = vsub.s32 %v537, %v539
        %v541 = vrot.slane %v533, %v540
        %542 = vset.pattern.permute.xlu0 9
        %543 = vperm.xlu0 %542, %v529
        %v544 = vpop.permute.xlu0 %543
        %v547 = vunpack.c.l.s4 839922192
        %v548 = vunpack.c.0.s8 %v547
        %v549 = vlaneseq
        %v550 = vshrl.u32 %v549, 7
        %v551 = vsub.s32 %v548, %v550
        %v552 = vrot.slane %v544, %v551
        %553 = vset.pattern.permute.xlu0 9
        %554 = vperm.xlu0 %553, %v366
        %v555 = vpop.permute.xlu0 %554
        %v558 = vunpack.c.l.s4 839922192
        %v559 = vunpack.c.0.s8 %v558
        %v560 = vlaneseq
        %v561 = vshrl.u32 %v560, 7
        %v562 = vsub.s32 %v559, %v561
        %v563 = vrot.slane %v555, %v562
        %564 = vset.pattern.permute.xlu0 9
        %565 = vperm.xlu0 %564, %v530
        %v566 = vpop.permute.xlu0 %565
        %v569 = vunpack.c.l.s4 839922192
        %v570 = vunpack.c.0.s8 %v569
        %v571 = vlaneseq
        %v572 = vshrl.u32 %v571, 7
        %v573 = vsub.s32 %v570, %v572
        %v574 = vrot.slane %v566, %v573
        %v575 = vlaneseq
        %v576 = vshrl.u32 %v575, 7
        %v577 = vsub.s32 0, %v576
        %v578 = vrot.slane %v519, %v577
        %v579 = vlaneseq
        %v580 = vshrl.u32 %v579, 7
        %v581 = vsub.s32 0, %v580
        %v582 = vrot.slane %v520, %v581
        %v583 = vlaneseq
        %v584 = vshrl.u32 %v583, 7
        %v585 = vsub.s32 0, %v584
        %v586 = vrot.slane %v521, %v585
        %v587 = vlaneseq
        %v588 = vshrl.u32 %v587, 7
        %v589 = vsub.s32 0, %v588
        %v590 = vrot.slane %v522, %v589
        %v591 = vsub.f32 %v541, %v578
        %v592 = vsub.f32 %v552, %v582
        %v593 = vsub.f32 %v563, %v586
        %v594 = vsub.f32 %v574, %v590
        %v595 = vmul.f32 %v591, %v591
        %v596 = vmul.f32 %v592, %v592
        %v597 = vmul.f32 %v593, %v593
        %v598 = vmul.f32 %v594, %v594
        %v599 = vsub.f32 0.0, %v595
        %v600 = vsub.f32 0.0, %v596
        %v601 = vsub.f32 0.0, %v597
        %v602 = vsub.f32 0.0, %v598
        %v603 = vstv %s368
        %v604 = vmul.f32 %v599, %v603
        %v605 = vmul.f32 %v600, %v603
        %v606 = vmul.f32 %v601, %v603
        %v607 = vmul.f32 %v602, %v603
        %v608 = vmul.f32 %v604, 1.442695
        %v609 = vpow.pop %v608
        %v610 = vmul.f32 %v605, 1.442695
        %v611 = vpow.pop %v610
        %v612 = vmul.f32 %v606, 1.442695
        %v613 = vpow.pop %v612
        %v614 = vmul.f32 %v607, 1.442695
        %v615 = vpow.pop %v614
        %v616 = vlaneseq
        %v617 = vshrl.u32 %v616, 7
        %v618 = vsub.s32 0, %v617
        %v619 = vrot.slane %v523, %v618
        %v620 = vlaneseq
        %v621 = vshrl.u32 %v620, 7
        %v622 = vsub.s32 0, %v621
        %v623 = vrot.slane %v524, %v622
        %v624 = vlaneseq
        %v625 = vshrl.u32 %v624, 7
        %v626 = vsub.s32 0, %v625
        %v627 = vrot.slane %v525, %v626
        %v628 = vlaneseq
        %v629 = vshrl.u32 %v628, 7
        %v630 = vsub.s32 0, %v629
        %v631 = vrot.slane %v526, %v630
        %v632 = vmul.f32 %v609, %v619
        %v633 = vmul.f32 %v611, %v623
        %v634 = vmul.f32 %v613, %v627
        %v635 = vmul.f32 %v615, %v631
        %v636 = vpack.c.bf16 %v632, %v632
        %v637 = vpack.c.bf16 %v633, %v633
        %v638 = vpack.c.bf16 %v634, %v634
        %v639 = vpack.c.bf16 %v635, %v635
        %v641 = vsel %vm388, %v636, 0
        %v644 = vsel %vm395, %v515, 0
        %646 = vmatprep.subr.bf16.mxu0 0
        %647 = vmatpush1.bf16.msra.mxu0 %v644
        %648 = vmatprep.subr.bf16.mxu0 0
        %649 = vmatpush1.bf16.msra.mxu0 0
        %650 = vmatprep.subr.bf16.mxu0 0
        %651 = vmatpush1.bf16.msra.mxu0 0
        %652 = vmatprep.subr.bf16.mxu0 0
        %653 = vmatpush1.bf16.msra.mxu0 0
        %654 = vmatprep.subr.bf16.mxu0 0
        %655 = vmatpush1.bf16.msra.mxu0 0
        %656 = vmatprep.subr.bf16.mxu0 0
        %657 = vmatpush1.bf16.msra.mxu0 0
        %658 = vmatprep.subr.bf16.mxu0 0
        %659 = vmatpush1.bf16.msra.mxu0 0
        %660 = vmatprep.subr.bf16.mxu0 0
        %661 = vmatpush1.bf16.msra.mxu0 0
        %662 = vmatprep.subr.bf16.mxu0 0
        %663 = vmatpush1.bf16.msra.mxu0 0
        %664 = vmatprep.subr.bf16.mxu0 0
        %665 = vmatpush1.bf16.msra.mxu0 0
        %666 = vmatprep.subr.bf16.mxu0 0
        %667 = vmatpush1.bf16.msra.mxu0 0
        %668 = vmatprep.subr.bf16.mxu0 0
        %669 = vmatpush1.bf16.msra.mxu0 0
        %670 = vmatprep.subr.bf16.mxu0 0
        %671 = vmatpush1.bf16.msra.mxu0 0
        %672 = vmatprep.subr.bf16.mxu0 0
        %673 = vmatpush1.bf16.msra.mxu0 0
        %674 = vmatprep.subr.bf16.mxu0 0
        %675 = vmatpush1.bf16.msra.mxu0 0
        %676 = vmatprep.subr.bf16.mxu0 0
        %677 = vmatpush1.bf16.msra.mxu0 0
        %678 = vmatprep.mubr.bf16.mxu0 0
        %679 = vmatmul.mubr.bf16.gmra.mrb[0].mxu0 %v641
        %v680 = vpop.f32.mrb[0].mxu0
        %v681 = vadd.f32 0.0, %v680
        %v682 = vpop.f32.mrb[0].mxu0
        %v683 = vpop.f32.mrb[0].mxu0
        %v684 = vpop.f32.mrb[0].mxu0
        %685 = vdwg.mxu0
        %v687 = vsel %vm388, %v637, 0
        %v690 = vsel %vm395, %v516, 0
        %692 = vmatprep.subr.bf16.mxu0 0
        %693 = vmatpush1.bf16.msra.mxu0 %v690
        %694 = vmatprep.subr.bf16.mxu0 0
        %695 = vmatpush1.bf16.msra.mxu0 0
        %696 = vmatprep.subr.bf16.mxu0 0
        %697 = vmatpush1.bf16.msra.mxu0 0
        %698 = vmatprep.subr.bf16.mxu0 0
        %699 = vmatpush1.bf16.msra.mxu0 0
        %700 = vmatprep.subr.bf16.mxu0 0
        %701 = vmatpush1.bf16.msra.mxu0 0
        %702 = vmatprep.subr.bf16.mxu0 0
        %703 = vmatpush1.bf16.msra.mxu0 0
        %704 = vmatprep.subr.bf16.mxu0 0
        %705 = vmatpush1.bf16.msra.mxu0 0
        %706 = vmatprep.subr.bf16.mxu0 0
        %707 = vmatpush1.bf16.msra.mxu0 0
        %708 = vmatprep.subr.bf16.mxu0 0
        %709 = vmatpush1.bf16.msra.mxu0 0
        %710 = vmatprep.subr.bf16.mxu0 0
        %711 = vmatpush1.bf16.msra.mxu0 0
        %712 = vmatprep.subr.bf16.mxu0 0
        %713 = vmatpush1.bf16.msra.mxu0 0
        %714 = vmatprep.subr.bf16.mxu0 0
        %715 = vmatpush1.bf16.msra.mxu0 0
        %716 = vmatprep.subr.bf16.mxu0 0
        %717 = vmatpush1.bf16.msra.mxu0 0
        %718 = vmatprep.subr.bf16.mxu0 0
        %719 = vmatpush1.bf16.msra.mxu0 0
        %720 = vmatprep.subr.bf16.mxu0 0
        %721 = vmatpush1.bf16.msra.mxu0 0
        %722 = vmatprep.subr.bf16.mxu0 0
        %723 = vmatpush1.bf16.msra.mxu0 0
        %724 = vmatprep.mubr.bf16.mxu0 0
        %725 = vmatmul.mubr.bf16.gmra.mrb[0].mxu0 %v687
        %v726 = vpop.f32.mrb[0].mxu0
        %v727 = vadd.f32 0.0, %v726
        %v728 = vpop.f32.mrb[0].mxu0
        %v729 = vpop.f32.mrb[0].mxu0
        %v730 = vpop.f32.mrb[0].mxu0
        %731 = vdwg.mxu0
        %v733 = vsel %vm388, %v638, 0
        %v736 = vsel %vm395, %v517, 0
        %738 = vmatprep.subr.bf16.mxu0 0
        %739 = vmatpush1.bf16.msra.mxu0 %v736
        %740 = vmatprep.subr.bf16.mxu0 0
        %741 = vmatpush1.bf16.msra.mxu0 0
        %742 = vmatprep.subr.bf16.mxu0 0
        %743 = vmatpush1.bf16.msra.mxu0 0
        %744 = vmatprep.subr.bf16.mxu0 0
        %745 = vmatpush1.bf16.msra.mxu0 0
        %746 = vmatprep.subr.bf16.mxu0 0
        %747 = vmatpush1.bf16.msra.mxu0 0
        %748 = vmatprep.subr.bf16.mxu0 0
        %749 = vmatpush1.bf16.msra.mxu0 0
        %750 = vmatprep.subr.bf16.mxu0 0
        %751 = vmatpush1.bf16.msra.mxu0 0
        %752 = vmatprep.subr.bf16.mxu0 0
        %753 = vmatpush1.bf16.msra.mxu0 0
        %754 = vmatprep.subr.bf16.mxu0 0
        %755 = vmatpush1.bf16.msra.mxu0 0
        %756 = vmatprep.subr.bf16.mxu0 0
        %757 = vmatpush1.bf16.msra.mxu0 0
        %758 = vmatprep.subr.bf16.mxu0 0
        %759 = vmatpush1.bf16.msra.mxu0 0
        %760 = vmatprep.subr.bf16.mxu0 0
        %761 = vmatpush1.bf16.msra.mxu0 0
        %762 = vmatprep.subr.bf16.mxu0 0
        %763 = vmatpush1.bf16.msra.mxu0 0
        %764 = vmatprep.subr.bf16.mxu0 0
        %765 = vmatpush1.bf16.msra.mxu0 0
        %766 = vmatprep.subr.bf16.mxu0 0
        %767 = vmatpush1.bf16.msra.mxu0 0
        %768 = vmatprep.subr.bf16.mxu0 0
        %769 = vmatpush1.bf16.msra.mxu0 0
        %770 = vmatprep.mubr.bf16.mxu0 0
        %771 = vmatmul.mubr.bf16.gmra.mrb[0].mxu0 %v733
        %v772 = vpop.f32.mrb[0].mxu0
        %v773 = vadd.f32 0.0, %v772
        %v774 = vpop.f32.mrb[0].mxu0
        %v775 = vpop.f32.mrb[0].mxu0
        %v776 = vpop.f32.mrb[0].mxu0
        %777 = vdwg.mxu0
        %v779 = vsel %vm388, %v639, 0
        %v782 = vsel %vm395, %v518, 0
        %784 = vmatprep.subr.bf16.mxu0 0
        %785 = vmatpush1.bf16.msra.mxu0 %v782
        %786 = vmatprep.subr.bf16.mxu0 0
        %787 = vmatpush1.bf16.msra.mxu0 0
        %788 = vmatprep.subr.bf16.mxu0 0
        %789 = vmatpush1.bf16.msra.mxu0 0
        %790 = vmatprep.subr.bf16.mxu0 0
        %791 = vmatpush1.bf16.msra.mxu0 0
        %792 = vmatprep.subr.bf16.mxu0 0
        %793 = vmatpush1.bf16.msra.mxu0 0
        %794 = vmatprep.subr.bf16.mxu0 0
        %795 = vmatpush1.bf16.msra.mxu0 0
        %796 = vmatprep.subr.bf16.mxu0 0
        %797 = vmatpush1.bf16.msra.mxu0 0
        %798 = vmatprep.subr.bf16.mxu0 0
        %799 = vmatpush1.bf16.msra.mxu0 0
        %800 = vmatprep.subr.bf16.mxu0 0
        %801 = vmatpush1.bf16.msra.mxu0 0
        %802 = vmatprep.subr.bf16.mxu0 0
        %803 = vmatpush1.bf16.msra.mxu0 0
        %804 = vmatprep.subr.bf16.mxu0 0
        %805 = vmatpush1.bf16.msra.mxu0 0
        %806 = vmatprep.subr.bf16.mxu0 0
        %807 = vmatpush1.bf16.msra.mxu0 0
        %808 = vmatprep.subr.bf16.mxu0 0
        %809 = vmatpush1.bf16.msra.mxu0 0
        %810 = vmatprep.subr.bf16.mxu0 0
        %811 = vmatpush1.bf16.msra.mxu0 0
        %812 = vmatprep.subr.bf16.mxu0 0
        %813 = vmatpush1.bf16.msra.mxu0 0
        %814 = vmatprep.subr.bf16.mxu0 0
        %815 = vmatpush1.bf16.msra.mxu0 0
        %816 = vmatprep.mubr.bf16.mxu0 0
        %817 = vmatmul.mubr.bf16.gmra.mrb[0].mxu0 %v779
        %v818 = vpop.f32.mrb[0].mxu0
        %v819 = vadd.f32 0.0, %v818
        %v820 = vpop.f32.mrb[0].mxu0
        %v821 = vpop.f32.mrb[0].mxu0
        %v822 = vpop.f32.mrb[0].mxu0
        %823 = vdwg.mxu0
        %824 = vset.pattern.permute.xlu0 25
        %825 = vperm.xlu0 %824, %v365
        %v826 = vpop.permute.xlu0 %825
        %v829 = vunpack.c.l.s4 839922192
        %v830 = vunpack.c.0.s8 %v829
        %v831 = vlaneseq
        %v832 = vshrl.u32 %v831, 7
        %v833 = vsub.s32 %v830, %v832
        %v834 = vrot.slane %v826, %v833
        %835 = vset.pattern.permute.xlu0 25
        %836 = vperm.xlu0 %835, %v529
        %v837 = vpop.permute.xlu0 %836
        %v840 = vunpack.c.l.s4 839922192
        %v841 = vunpack.c.0.s8 %v840
        %v842 = vlaneseq
        %v843 = vshrl.u32 %v842, 7
        %v844 = vsub.s32 %v841, %v843
        %v845 = vrot.slane %v837, %v844
        %846 = vset.pattern.permute.xlu0 25
        %847 = vperm.xlu0 %846, %v366
        %v848 = vpop.permute.xlu0 %847
        %v851 = vunpack.c.l.s4 839922192
        %v852 = vunpack.c.0.s8 %v851
        %v853 = vlaneseq
        %v854 = vshrl.u32 %v853, 7
        %v855 = vsub.s32 %v852, %v854
        %v856 = vrot.slane %v848, %v855
        %857 = vset.pattern.permute.xlu0 25
        %858 = vperm.xlu0 %857, %v530
        %v859 = vpop.permute.xlu0 %858
        %v862 = vunpack.c.l.s4 839922192
        %v863 = vunpack.c.0.s8 %v862
        %v864 = vlaneseq
        %v865 = vshrl.u32 %v864, 7
        %v866 = vsub.s32 %v863, %v865
        %v867 = vrot.slane %v859, %v866
        %v868 = vsub.f32 %v834, %v578
        %v869 = vsub.f32 %v845, %v582
        %v870 = vsub.f32 %v856, %v586
        %v871 = vsub.f32 %v867, %v590
        %v872 = vmul.f32 %v868, %v868
        %v873 = vmul.f32 %v869, %v869
        %v874 = vmul.f32 %v870, %v870
        %v875 = vmul.f32 %v871, %v871
        %v876 = vsub.f32 0.0, %v872
        %v877 = vsub.f32 0.0, %v873
        %v878 = vsub.f32 0.0, %v874
        %v879 = vsub.f32 0.0, %v875
        %v880 = vmul.f32 %v876, %v603
        %v881 = vmul.f32 %v877, %v603
        %v882 = vmul.f32 %v878, %v603
        %v883 = vmul.f32 %v879, %v603
        %v884 = vmul.f32 %v880, 1.442695
        %v885 = vpow.pop %v884
        %v886 = vmul.f32 %v881, 1.442695
        %v887 = vpow.pop %v886
        %v888 = vmul.f32 %v882, 1.442695
        %v889 = vpow.pop %v888
        %v890 = vmul.f32 %v883, 1.442695
        %v891 = vpow.pop %v890
        %v892 = vmul.f32 %v885, %v619
        %v893 = vmul.f32 %v887, %v623
        %v894 = vmul.f32 %v889, %v627
        %v895 = vmul.f32 %v891, %v631
        %v896 = vpack.c.bf16 %v892, %v892
        %v897 = vpack.c.bf16 %v893, %v893
        %v898 = vpack.c.bf16 %v894, %v894
        %v899 = vpack.c.bf16 %v895, %v895
        %v901 = vsel %vm388, %v896, 0
        %903 = vmatprep.subr.bf16.mxu0 0
        %904 = vmatpush1.bf16.msra.mxu0 %v644
        %905 = vmatprep.subr.bf16.mxu0 0
        %906 = vmatpush1.bf16.msra.mxu0 0
        %907 = vmatprep.subr.bf16.mxu0 0
        %908 = vmatpush1.bf16.msra.mxu0 0
        %909 = vmatprep.subr.bf16.mxu0 0
        %910 = vmatpush1.bf16.msra.mxu0 0
        %911 = vmatprep.subr.bf16.mxu0 0
        %912 = vmatpush1.bf16.msra.mxu0 0
        %913 = vmatprep.subr.bf16.mxu0 0
        %914 = vmatpush1.bf16.msra.mxu0 0
        %915 = vmatprep.subr.bf16.mxu0 0
        %916 = vmatpush1.bf16.msra.mxu0 0
        %917 = vmatprep.subr.bf16.mxu0 0
        %918 = vmatpush1.bf16.msra.mxu0 0
        %919 = vmatprep.subr.bf16.mxu0 0
        %920 = vmatpush1.bf16.msra.mxu0 0
        %921 = vmatprep.subr.bf16.mxu0 0
        %922 = vmatpush1.bf16.msra.mxu0 0
        %923 = vmatprep.subr.bf16.mxu0 0
        %924 = vmatpush1.bf16.msra.mxu0 0
        %925 = vmatprep.subr.bf16.mxu0 0
        %926 = vmatpush1.bf16.msra.mxu0 0
        %927 = vmatprep.subr.bf16.mxu0 0
        %928 = vmatpush1.bf16.msra.mxu0 0
        %929 = vmatprep.subr.bf16.mxu0 0
        %930 = vmatpush1.bf16.msra.mxu0 0
        %931 = vmatprep.subr.bf16.mxu0 0
        %932 = vmatpush1.bf16.msra.mxu0 0
        %933 = vmatprep.subr.bf16.mxu0 0
        %934 = vmatpush1.bf16.msra.mxu0 0
        %935 = vmatprep.mubr.bf16.mxu0 0
        %936 = vmatmul.mubr.bf16.gmra.mrb[0].mxu0 %v901
        %v937 = vpop.f32.mrb[0].mxu0
        %v938 = vadd.f32 0.0, %v937
        %v939 = vpop.f32.mrb[0].mxu0
        %v940 = vpop.f32.mrb[0].mxu0
        %v941 = vpop.f32.mrb[0].mxu0
        %942 = vdwg.mxu0
        %v944 = vsel %vm388, %v897, 0
        %946 = vmatprep.subr.bf16.mxu0 0
        %947 = vmatpush1.bf16.msra.mxu0 %v690
        %948 = vmatprep.subr.bf16.mxu0 0
        %949 = vmatpush1.bf16.msra.mxu0 0
        %950 = vmatprep.subr.bf16.mxu0 0
        %951 = vmatpush1.bf16.msra.mxu0 0
        %952 = vmatprep.subr.bf16.mxu0 0
        %953 = vmatpush1.bf16.msra.mxu0 0
        %954 = vmatprep.subr.bf16.mxu0 0
        %955 = vmatpush1.bf16.msra.mxu0 0
        %956 = vmatprep.subr.bf16.mxu0 0
        %957 = vmatpush1.bf16.msra.mxu0 0
        %958 = vmatprep.subr.bf16.mxu0 0
        %959 = vmatpush1.bf16.msra.mxu0 0
        %960 = vmatprep.subr.bf16.mxu0 0
        %961 = vmatpush1.bf16.msra.mxu0 0
        %962 = vmatprep.subr.bf16.mxu0 0
        %963 = vmatpush1.bf16.msra.mxu0 0
        %964 = vmatprep.subr.bf16.mxu0 0
        %965 = vmatpush1.bf16.msra.mxu0 0
        %966 = vmatprep.subr.bf16.mxu0 0
        %967 = vmatpush1.bf16.msra.mxu0 0
        %968 = vmatprep.subr.bf16.mxu0 0
        %969 = vmatpush1.bf16.msra.mxu0 0
        %970 = vmatprep.subr.bf16.mxu0 0
        %971 = vmatpush1.bf16.msra.mxu0 0
        %972 = vmatprep.subr.bf16.mxu0 0
        %973 = vmatpush1.bf16.msra.mxu0 0
        %974 = vmatprep.subr.bf16.mxu0 0
        %975 = vmatpush1.bf16.msra.mxu0 0
        %976 = vmatprep.subr.bf16.mxu0 0
        %977 = vmatpush1.bf16.msra.mxu0 0
        %978 = vmatprep.mubr.bf16.mxu0 0
        %979 = vmatmul.mubr.bf16.gmra.mrb[0].mxu0 %v944
        %v980 = vpop.f32.mrb[0].mxu0
        %v981 = vadd.f32 0.0, %v980
        %v982 = vpop.f32.mrb[0].mxu0
        %v983 = vpop.f32.mrb[0].mxu0
        %v984 = vpop.f32.mrb[0].mxu0
        %985 = vdwg.mxu0
        %v987 = vsel %vm388, %v898, 0
        %989 = vmatprep.subr.bf16.mxu0 0
        %990 = vmatpush1.bf16.msra.mxu0 %v736
        %991 = vmatprep.subr.bf16.mxu0 0
        %992 = vmatpush1.bf16.msra.mxu0 0
        %993 = vmatprep.subr.bf16.mxu0 0
        %994 = vmatpush1.bf16.msra.mxu0 0
        %995 = vmatprep.subr.bf16.mxu0 0
        %996 = vmatpush1.bf16.msra.mxu0 0
        %997 = vmatprep.subr.bf16.mxu0 0
        %998 = vmatpush1.bf16.msra.mxu0 0
        %999 = vmatprep.subr.bf16.mxu0 0
        %1000 = vmatpush1.bf16.msra.mxu0 0
        %1001 = vmatprep.subr.bf16.mxu0 0
        %1002 = vmatpush1.bf16.msra.mxu0 0
        %1003 = vmatprep.subr.bf16.mxu0 0
        %1004 = vmatpush1.bf16.msra.mxu0 0
        %1005 = vmatprep.subr.bf16.mxu0 0
        %1006 = vmatpush1.bf16.msra.mxu0 0
        %1007 = vmatprep.subr.bf16.mxu0 0
        %1008 = vmatpush1.bf16.msra.mxu0 0
        %1009 = vmatprep.subr.bf16.mxu0 0
        %1010 = vmatpush1.bf16.msra.mxu0 0
        %1011 = vmatprep.subr.bf16.mxu0 0
        %1012 = vmatpush1.bf16.msra.mxu0 0
        %1013 = vmatprep.subr.bf16.mxu0 0
        %1014 = vmatpush1.bf16.msra.mxu0 0
        %1015 = vmatprep.subr.bf16.mxu0 0
        %1016 = vmatpush1.bf16.msra.mxu0 0
        %1017 = vmatprep.subr.bf16.mxu0 0
        %1018 = vmatpush1.bf16.msra.mxu0 0
        %1019 = vmatprep.subr.bf16.mxu0 0
        %1020 = vmatpush1.bf16.msra.mxu0 0
        %1021 = vmatprep.mubr.bf16.mxu0 0
        %1022 = vmatmul.mubr.bf16.gmra.mrb[0].mxu0 %v987
        %v1023 = vpop.f32.mrb[0].mxu0
        %v1024 = vadd.f32 0.0, %v1023
        %v1025 = vpop.f32.mrb[0].mxu0
        %v1026 = vpop.f32.mrb[0].mxu0
        %v1027 = vpop.f32.mrb[0].mxu0
        %1028 = vdwg.mxu0
        %v1030 = vsel %vm388, %v899, 0
        %1032 = vmatprep.subr.bf16.mxu0 0
        %1033 = vmatpush1.bf16.msra.mxu0 %v782
        %1034 = vmatprep.subr.bf16.mxu0 0
        %1035 = vmatpush1.bf16.msra.mxu0 0
        %1036 = vmatprep.subr.bf16.mxu0 0
        %1037 = vmatpush1.bf16.msra.mxu0 0
        %1038 = vmatprep.subr.bf16.mxu0 0
        %1039 = vmatpush1.bf16.msra.mxu0 0
        %1040 = vmatprep.subr.bf16.mxu0 0
        %1041 = vmatpush1.bf16.msra.mxu0 0
        %1042 = vmatprep.subr.bf16.mxu0 0
        %1043 = vmatpush1.bf16.msra.mxu0 0
        %1044 = vmatprep.subr.bf16.mxu0 0
        %1045 = vmatpush1.bf16.msra.mxu0 0
        %1046 = vmatprep.subr.bf16.mxu0 0
        %1047 = vmatpush1.bf16.msra.mxu0 0
        %1048 = vmatprep.subr.bf16.mxu0 0
        %1049 = vmatpush1.bf16.msra.mxu0 0
        %1050 = vmatprep.subr.bf16.mxu0 0
        %1051 = vmatpush1.bf16.msra.mxu0 0
        %1052 = vmatprep.subr.bf16.mxu0 0
        %1053 = vmatpush1.bf16.msra.mxu0 0
        %1054 = vmatprep.subr.bf16.mxu0 0
        %1055 = vmatpush1.bf16.msra.mxu0 0
        %1056 = vmatprep.subr.bf16.mxu0 0
        %1057 = vmatpush1.bf16.msra.mxu0 0
        %1058 = vmatprep.subr.bf16.mxu0 0
        %1059 = vmatpush1.bf16.msra.mxu0 0
        %1060 = vmatprep.subr.bf16.mxu0 0
        %1061 = vmatpush1.bf16.msra.mxu0 0
        %1062 = vmatprep.subr.bf16.mxu0 0
        %1063 = vmatpush1.bf16.msra.mxu0 0
        %1064 = vmatprep.mubr.bf16.mxu0 0
        %1065 = vmatmul.mubr.bf16.gmra.mrb[0].mxu0 %v1030
        %v1066 = vpop.f32.mrb[0].mxu0
        %v1067 = vadd.f32 0.0, %v1066
        %v1068 = vpop.f32.mrb[0].mxu0
        %v1069 = vpop.f32.mrb[0].mxu0
        %v1070 = vpop.f32.mrb[0].mxu0
        %1071 = vdwg.mxu0
        %1072 = vset.pattern.permute.xlu0 41
        %1073 = vperm.xlu0 %1072, %v365
        %v1074 = vpop.permute.xlu0 %1073
        %v1077 = vunpack.c.l.s4 839922192
        %v1078 = vunpack.c.0.s8 %v1077
        %v1079 = vlaneseq
        %v1080 = vshrl.u32 %v1079, 7
        %v1081 = vsub.s32 %v1078, %v1080
        %v1082 = vrot.slane %v1074, %v1081
        %1083 = vset.pattern.permute.xlu0 41
        %1084 = vperm.xlu0 %1083, %v529
        %v1085 = vpop.permute.xlu0 %1084
        %v1088 = vunpack.c.l.s4 839922192
        %v1089 = vunpack.c.0.s8 %v1088
        %v1090 = vlaneseq
        %v1091 = vshrl.u32 %v1090, 7
        %v1092 = vsub.s32 %v1089, %v1091
        %v1093 = vrot.slane %v1085, %v1092
        %1094 = vset.pattern.permute.xlu0 41
        %1095 = vperm.xlu0 %1094, %v366
        %v1096 = vpop.permute.xlu0 %1095
        %v1099 = vunpack.c.l.s4 839922192
        %v1100 = vunpack.c.0.s8 %v1099
        %v1101 = vlaneseq
        %v1102 = vshrl.u32 %v1101, 7
        %v1103 = vsub.s32 %v1100, %v1102
        %v1104 = vrot.slane %v1096, %v1103
        %1105 = vset.pattern.permute.xlu0 41
        %1106 = vperm.xlu0 %1105, %v530
        %v1107 = vpop.permute.xlu0 %1106
        %v1110 = vunpack.c.l.s4 839922192
        %v1111 = vunpack.c.0.s8 %v1110
        %v1112 = vlaneseq
        %v1113 = vshrl.u32 %v1112, 7
        %v1114 = vsub.s32 %v1111, %v1113
        %v1115 = vrot.slane %v1107, %v1114
        %v1116 = vsub.f32 %v1082, %v578
        %v1117 = vsub.f32 %v1093, %v582
        %v1118 = vsub.f32 %v1104, %v586
        %v1119 = vsub.f32 %v1115, %v590
        %v1120 = vmul.f32 %v1116, %v1116
        %v1121 = vmul.f32 %v1117, %v1117
        %v1122 = vmul.f32 %v1118, %v1118
        %v1123 = vmul.f32 %v1119, %v1119
        %v1124 = vsub.f32 0.0, %v1120
        %v1125 = vsub.f32 0.0, %v1121
        %v1126 = vsub.f32 0.0, %v1122
        %v1127 = vsub.f32 0.0, %v1123
        %v1128 = vmul.f32 %v1124, %v603
        %v1129 = vmul.f32 %v1125, %v603
        %v1130 = vmul.f32 %v1126, %v603
        %v1131 = vmul.f32 %v1127, %v603
        %v1132 = vmul.f32 %v1128, 1.442695
        %v1133 = vpow.pop %v1132
        %v1134 = vmul.f32 %v1129, 1.442695
        %v1135 = vpow.pop %v1134
        %v1136 = vmul.f32 %v1130, 1.442695
        %v1137 = vpow.pop %v1136
        %v1138 = vmul.f32 %v1131, 1.442695
        %v1139 = vpow.pop %v1138
        %v1140 = vmul.f32 %v1133, %v619
        %v1141 = vmul.f32 %v1135, %v623
        %v1142 = vmul.f32 %v1137, %v627
        %v1143 = vmul.f32 %v1139, %v631
        %v1144 = vpack.c.bf16 %v1140, %v1140
        %v1145 = vpack.c.bf16 %v1141, %v1141
        %v1146 = vpack.c.bf16 %v1142, %v1142
        %v1147 = vpack.c.bf16 %v1143, %v1143
        %v1149 = vsel %vm388, %v1144, 0
        %1151 = vmatprep.subr.bf16.mxu0 0
        %1152 = vmatpush1.bf16.msra.mxu0 %v644
        %1153 = vmatprep.subr.bf16.mxu0 0
        %1154 = vmatpush1.bf16.msra.mxu0 0
        %1155 = vmatprep.subr.bf16.mxu0 0
        %1156 = vmatpush1.bf16.msra.mxu0 0
        %1157 = vmatprep.subr.bf16.mxu0 0
        %1158 = vmatpush1.bf16.msra.mxu0 0
        %1159 = vmatprep.subr.bf16.mxu0 0
        %1160 = vmatpush1.bf16.msra.mxu0 0
        %1161 = vmatprep.subr.bf16.mxu0 0
        %1162 = vmatpush1.bf16.msra.mxu0 0
        %1163 = vmatprep.subr.bf16.mxu0 0
        %1164 = vmatpush1.bf16.msra.mxu0 0
        %1165 = vmatprep.subr.bf16.mxu0 0
        %1166 = vmatpush1.bf16.msra.mxu0 0
        %1167 = vmatprep.subr.bf16.mxu0 0
        %1168 = vmatpush1.bf16.msra.mxu0 0
        %1169 = vmatprep.subr.bf16.mxu0 0
        %1170 = vmatpush1.bf16.msra.mxu0 0
        %1171 = vmatprep.subr.bf16.mxu0 0
        %1172 = vmatpush1.bf16.msra.mxu0 0
        %1173 = vmatprep.subr.bf16.mxu0 0
        %1174 = vmatpush1.bf16.msra.mxu0 0
        %1175 = vmatprep.subr.bf16.mxu0 0
        %1176 = vmatpush1.bf16.msra.mxu0 0
        %1177 = vmatprep.subr.bf16.mxu0 0
        %1178 = vmatpush1.bf16.msra.mxu0 0
        %1179 = vmatprep.subr.bf16.mxu0 0
        %1180 = vmatpush1.bf16.msra.mxu0 0
        %1181 = vmatprep.subr.bf16.mxu0 0
        %1182 = vmatpush1.bf16.msra.mxu0 0
        %1183 = vmatprep.mubr.bf16.mxu0 0
        %1184 = vmatmul.mubr.bf16.gmra.mrb[0].mxu0 %v1149
        %v1185 = vpop.f32.mrb[0].mxu0
        %v1186 = vadd.f32 0.0, %v1185
        %v1187 = vpop.f32.mrb[0].mxu0
        %v1188 = vpop.f32.mrb[0].mxu0
        %v1189 = vpop.f32.mrb[0].mxu0
        %1190 = vdwg.mxu0
        %v1192 = vsel %vm388, %v1145, 0
        %1194 = vmatprep.subr.bf16.mxu0 0
        %1195 = vmatpush1.bf16.msra.mxu0 %v690
        %1196 = vmatprep.subr.bf16.mxu0 0
        %1197 = vmatpush1.bf16.msra.mxu0 0
        %1198 = vmatprep.subr.bf16.mxu0 0
        %1199 = vmatpush1.bf16.msra.mxu0 0
        %1200 = vmatprep.subr.bf16.mxu0 0
        %1201 = vmatpush1.bf16.msra.mxu0 0
        %1202 = vmatprep.subr.bf16.mxu0 0
        %1203 = vmatpush1.bf16.msra.mxu0 0
        %1204 = vmatprep.subr.bf16.mxu0 0
        %1205 = vmatpush1.bf16.msra.mxu0 0
        %1206 = vmatprep.subr.bf16.mxu0 0
        %1207 = vmatpush1.bf16.msra.mxu0 0
        %1208 = vmatprep.subr.bf16.mxu0 0
        %1209 = vmatpush1.bf16.msra.mxu0 0
        %1210 = vmatprep.subr.bf16.mxu0 0
        %1211 = vmatpush1.bf16.msra.mxu0 0
        %1212 = vmatprep.subr.bf16.mxu0 0
        %1213 = vmatpush1.bf16.msra.mxu0 0
        %1214 = vmatprep.subr.bf16.mxu0 0
        %1215 = vmatpush1.bf16.msra.mxu0 0
        %1216 = vmatprep.subr.bf16.mxu0 0
        %1217 = vmatpush1.bf16.msra.mxu0 0
        %1218 = vmatprep.subr.bf16.mxu0 0
        %1219 = vmatpush1.bf16.msra.mxu0 0
        %1220 = vmatprep.subr.bf16.mxu0 0
        %1221 = vmatpush1.bf16.msra.mxu0 0
        %1222 = vmatprep.subr.bf16.mxu0 0
        %1223 = vmatpush1.bf16.msra.mxu0 0
        %1224 = vmatprep.subr.bf16.mxu0 0
        %1225 = vmatpush1.bf16.msra.mxu0 0
        %1226 = vmatprep.mubr.bf16.mxu0 0
        %1227 = vmatmul.mubr.bf16.gmra.mrb[0].mxu0 %v1192
        %v1228 = vpop.f32.mrb[0].mxu0
        %v1229 = vadd.f32 0.0, %v1228
        %v1230 = vpop.f32.mrb[0].mxu0
        %v1231 = vpop.f32.mrb[0].mxu0
        %v1232 = vpop.f32.mrb[0].mxu0
        %1233 = vdwg.mxu0
        %v1235 = vsel %vm388, %v1146, 0
        %1237 = vmatprep.subr.bf16.mxu0 0
        %1238 = vmatpush1.bf16.msra.mxu0 %v736
        %1239 = vmatprep.subr.bf16.mxu0 0
        %1240 = vmatpush1.bf16.msra.mxu0 0
        %1241 = vmatprep.subr.bf16.mxu0 0
        %1242 = vmatpush1.bf16.msra.mxu0 0
        %1243 = vmatprep.subr.bf16.mxu0 0
        %1244 = vmatpush1.bf16.msra.mxu0 0
        %1245 = vmatprep.subr.bf16.mxu0 0
        %1246 = vmatpush1.bf16.msra.mxu0 0
        %1247 = vmatprep.subr.bf16.mxu0 0
        %1248 = vmatpush1.bf16.msra.mxu0 0
        %1249 = vmatprep.subr.bf16.mxu0 0
        %1250 = vmatpush1.bf16.msra.mxu0 0
        %1251 = vmatprep.subr.bf16.mxu0 0
        %1252 = vmatpush1.bf16.msra.mxu0 0
        %1253 = vmatprep.subr.bf16.mxu0 0
        %1254 = vmatpush1.bf16.msra.mxu0 0
        %1255 = vmatprep.subr.bf16.mxu0 0
        %1256 = vmatpush1.bf16.msra.mxu0 0
        %1257 = vmatprep.subr.bf16.mxu0 0
        %1258 = vmatpush1.bf16.msra.mxu0 0
        %1259 = vmatprep.subr.bf16.mxu0 0
        %1260 = vmatpush1.bf16.msra.mxu0 0
        %1261 = vmatprep.subr.bf16.mxu0 0
        %1262 = vmatpush1.bf16.msra.mxu0 0
        %1263 = vmatprep.subr.bf16.mxu0 0
        %1264 = vmatpush1.bf16.msra.mxu0 0
        %1265 = vmatprep.subr.bf16.mxu0 0
        %1266 = vmatpush1.bf16.msra.mxu0 0
        %1267 = vmatprep.subr.bf16.mxu0 0
        %1268 = vmatpush1.bf16.msra.mxu0 0
        %1269 = vmatprep.mubr.bf16.mxu0 0
        %1270 = vmatmul.mubr.bf16.gmra.mrb[0].mxu0 %v1235
        %v1271 = vpop.f32.mrb[0].mxu0
        %v1272 = vadd.f32 0.0, %v1271
        %v1273 = vpop.f32.mrb[0].mxu0
        %v1274 = vpop.f32.mrb[0].mxu0
        %v1275 = vpop.f32.mrb[0].mxu0
        %1276 = vdwg.mxu0
        %v1278 = vsel %vm388, %v1147, 0
        %1280 = vmatprep.subr.bf16.mxu0 0
        %1281 = vmatpush1.bf16.msra.mxu0 %v782
        %1282 = vmatprep.subr.bf16.mxu0 0
        %1283 = vmatpush1.bf16.msra.mxu0 0
        %1284 = vmatprep.subr.bf16.mxu0 0
        %1285 = vmatpush1.bf16.msra.mxu0 0
        %1286 = vmatprep.subr.bf16.mxu0 0
        %1287 = vmatpush1.bf16.msra.mxu0 0
        %1288 = vmatprep.subr.bf16.mxu0 0
        %1289 = vmatpush1.bf16.msra.mxu0 0
        %1290 = vmatprep.subr.bf16.mxu0 0
        %1291 = vmatpush1.bf16.msra.mxu0 0
        %1292 = vmatprep.subr.bf16.mxu0 0
        %1293 = vmatpush1.bf16.msra.mxu0 0
        %1294 = vmatprep.subr.bf16.mxu0 0
        %1295 = vmatpush1.bf16.msra.mxu0 0
        %1296 = vmatprep.subr.bf16.mxu0 0
        %1297 = vmatpush1.bf16.msra.mxu0 0
        %1298 = vmatprep.subr.bf16.mxu0 0
        %1299 = vmatpush1.bf16.msra.mxu0 0
        %1300 = vmatprep.subr.bf16.mxu0 0
        %1301 = vmatpush1.bf16.msra.mxu0 0
        %1302 = vmatprep.subr.bf16.mxu0 0
        %1303 = vmatpush1.bf16.msra.mxu0 0
        %1304 = vmatprep.subr.bf16.mxu0 0
        %1305 = vmatpush1.bf16.msra.mxu0 0
        %1306 = vmatprep.subr.bf16.mxu0 0
        %1307 = vmatpush1.bf16.msra.mxu0 0
        %1308 = vmatprep.subr.bf16.mxu0 0
        %1309 = vmatpush1.bf16.msra.mxu0 0
        %1310 = vmatprep.subr.bf16.mxu0 0
        %1311 = vmatpush1.bf16.msra.mxu0 0
        %1312 = vmatprep.mubr.bf16.mxu0 0
        %1313 = vmatmul.mubr.bf16.gmra.mrb[0].mxu0 %v1278
        %v1314 = vpop.f32.mrb[0].mxu0
        %v1315 = vadd.f32 0.0, %v1314
        %v1316 = vpop.f32.mrb[0].mxu0
        %v1317 = vpop.f32.mrb[0].mxu0
        %v1318 = vpop.f32.mrb[0].mxu0
        %1319 = vdwg.mxu0
        %1320 = vset.pattern.permute.xlu0 57
        %1321 = vperm.xlu0 %1320, %v365
        %v1322 = vpop.permute.xlu0 %1321
        %v1325 = vunpack.c.l.s4 839922192
        %v1326 = vunpack.c.0.s8 %v1325
        %v1327 = vlaneseq
        %v1328 = vshrl.u32 %v1327, 7
        %v1329 = vsub.s32 %v1326, %v1328
        %v1330 = vrot.slane %v1322, %v1329
        %1331 = vset.pattern.permute.xlu0 57
        %1332 = vperm.xlu0 %1331, %v529
        %v1333 = vpop.permute.xlu0 %1332
        %v1336 = vunpack.c.l.s4 839922192
        %v1337 = vunpack.c.0.s8 %v1336
        %v1338 = vlaneseq
        %v1339 = vshrl.u32 %v1338, 7
        %v1340 = vsub.s32 %v1337, %v1339
        %v1341 = vrot.slane %v1333, %v1340
        %1342 = vset.pattern.permute.xlu0 57
        %1343 = vperm.xlu0 %1342, %v366
        %v1344 = vpop.permute.xlu0 %1343
        %v1347 = vunpack.c.l.s4 839922192
        %v1348 = vunpack.c.0.s8 %v1347
        %v1349 = vlaneseq
        %v1350 = vshrl.u32 %v1349, 7
        %v1351 = vsub.s32 %v1348, %v1350
        %v1352 = vrot.slane %v1344, %v1351
        %1353 = vset.pattern.permute.xlu0 57
        %1354 = vperm.xlu0 %1353, %v530
        %v1355 = vpop.permute.xlu0 %1354
        %v1358 = vunpack.c.l.s4 839922192
        %v1359 = vunpack.c.0.s8 %v1358
        %v1360 = vlaneseq
        %v1361 = vshrl.u32 %v1360, 7
        %v1362 = vsub.s32 %v1359, %v1361
        %v1363 = vrot.slane %v1355, %v1362
        %v1364 = vsub.f32 %v1330, %v578
        %v1365 = vsub.f32 %v1341, %v582
        %v1366 = vsub.f32 %v1352, %v586
        %v1367 = vsub.f32 %v1363, %v590
        %v1368 = vmul.f32 %v1364, %v1364
        %v1369 = vmul.f32 %v1365, %v1365
        %v1370 = vmul.f32 %v1366, %v1366
        %v1371 = vmul.f32 %v1367, %v1367
        %v1372 = vsub.f32 0.0, %v1368
        %v1373 = vsub.f32 0.0, %v1369
        %v1374 = vsub.f32 0.0, %v1370
        %v1375 = vsub.f32 0.0, %v1371
        %v1376 = vmul.f32 %v1372, %v603
        %v1377 = vmul.f32 %v1373, %v603
        %v1378 = vmul.f32 %v1374, %v603
        %v1379 = vmul.f32 %v1375, %v603
        %v1380 = vmul.f32 %v1376, 1.442695
        %v1381 = vpow.pop %v1380
        %v1382 = vmul.f32 %v1377, 1.442695
        %v1383 = vpow.pop %v1382
        %v1384 = vmul.f32 %v1378, 1.442695
        %v1385 = vpow.pop %v1384
        %v1386 = vmul.f32 %v1379, 1.442695
        %v1387 = vpow.pop %v1386
        %v1388 = vmul.f32 %v1381, %v619
        %v1389 = vmul.f32 %v1383, %v623
        %v1390 = vmul.f32 %v1385, %v627
        %v1391 = vmul.f32 %v1387, %v631
        %v1392 = vpack.c.bf16 %v1388, %v1388
        %v1393 = vpack.c.bf16 %v1389, %v1389
        %v1394 = vpack.c.bf16 %v1390, %v1390
        %v1395 = vpack.c.bf16 %v1391, %v1391
        %v1397 = vsel %vm388, %v1392, 0
        %1399 = vmatprep.subr.bf16.mxu0 0
        %1400 = vmatpush1.bf16.msra.mxu0 %v644
        %1401 = vmatprep.subr.bf16.mxu0 0
        %1402 = vmatpush1.bf16.msra.mxu0 0
        %1403 = vmatprep.subr.bf16.mxu0 0
        %1404 = vmatpush1.bf16.msra.mxu0 0
        %1405 = vmatprep.subr.bf16.mxu0 0
        %1406 = vmatpush1.bf16.msra.mxu0 0
        %1407 = vmatprep.subr.bf16.mxu0 0
        %1408 = vmatpush1.bf16.msra.mxu0 0
        %1409 = vmatprep.subr.bf16.mxu0 0
        %1410 = vmatpush1.bf16.msra.mxu0 0
        %1411 = vmatprep.subr.bf16.mxu0 0
        %1412 = vmatpush1.bf16.msra.mxu0 0
        %1413 = vmatprep.subr.bf16.mxu0 0
        %1414 = vmatpush1.bf16.msra.mxu0 0
        %1415 = vmatprep.subr.bf16.mxu0 0
        %1416 = vmatpush1.bf16.msra.mxu0 0
        %1417 = vmatprep.subr.bf16.mxu0 0
        %1418 = vmatpush1.bf16.msra.mxu0 0
        %1419 = vmatprep.subr.bf16.mxu0 0
        %1420 = vmatpush1.bf16.msra.mxu0 0
        %1421 = vmatprep.subr.bf16.mxu0 0
        %1422 = vmatpush1.bf16.msra.mxu0 0
        %1423 = vmatprep.subr.bf16.mxu0 0
        %1424 = vmatpush1.bf16.msra.mxu0 0
        %1425 = vmatprep.subr.bf16.mxu0 0
        %1426 = vmatpush1.bf16.msra.mxu0 0
        %1427 = vmatprep.subr.bf16.mxu0 0
        %1428 = vmatpush1.bf16.msra.mxu0 0
        %1429 = vmatprep.subr.bf16.mxu0 0
        %1430 = vmatpush1.bf16.msra.mxu0 0
        %1431 = vmatprep.mubr.bf16.mxu0 0
        %1432 = vmatmul.mubr.bf16.gmra.mrb[0].mxu0 %v1397
        %v1433 = vpop.f32.mrb[0].mxu0
        %v1434 = vadd.f32 0.0, %v1433
        %v1435 = vpop.f32.mrb[0].mxu0
        %v1436 = vpop.f32.mrb[0].mxu0
        %v1437 = vpop.f32.mrb[0].mxu0
        %1438 = vdwg.mxu0
        %v1440 = vsel %vm388, %v1393, 0
        %1442 = vmatprep.subr.bf16.mxu0 0
        %1443 = vmatpush1.bf16.msra.mxu0 %v690
        %1444 = vmatprep.subr.bf16.mxu0 0
        %1445 = vmatpush1.bf16.msra.mxu0 0
        %1446 = vmatprep.subr.bf16.mxu0 0
        %1447 = vmatpush1.bf16.msra.mxu0 0
        %1448 = vmatprep.subr.bf16.mxu0 0
        %1449 = vmatpush1.bf16.msra.mxu0 0
        %1450 = vmatprep.subr.bf16.mxu0 0
        %1451 = vmatpush1.bf16.msra.mxu0 0
        %1452 = vmatprep.subr.bf16.mxu0 0
        %1453 = vmatpush1.bf16.msra.mxu0 0
        %1454 = vmatprep.subr.bf16.mxu0 0
        %1455 = vmatpush1.bf16.msra.mxu0 0
        %1456 = vmatprep.subr.bf16.mxu0 0
        %1457 = vmatpush1.bf16.msra.mxu0 0
        %1458 = vmatprep.subr.bf16.mxu0 0
        %1459 = vmatpush1.bf16.msra.mxu0 0
        %1460 = vmatprep.subr.bf16.mxu0 0
        %1461 = vmatpush1.bf16.msra.mxu0 0
        %1462 = vmatprep.subr.bf16.mxu0 0
        %1463 = vmatpush1.bf16.msra.mxu0 0
        %1464 = vmatprep.subr.bf16.mxu0 0
        %1465 = vmatpush1.bf16.msra.mxu0 0
        %1466 = vmatprep.subr.bf16.mxu0 0
        %1467 = vmatpush1.bf16.msra.mxu0 0
        %1468 = vmatprep.subr.bf16.mxu0 0
        %1469 = vmatpush1.bf16.msra.mxu0 0
        %1470 = vmatprep.subr.bf16.mxu0 0
        %1471 = vmatpush1.bf16.msra.mxu0 0
        %1472 = vmatprep.subr.bf16.mxu0 0
        %1473 = vmatpush1.bf16.msra.mxu0 0
        %1474 = vmatprep.mubr.bf16.mxu0 0
        %1475 = vmatmul.mubr.bf16.gmra.mrb[0].mxu0 %v1440
        %v1476 = vpop.f32.mrb[0].mxu0
        %v1477 = vadd.f32 0.0, %v1476
        %v1478 = vpop.f32.mrb[0].mxu0
        %v1479 = vpop.f32.mrb[0].mxu0
        %v1480 = vpop.f32.mrb[0].mxu0
        %1481 = vdwg.mxu0
        %v1483 = vsel %vm388, %v1394, 0
        %1485 = vmatprep.subr.bf16.mxu0 0
        %1486 = vmatpush1.bf16.msra.mxu0 %v736
        %1487 = vmatprep.subr.bf16.mxu0 0
        %1488 = vmatpush1.bf16.msra.mxu0 0
        %1489 = vmatprep.subr.bf16.mxu0 0
        %1490 = vmatpush1.bf16.msra.mxu0 0
        %1491 = vmatprep.subr.bf16.mxu0 0
        %1492 = vmatpush1.bf16.msra.mxu0 0
        %1493 = vmatprep.subr.bf16.mxu0 0
        %1494 = vmatpush1.bf16.msra.mxu0 0
        %1495 = vmatprep.subr.bf16.mxu0 0
        %1496 = vmatpush1.bf16.msra.mxu0 0
        %1497 = vmatprep.subr.bf16.mxu0 0
        %1498 = vmatpush1.bf16.msra.mxu0 0
        %1499 = vmatprep.subr.bf16.mxu0 0
        %1500 = vmatpush1.bf16.msra.mxu0 0
        %1501 = vmatprep.subr.bf16.mxu0 0
        %1502 = vmatpush1.bf16.msra.mxu0 0
        %1503 = vmatprep.subr.bf16.mxu0 0
        %1504 = vmatpush1.bf16.msra.mxu0 0
        %1505 = vmatprep.subr.bf16.mxu0 0
        %1506 = vmatpush1.bf16.msra.mxu0 0
        %1507 = vmatprep.subr.bf16.mxu0 0
        %1508 = vmatpush1.bf16.msra.mxu0 0
        %1509 = vmatprep.subr.bf16.mxu0 0
        %1510 = vmatpush1.bf16.msra.mxu0 0
        %1511 = vmatprep.subr.bf16.mxu0 0
        %1512 = vmatpush1.bf16.msra.mxu0 0
        %1513 = vmatprep.subr.bf16.mxu0 0
        %1514 = vmatpush1.bf16.msra.mxu0 0
        %1515 = vmatprep.subr.bf16.mxu0 0
        %1516 = vmatpush1.bf16.msra.mxu0 0
        %1517 = vmatprep.mubr.bf16.mxu0 0
        %1518 = vmatmul.mubr.bf16.gmra.mrb[0].mxu0 %v1483
        %v1519 = vpop.f32.mrb[0].mxu0
        %v1520 = vadd.f32 0.0, %v1519
        %v1521 = vpop.f32.mrb[0].mxu0
        %v1522 = vpop.f32.mrb[0].mxu0
        %v1523 = vpop.f32.mrb[0].mxu0
        %1524 = vdwg.mxu0
        %v1526 = vsel %vm388, %v1395, 0
        %1528 = vmatprep.subr.bf16.mxu0 0
        %1529 = vmatpush1.bf16.msra.mxu0 %v782
        %1530 = vmatprep.subr.bf16.mxu0 0
        %1531 = vmatpush1.bf16.msra.mxu0 0
        %1532 = vmatprep.subr.bf16.mxu0 0
        %1533 = vmatpush1.bf16.msra.mxu0 0
        %1534 = vmatprep.subr.bf16.mxu0 0
        %1535 = vmatpush1.bf16.msra.mxu0 0
        %1536 = vmatprep.subr.bf16.mxu0 0
        %1537 = vmatpush1.bf16.msra.mxu0 0
        %1538 = vmatprep.subr.bf16.mxu0 0
        %1539 = vmatpush1.bf16.msra.mxu0 0
        %1540 = vmatprep.subr.bf16.mxu0 0
        %1541 = vmatpush1.bf16.msra.mxu0 0
        %1542 = vmatprep.subr.bf16.mxu0 0
        %1543 = vmatpush1.bf16.msra.mxu0 0
        %1544 = vmatprep.subr.bf16.mxu0 0
        %1545 = vmatpush1.bf16.msra.mxu0 0
        %1546 = vmatprep.subr.bf16.mxu0 0
        %1547 = vmatpush1.bf16.msra.mxu0 0
        %1548 = vmatprep.subr.bf16.mxu0 0
        %1549 = vmatpush1.bf16.msra.mxu0 0
        %1550 = vmatprep.subr.bf16.mxu0 0
        %1551 = vmatpush1.bf16.msra.mxu0 0
        %1552 = vmatprep.subr.bf16.mxu0 0
        %1553 = vmatpush1.bf16.msra.mxu0 0
        %1554 = vmatprep.subr.bf16.mxu0 0
        %1555 = vmatpush1.bf16.msra.mxu0 0
        %1556 = vmatprep.subr.bf16.mxu0 0
        %1557 = vmatpush1.bf16.msra.mxu0 0
        %1558 = vmatprep.subr.bf16.mxu0 0
        %1559 = vmatpush1.bf16.msra.mxu0 0
        %1560 = vmatprep.mubr.bf16.mxu0 0
        %1561 = vmatmul.mubr.bf16.gmra.mrb[0].mxu0 %v1526
        %v1562 = vpop.f32.mrb[0].mxu0
        %v1563 = vadd.f32 0.0, %v1562
        %v1564 = vpop.f32.mrb[0].mxu0
        %v1565 = vpop.f32.mrb[0].mxu0
        %v1566 = vpop.f32.mrb[0].mxu0
        %1567 = vdwg.mxu0
        %1572 = vrot.lane.b32.xlu0 %v938, 32
        %v1573 = vpop.permute.xlu0 %1572
        %1574 = vrot.lane.b32.xlu0 %v981, 32
        %v1575 = vpop.permute.xlu0 %1574
        %1576 = vrot.lane.b32.xlu0 %v1024, 32
        %v1577 = vpop.permute.xlu0 %1576
        %1578 = vrot.lane.b32.xlu0 %v1067, 32
        %v1579 = vpop.permute.xlu0 %1578
        %1588 = vrot.lane.b32.xlu0 %v1186, 64
        %v1589 = vpop.permute.xlu0 %1588
        %1590 = vrot.lane.b32.xlu0 %v1229, 64
        %v1591 = vpop.permute.xlu0 %1590
        %1592 = vrot.lane.b32.xlu0 %v1272, 64
        %v1593 = vpop.permute.xlu0 %1592
        %1594 = vrot.lane.b32.xlu0 %v1315, 64
        %v1595 = vpop.permute.xlu0 %1594
        %1604 = vrot.lane.b32.xlu0 %v1434, 96
        %v1605 = vpop.permute.xlu0 %1604
        %1606 = vrot.lane.b32.xlu0 %v1477, 96
        %v1607 = vpop.permute.xlu0 %1606
        %1608 = vrot.lane.b32.xlu0 %v1520, 96
        %v1609 = vpop.permute.xlu0 %1608
        %1610 = vrot.lane.b32.xlu0 %v1563, 96
        %v1611 = vpop.permute.xlu0 %1610
        %v1616 = vsel %vm459, %v681, %v1573
        %v1617 = vsel %vm459, %v727, %v1575
        %v1618 = vsel %vm459, %v773, %v1577
        %v1619 = vsel %vm459, %v819, %v1579
        %vm1620 = vcmask 523264
        %v1621 = vsel %vm1620, %v1616, %v1589
        %v1622 = vsel %vm1620, %v1617, %v1591
        %v1623 = vsel %vm1620, %v1618, %v1593
        %v1624 = vsel %vm1620, %v1619, %v1595
        %vm1625 = vcmask 785408
        %v1626 = vsel %vm1625, %v1621, %v1605
        %v1627 = vsel %vm1625, %v1622, %v1607
        %v1628 = vsel %vm1625, %v1623, %v1609
        %v1629 = vsel %vm1625, %v1624, %v1611
        %v1630 = vld [vmem:[%s359 + $0x2] sm:$0x1]
        %v1631 = vld [vmem:[%s359 + $0xa] sm:$0x1]
        %v1632 = vld [vmem:[%s359 + $0x12] sm:$0x1]
        %v1633 = vld [vmem:[%s359 + $0x1a] sm:$0x1]
        %v1634 = vlaneseq
        %v1635 = vand.u32 %v1634, 127
        %vm1636 = vcmp.lt.s32.totalorder %v1635, 0
        %v1637 = vsub.s32 0, %v1635
        %v1638 = vsel %vm1636, %v1637, %v1635
        %v1639 = vshrl.u32 %v1638, 5
        %v1640 = vand.u32 %v1638, 31
        %v1641 = vsub.s32 0, %v1640
        %v1642 = vsel %vm1636, %v1641, %v1640
        %vm1643 = vcmp.ne.s32.totalorder %v1642, 0
        %vm1644 = vcmp.lt.s32.totalorder %v1642, 0
        %vm1645 = vmand %vm1644, %vm1643
        %v1646 = vadd.s32 %v1642, 32
        %v1647 = vsel %vm1645, %v1646, %v1642
        %v1648 = vmul.f32 %v1630, 0.01
        %v1649 = vmul.f32 %v1631, 0.01
        %v1650 = vmul.f32 %v1632, 0.01
        %v1651 = vmul.f32 %v1633, 0.01
        %v1652 = vld [vmem:[%s6 + $0x9] sm:$0x1]
        %1654 = vset.pattern.permute.xlu0 0
        %1655 = vperm.xlu0 %1654, %v1648
        %v1656 = vpop.permute.xlu0 %1655
        %1659 = vset.pattern.permute.xlu0 0
        %1660 = vperm.xlu0 %1659, %v1649
        %v1661 = vpop.permute.xlu0 %1660
        %1664 = vset.pattern.permute.xlu0 0
        %1665 = vperm.xlu0 %1664, %v1650
        %v1666 = vpop.permute.xlu0 %1665
        %1669 = vset.pattern.permute.xlu0 0
        %1670 = vperm.xlu0 %1669, %v1651
        %v1671 = vpop.permute.xlu0 %1670
        %v1673 = vlaneseq
        %v1674 = vshrl.u32 %v1673, 7
        %v1675 = vsub.s32 0, %v1674
        %v1676 = vrot.slane %v1652, %v1675
        %v1677 = vmul.f32 %v1656, %v1676
        %v1678 = vmul.f32 %v1661, %v1676
        %v1679 = vmul.f32 %v1666, %v1676
        %v1680 = vmul.f32 %v1671, %v1676
        %v1681 = vld [vmem:[%s6 + $0xa] sm:$0x1]
        %v1682 = vlaneseq
        %v1683 = vshrl.u32 %v1682, 7
        %v1684 = vsub.s32 0, %v1683
        %v1685 = vrot.slane %v1681, %v1684
        %v1686 = vadd.f32 %v1677, %v1685
        %v1687 = vadd.f32 %v1678, %v1685
        %v1688 = vadd.f32 %v1679, %v1685
        %v1689 = vadd.f32 %v1680, %v1685
        %v1690 = vld [vmem:[%s6 + $0xb] sm:$0x1]
        %1692 = vset.pattern.permute.xlu0 0
        %1693 = vperm.xlu0 %1692, %v1630
        %v1694 = vpop.permute.xlu0 %1693
        %1697 = vset.pattern.permute.xlu0 0
        %1698 = vperm.xlu0 %1697, %v1631
        %v1699 = vpop.permute.xlu0 %1698
        %1702 = vset.pattern.permute.xlu0 0
        %1703 = vperm.xlu0 %1702, %v1632
        %v1704 = vpop.permute.xlu0 %1703
        %1707 = vset.pattern.permute.xlu0 0
        %1708 = vperm.xlu0 %1707, %v1633
        %v1709 = vpop.permute.xlu0 %1708
        %v1711 = vlaneseq
        %v1712 = vshrl.u32 %v1711, 7
        %v1713 = vsub.s32 0, %v1712
        %v1714 = vrot.slane %v1690, %v1713
        %v1715 = vmul.f32 %v1694, %v1714
        %v1716 = vmul.f32 %v1699, %v1714
        %v1717 = vmul.f32 %v1704, %v1714
        %v1718 = vmul.f32 %v1709, %v1714
        %v1719 = vld [vmem:[%s6 + $0xc] sm:$0x1]
        %v1720 = vlaneseq
        %v1721 = vshrl.u32 %v1720, 7
        %v1722 = vsub.s32 0, %v1721
        %v1723 = vrot.slane %v1719, %v1722
        %v1724 = vadd.f32 %v1715, %v1723
        %v1725 = vadd.f32 %v1716, %v1723
        %v1726 = vadd.f32 %v1717, %v1723
        %v1727 = vadd.f32 %v1718, %v1723
        %v1728 = vand.u32 2147483647, %v1724
        %vm1729 = vcmp.le.f32.partialorder %v1728, 0.7853982
        %vm1730 = vcmp.lt.s32.totalorder %v1724, 0
        %v1731 = vand.u32 %v1724, 2139095040
        %v1732 = vshrl.u32 %v1731, 23
        %v1733 = vsub.s32 %v1732, 127
        %v1734 = vand.u32 2147483647, %v1724
        %v1735 = vand.u32 %v1734, 8388607
        %v1736 = vor.u32 %v1735, 8388608
        %v1737 = vsub.s32 0, %v1736
        %v1738 = vadd.s32 %v1733, 1
        %vm1739 = vcmp.gt.s32.totalorder %v1738, 0
        %v1740 = vsel %vm1739, %v1738, 0
        %v1741 = vshrl.u32 %v1740, 5
        %v1742 = vand.u32 %v1740, 31
        %v1743 = vsub.s32 32, %v1742
        %v1744 = vshrl.u32 683565275, %v1743
        %v1745 = vshll.u32 683565275, %v1742
        %v1746 = vshrl.u32 2475754826, %v1743
        %v1747 = vor.u32 %v1745, %v1746
        %v1748 = vshll.u32 2475754826, %v1742
        %v1749 = vshrl.u32 2131351028, %v1743
        %v1750 = vor.u32 %v1748, %v1749
        %v1751 = vshll.u32 2131351028, %v1742
        %v1752 = vshrl.u32 2102212464, %v1743
        %v1753 = vor.u32 %v1751, %v1752
        %v1754 = vshll.u32 2102212464, %v1742
        %v1755 = vshrl.u32 920167782, %v1743
        %v1756 = vor.u32 %v1754, %v1755
        %v1757 = vshll.u32 920167782, %v1742
        %v1758 = vshrl.u32 1326507024, %v1743
        %v1759 = vor.u32 %v1757, %v1758
        %vm1760 = vcmp.lt.s32.totalorder %v1741, 1
        %vm1761 = vcmp.lt.s32.totalorder %v1741, 2
        %vm1762 = vcmp.lt.s32.totalorder %v1741, 3
        %vm1763 = vcmp.lt.s32.totalorder %v1741, 4
        %v1764 = vsel %vm1760, %v1744, %v1747
        %v1765 = vsel %vm1763, %v1753, 2102212464
        %v1766 = vsel %vm1762, %v1750, %v1765
        %v1767 = vsel %vm1761, %v1764, %v1766
        %v1768 = vsel %vm1760, %v1747, %v1750
        %v1769 = vsel %vm1763, %v1756, 920167782
        %v1770 = vsel %vm1762, %v1753, %v1769
        %v1771 = vsel %vm1761, %v1768, %v1770
        %v1772 = vsel %vm1760, %v1750, %v1753
        %v1773 = vsel %vm1763, %v1759, 1326507024
        %v1774 = vsel %vm1762, %v1756, %v1773
        %v1775 = vsel %vm1761, %v1772, %v1774
        %v1776 = vshll.u32 %v1736, 8
        %v1777 = vmul.u32.u64.compose %v1776, %v1775
        %v1778 = vextract.low.u32 %v1777
        %v1779 = vextract.high.u32 %v1777
        %v1780 = vmul.u32.u64.compose %v1776, %v1771
        %v1781 = vextract.low.u32 %v1780
        %v1782 = vextract.high.u32 %v1780
        %v1783 = vmul.u32 %v1776, %v1767
        %v1784 = vadd.s32 %v1779, %v1781
        %vm1785 = vc.u32 %v1779, %v1781
        %v1786 = vadd.s32 %v1782, 1
        %v1787 = vsel %vm1785, %v1786, %v1782
        %v1788 = vadd.s32 %v1783, %v1787
        %v1789 = vadd.s32 %v1788, 536870912
        %v1790 = vshrl.u32 %v1789, 30
        %v1791 = vshll.u32 %v1790, 30
        %v1792 = vsub.s32 %v1788, %v1791
        %vm1793 = vcmp.lt.s32.totalorder %v1792, 0
        %v1794 = vsub.s32 0, %v1792
        %v1795 = vsel %vm1793, %v1794, %v1792
        %v1796 = vclz %v1795
        %v1797 = vsub.s32 %v1796, 2
        %vm1798 = vcmp.gt.s32.totalorder 0, %v1797
        %v1799 = vsel %vm1798, 0, %v1797
        %v1800 = vsub.s32 32, %v1799
        %v1801 = vshll.u32 %v1792, %v1799
        %v1802 = vshrl.u32 %v1784, %v1800
        %v1803 = vor.u32 %v1801, %v1802
        %v1804 = vsub.s32 4294967266, %v1799
        %v1805 = vadd.s32 %v1804, 127
        %v1806 = vshll.u32 %v1805, 23
        %v1807 = vor.u32 4788187, %v1806
        %v1808 = vand.u32 2147483647, %v1807
        %v1810 = vcvt.s32.f32 %v1803
        %v1811 = vmul.f32 %v1810, %v1808
        %v1812 = vxor.u32 %v1811, 2147483648
        %v1813 = vsel %vm1730, %v1812, %v1811
        %v1814 = vsub.s32 4, %v1790
        %v1815 = vsel %vm1730, %v1814, %v1790
        %v1816 = vsel %vm1729, %v1724, %v1813
        %v1817 = vsel %vm1729, 0, %v1815
        %v1818 = vcosq.f32.pop %v1816
        %v1819 = vsinq.f32.pop %v1816
        %vm1820 = vweird.f32 %v1724
        %v1821 = vadd.s32 %v1817, 3
        %v1822 = vand.u32 %v1821, 3
        %vm1823 = vcmp.lt.s32.totalorder %v1822, 2
        %vm1824 = vcmp.eq.s32.totalorder %v1822, 0
        %v1825 = vxor.u32 %v1819, 2147483648
        %v1826 = vsel %vm1824, %v1818, %v1825
        %vm1827 = vcmp.eq.s32.totalorder %v1822, 2
        %v1828 = vxor.u32 %v1818, 2147483648
        %v1829 = vsel %vm1827, %v1828, %v1819
        %v1830 = vsel %vm1823, %v1826, %v1829
        %v1831 = vsel %vm1820, nan, %v1830
        %v1832 = vand.u32 2147483647, %v1725
        %vm1833 = vcmp.le.f32.partialorder %v1832, 0.7853982
        %vm1834 = vcmp.lt.s32.totalorder %v1725, 0
        %v1835 = vand.u32 %v1725, 2139095040
        %v1836 = vshrl.u32 %v1835, 23
        %v1837 = vsub.s32 %v1836, 127
        %v1838 = vand.u32 2147483647, %v1725
        %v1839 = vand.u32 %v1838, 8388607
        %v1840 = vor.u32 %v1839, 8388608
        %v1841 = vsub.s32 0, %v1840
        %v1842 = vadd.s32 %v1837, 1
        %vm1843 = vcmp.gt.s32.totalorder %v1842, 0
        %v1844 = vsel %vm1843, %v1842, 0
        %v1845 = vshrl.u32 %v1844, 5
        %v1846 = vand.u32 %v1844, 31
        %v1847 = vsub.s32 32, %v1846
        %v1848 = vshrl.u32 683565275, %v1847
        %v1849 = vshll.u32 683565275, %v1846
        %v1850 = vshrl.u32 2475754826, %v1847
        %v1851 = vor.u32 %v1849, %v1850
        %v1852 = vshll.u32 2475754826, %v1846
        %v1853 = vshrl.u32 2131351028, %v1847
        %v1854 = vor.u32 %v1852, %v1853
        %v1855 = vshll.u32 2131351028, %v1846
        %v1856 = vshrl.u32 2102212464, %v1847
        %v1857 = vor.u32 %v1855, %v1856
        %v1858 = vshll.u32 2102212464, %v1846
        %v1859 = vshrl.u32 920167782, %v1847
        %v1860 = vor.u32 %v1858, %v1859
        %v1861 = vshll.u32 920167782, %v1846
        %v1862 = vshrl.u32 1326507024, %v1847
        %v1863 = vor.u32 %v1861, %v1862
        %vm1864 = vcmp.lt.s32.totalorder %v1845, 1
        %vm1865 = vcmp.lt.s32.totalorder %v1845, 2
        %vm1866 = vcmp.lt.s32.totalorder %v1845, 3
        %vm1867 = vcmp.lt.s32.totalorder %v1845, 4
        %v1868 = vsel %vm1864, %v1848, %v1851
        %v1869 = vsel %vm1867, %v1857, 2102212464
        %v1870 = vsel %vm1866, %v1854, %v1869
        %v1871 = vsel %vm1865, %v1868, %v1870
        %v1872 = vsel %vm1864, %v1851, %v1854
        %v1873 = vsel %vm1867, %v1860, 920167782
        %v1874 = vsel %vm1866, %v1857, %v1873
        %v1875 = vsel %vm1865, %v1872, %v1874
        %v1876 = vsel %vm1864, %v1854, %v1857
        %v1877 = vsel %vm1867, %v1863, 1326507024
        %v1878 = vsel %vm1866, %v1860, %v1877
        %v1879 = vsel %vm1865, %v1876, %v1878
        %v1880 = vshll.u32 %v1840, 8
        %v1881 = vmul.u32.u64.compose %v1880, %v1879
        %v1882 = vextract.low.u32 %v1881
        %v1883 = vextract.high.u32 %v1881
        %v1884 = vmul.u32.u64.compose %v1880, %v1875
        %v1885 = vextract.low.u32 %v1884
        %v1886 = vextract.high.u32 %v1884
        %v1887 = vmul.u32 %v1880, %v1871
        %v1888 = vadd.s32 %v1883, %v1885
        %vm1889 = vc.u32 %v1883, %v1885
        %v1890 = vadd.s32 %v1886, 1
        %v1891 = vsel %vm1889, %v1890, %v1886
        %v1892 = vadd.s32 %v1887, %v1891
        %v1893 = vadd.s32 %v1892, 536870912
        %v1894 = vshrl.u32 %v1893, 30
        %v1895 = vshll.u32 %v1894, 30
        %v1896 = vsub.s32 %v1892, %v1895
        %vm1897 = vcmp.lt.s32.totalorder %v1896, 0
        %v1898 = vsub.s32 0, %v1896
        %v1899 = vsel %vm1897, %v1898, %v1896
        %v1900 = vclz %v1899
        %v1901 = vsub.s32 %v1900, 2
        %vm1902 = vcmp.gt.s32.totalorder 0, %v1901
        %v1903 = vsel %vm1902, 0, %v1901
        %v1904 = vsub.s32 32, %v1903
        %v1905 = vshll.u32 %v1896, %v1903
        %v1906 = vshrl.u32 %v1888, %v1904
        %v1907 = vor.u32 %v1905, %v1906
        %v1908 = vsub.s32 4294967266, %v1903
        %v1909 = vadd.s32 %v1908, 127
        %v1910 = vshll.u32 %v1909, 23
        %v1911 = vor.u32 4788187, %v1910
        %v1912 = vand.u32 2147483647, %v1911
        %v1914 = vcvt.s32.f32 %v1907
        %v1915 = vmul.f32 %v1914, %v1912
        %v1916 = vxor.u32 %v1915, 2147483648
        %v1917 = vsel %vm1834, %v1916, %v1915
        %v1918 = vsub.s32 4, %v1894
        %v1919 = vsel %vm1834, %v1918, %v1894
        %v1920 = vsel %vm1833, %v1725, %v1917
        %v1921 = vsel %vm1833, 0, %v1919
        %v1922 = vcosq.f32.pop %v1920
        %v1923 = vsinq.f32.pop %v1920
        %vm1924 = vweird.f32 %v1725
        %v1925 = vadd.s32 %v1921, 3
        %v1926 = vand.u32 %v1925, 3
        %vm1927 = vcmp.lt.s32.totalorder %v1926, 2
        %vm1928 = vcmp.eq.s32.totalorder %v1926, 0
        %v1929 = vxor.u32 %v1923, 2147483648
        %v1930 = vsel %vm1928, %v1922, %v1929
        %vm1931 = vcmp.eq.s32.totalorder %v1926, 2
        %v1932 = vxor.u32 %v1922, 2147483648
        %v1933 = vsel %vm1931, %v1932, %v1923
        %v1934 = vsel %vm1927, %v1930, %v1933
        %v1935 = vsel %vm1924, nan, %v1934
        %v1936 = vand.u32 2147483647, %v1726
        %vm1937 = vcmp.le.f32.partialorder %v1936, 0.7853982
        %vm1938 = vcmp.lt.s32.totalorder %v1726, 0
        %v1939 = vand.u32 %v1726, 2139095040
        %v1940 = vshrl.u32 %v1939, 23
        %v1941 = vsub.s32 %v1940, 127
        %v1942 = vand.u32 2147483647, %v1726
        %v1943 = vand.u32 %v1942, 8388607
        %v1944 = vor.u32 %v1943, 8388608
        %v1945 = vsub.s32 0, %v1944
        %v1946 = vadd.s32 %v1941, 1
        %vm1947 = vcmp.gt.s32.totalorder %v1946, 0
        %v1948 = vsel %vm1947, %v1946, 0
        %v1949 = vshrl.u32 %v1948, 5
        %v1950 = vand.u32 %v1948, 31
        %v1951 = vsub.s32 32, %v1950
        %v1952 = vshrl.u32 683565275, %v1951
        %v1953 = vshll.u32 683565275, %v1950
        %v1954 = vshrl.u32 2475754826, %v1951
        %v1955 = vor.u32 %v1953, %v1954
        %v1956 = vshll.u32 2475754826, %v1950
        %v1957 = vshrl.u32 2131351028, %v1951
        %v1958 = vor.u32 %v1956, %v1957
        %v1959 = vshll.u32 2131351028, %v1950
        %v1960 = vshrl.u32 2102212464, %v1951
        %v1961 = vor.u32 %v1959, %v1960
        %v1962 = vshll.u32 2102212464, %v1950
        %v1963 = vshrl.u32 920167782, %v1951
        %v1964 = vor.u32 %v1962, %v1963
        %v1965 = vshll.u32 920167782, %v1950
        %v1966 = vshrl.u32 1326507024, %v1951
        %v1967 = vor.u32 %v1965, %v1966
        %vm1968 = vcmp.lt.s32.totalorder %v1949, 1
        %vm1969 = vcmp.lt.s32.totalorder %v1949, 2
        %vm1970 = vcmp.lt.s32.totalorder %v1949, 3
        %vm1971 = vcmp.lt.s32.totalorder %v1949, 4
        %v1972 = vsel %vm1968, %v1952, %v1955
        %v1973 = vsel %vm1971, %v1961, 2102212464
        %v1974 = vsel %vm1970, %v1958, %v1973
        %v1975 = vsel %vm1969, %v1972, %v1974
        %v1976 = vsel %vm1968, %v1955, %v1958
        %v1977 = vsel %vm1971, %v1964, 920167782
        %v1978 = vsel %vm1970, %v1961, %v1977
        %v1979 = vsel %vm1969, %v1976, %v1978
        %v1980 = vsel %vm1968, %v1958, %v1961
        %v1981 = vsel %vm1971, %v1967, 1326507024
        %v1982 = vsel %vm1970, %v1964, %v1981
        %v1983 = vsel %vm1969, %v1980, %v1982
        %v1984 = vshll.u32 %v1944, 8
        %v1985 = vmul.u32.u64.compose %v1984, %v1983
        %v1986 = vextract.low.u32 %v1985
        %v1987 = vextract.high.u32 %v1985
        %v1988 = vmul.u32.u64.compose %v1984, %v1979
        %v1989 = vextract.low.u32 %v1988
        %v1990 = vextract.high.u32 %v1988
        %v1991 = vmul.u32 %v1984, %v1975
        %v1992 = vadd.s32 %v1987, %v1989
        %vm1993 = vc.u32 %v1987, %v1989
        %v1994 = vadd.s32 %v1990, 1
        %v1995 = vsel %vm1993, %v1994, %v1990
        %v1996 = vadd.s32 %v1991, %v1995
        %v1997 = vadd.s32 %v1996, 536870912
        %v1998 = vshrl.u32 %v1997, 30
        %v1999 = vshll.u32 %v1998, 30
        %v2000 = vsub.s32 %v1996, %v1999
        %vm2001 = vcmp.lt.s32.totalorder %v2000, 0
        %v2002 = vsub.s32 0, %v2000
        %v2003 = vsel %vm2001, %v2002, %v2000
        %v2004 = vclz %v2003
        %v2005 = vsub.s32 %v2004, 2
        %vm2006 = vcmp.gt.s32.totalorder 0, %v2005
        %v2007 = vsel %vm2006, 0, %v2005
        %v2008 = vsub.s32 32, %v2007
        %v2009 = vshll.u32 %v2000, %v2007
        %v2010 = vshrl.u32 %v1992, %v2008
        %v2011 = vor.u32 %v2009, %v2010
        %v2012 = vsub.s32 4294967266, %v2007
        %v2013 = vadd.s32 %v2012, 127
        %v2014 = vshll.u32 %v2013, 23
        %v2015 = vor.u32 4788187, %v2014
        %v2016 = vand.u32 2147483647, %v2015
        %v2018 = vcvt.s32.f32 %v2011
        %v2019 = vmul.f32 %v2018, %v2016
        %v2020 = vxor.u32 %v2019, 2147483648
        %v2021 = vsel %vm1938, %v2020, %v2019
        %v2022 = vsub.s32 4, %v1998
        %v2023 = vsel %vm1938, %v2022, %v1998
        %v2024 = vsel %vm1937, %v1726, %v2021
        %v2025 = vsel %vm1937, 0, %v2023
        %v2026 = vcosq.f32.pop %v2024
        %v2027 = vsinq.f32.pop %v2024
        %vm2028 = vweird.f32 %v1726
        %v2029 = vadd.s32 %v2025, 3
        %v2030 = vand.u32 %v2029, 3
        %vm2031 = vcmp.lt.s32.totalorder %v2030, 2
        %vm2032 = vcmp.eq.s32.totalorder %v2030, 0
        %v2033 = vxor.u32 %v2027, 2147483648
        %v2034 = vsel %vm2032, %v2026, %v2033
        %vm2035 = vcmp.eq.s32.totalorder %v2030, 2
        %v2036 = vxor.u32 %v2026, 2147483648
        %v2037 = vsel %vm2035, %v2036, %v2027
        %v2038 = vsel %vm2031, %v2034, %v2037
        %v2039 = vsel %vm2028, nan, %v2038
        %v2040 = vand.u32 2147483647, %v1727
        %vm2041 = vcmp.le.f32.partialorder %v2040, 0.7853982
        %vm2042 = vcmp.lt.s32.totalorder %v1727, 0
        %v2043 = vand.u32 %v1727, 2139095040
        %v2044 = vshrl.u32 %v2043, 23
        %v2045 = vsub.s32 %v2044, 127
        %v2046 = vand.u32 2147483647, %v1727
        %v2047 = vand.u32 %v2046, 8388607
        %v2048 = vor.u32 %v2047, 8388608
        %v2049 = vsub.s32 0, %v2048
        %v2050 = vadd.s32 %v2045, 1
        %vm2051 = vcmp.gt.s32.totalorder %v2050, 0
        %v2052 = vsel %vm2051, %v2050, 0
        %v2053 = vshrl.u32 %v2052, 5
        %v2054 = vand.u32 %v2052, 31
        %v2055 = vsub.s32 32, %v2054
        %v2056 = vshrl.u32 683565275, %v2055
        %v2057 = vshll.u32 683565275, %v2054
        %v2058 = vshrl.u32 2475754826, %v2055
        %v2059 = vor.u32 %v2057, %v2058
        %v2060 = vshll.u32 2475754826, %v2054
        %v2061 = vshrl.u32 2131351028, %v2055
        %v2062 = vor.u32 %v2060, %v2061
        %v2063 = vshll.u32 2131351028, %v2054
        %v2064 = vshrl.u32 2102212464, %v2055
        %v2065 = vor.u32 %v2063, %v2064
        %v2066 = vshll.u32 2102212464, %v2054
        %v2067 = vshrl.u32 920167782, %v2055
        %v2068 = vor.u32 %v2066, %v2067
        %v2069 = vshll.u32 920167782, %v2054
        %v2070 = vshrl.u32 1326507024, %v2055
        %v2071 = vor.u32 %v2069, %v2070
        %vm2072 = vcmp.lt.s32.totalorder %v2053, 1
        %vm2073 = vcmp.lt.s32.totalorder %v2053, 2
        %vm2074 = vcmp.lt.s32.totalorder %v2053, 3
        %vm2075 = vcmp.lt.s32.totalorder %v2053, 4
        %v2076 = vsel %vm2072, %v2056, %v2059
        %v2077 = vsel %vm2075, %v2065, 2102212464
        %v2078 = vsel %vm2074, %v2062, %v2077
        %v2079 = vsel %vm2073, %v2076, %v2078
        %v2080 = vsel %vm2072, %v2059, %v2062
        %v2081 = vsel %vm2075, %v2068, 920167782
        %v2082 = vsel %vm2074, %v2065, %v2081
        %v2083 = vsel %vm2073, %v2080, %v2082
        %v2084 = vsel %vm2072, %v2062, %v2065
        %v2085 = vsel %vm2075, %v2071, 1326507024
        %v2086 = vsel %vm2074, %v2068, %v2085
        %v2087 = vsel %vm2073, %v2084, %v2086
        %v2088 = vshll.u32 %v2048, 8
        %v2089 = vmul.u32.u64.compose %v2088, %v2087
        %v2090 = vextract.low.u32 %v2089
        %v2091 = vextract.high.u32 %v2089
        %v2092 = vmul.u32.u64.compose %v2088, %v2083
        %v2093 = vextract.low.u32 %v2092
        %v2094 = vextract.high.u32 %v2092
        %v2095 = vmul.u32 %v2088, %v2079
        %v2096 = vadd.s32 %v2091, %v2093
        %vm2097 = vc.u32 %v2091, %v2093
        %v2098 = vadd.s32 %v2094, 1
        %v2099 = vsel %vm2097, %v2098, %v2094
        %v2100 = vadd.s32 %v2095, %v2099
        %v2101 = vadd.s32 %v2100, 536870912
        %v2102 = vshrl.u32 %v2101, 30
        %v2103 = vshll.u32 %v2102, 30
        %v2104 = vsub.s32 %v2100, %v2103
        %vm2105 = vcmp.lt.s32.totalorder %v2104, 0
        %v2106 = vsub.s32 0, %v2104
        %v2107 = vsel %vm2105, %v2106, %v2104
        %v2108 = vclz %v2107
        %v2109 = vsub.s32 %v2108, 2
        %vm2110 = vcmp.gt.s32.totalorder 0, %v2109
        %v2111 = vsel %vm2110, 0, %v2109
        %v2112 = vsub.s32 32, %v2111
        %v2113 = vshll.u32 %v2104, %v2111
        %v2114 = vshrl.u32 %v2096, %v2112
        %v2115 = vor.u32 %v2113, %v2114
        %v2116 = vsub.s32 4294967266, %v2111
        %v2117 = vadd.s32 %v2116, 127
        %v2118 = vshll.u32 %v2117, 23
        %v2119 = vor.u32 4788187, %v2118
        %v2120 = vand.u32 2147483647, %v2119
        %v2122 = vcvt.s32.f32 %v2115
        %v2123 = vmul.f32 %v2122, %v2120
        %v2124 = vxor.u32 %v2123, 2147483648
        %v2125 = vsel %vm2042, %v2124, %v2123
        %v2126 = vsub.s32 4, %v2102
        %v2127 = vsel %vm2042, %v2126, %v2102
        %v2128 = vsel %vm2041, %v1727, %v2125
        %v2129 = vsel %vm2041, 0, %v2127
        %v2130 = vcosq.f32.pop %v2128
        %v2131 = vsinq.f32.pop %v2128
        %vm2132 = vweird.f32 %v1727
        %v2133 = vadd.s32 %v2129, 3
        %v2134 = vand.u32 %v2133, 3
        %vm2135 = vcmp.lt.s32.totalorder %v2134, 2
        %vm2136 = vcmp.eq.s32.totalorder %v2134, 0
        %v2137 = vxor.u32 %v2131, 2147483648
        %v2138 = vsel %vm2136, %v2130, %v2137
        %vm2139 = vcmp.eq.s32.totalorder %v2134, 2
        %v2140 = vxor.u32 %v2130, 2147483648
        %v2141 = vsel %vm2139, %v2140, %v2131
        %v2142 = vsel %vm2135, %v2138, %v2141
        %v2143 = vsel %vm2132, nan, %v2142
        %vm2144 = vcmp.lt.s32.totalorder %v1647, 16
        %v2145 = vsel %vm2144, 1, 0
        %vm2146 = vcmp.eq.s32.totalorder %v2145, 1
        %v2151 = vrot.slane %v1687, 7
        %vm2152 = vcmask 1041409
        %v2153 = vsel %vm2152, %v2151, %v1686
        %v2154 = vrot.slane %v1688, 6
        %vm2155 = vcmask 1042434
        %v2156 = vsel %vm2155, %v2154, %v2153
        %v2157 = vrot.slane %v1689, 5
        %vm2158 = vcmask 1043459
        %v2159 = vsel %vm2158, %v2157, %v2156
        %v2165 = vrot.slane %v1935, 7
        %v2166 = vsel %vm2152, %v2165, %v1831
        %v2167 = vrot.slane %v2039, 6
        %v2168 = vsel %vm2155, %v2167, %v2166
        %v2169 = vrot.slane %v2143, 5
        %v2170 = vsel %vm2158, %v2169, %v2168
        %v2172 = vsel %vm2146, %v2159, %v2170
        %v2173 = vpack.c.bf16 %v2172, %v2172
        %s2174 = scalar_lea.vmem [#allocation3], 64
        %v2175 = vld [vmem:[%s2174] sm:$0xf]
        %v2176 = vld [vmem:[%s2174 + $0x4] sm:$0xf]
        %v2177 = vld [vmem:[%s2174 + $0x8] sm:$0xf]
        %v2178 = vld [vmem:[%s2174 + $0xc] sm:$0xf]
        %v2179 = vld [vmem:[%s2174 + $0x10] sm:$0xf]
        %v2180 = vld [vmem:[%s2174 + $0x14] sm:$0xf]
        %v2181 = vld [vmem:[%s2174 + $0x18] sm:$0xf]
        %v2182 = vld [vmem:[%s2174 + $0x1c] sm:$0xf]
        %v2183 = vld [vmem:[%s2174 + $0x20] sm:$0xf]
        %v2184 = vld [vmem:[%s2174 + $0x24] sm:$0xf]
        %v2185 = vld [vmem:[%s2174 + $0x28] sm:$0xf]
        %v2186 = vld [vmem:[%s2174 + $0x2c] sm:$0xf]
        %v2187 = vld [vmem:[%s2174 + $0x30] sm:$0xf]
        %v2188 = vld [vmem:[%s2174 + $0x34] sm:$0xf]
        %v2189 = vld [vmem:[%s2174 + $0x38] sm:$0xf]
        %v2190 = vld [vmem:[%s2174 + $0x3c] sm:$0xf]
        %v2191 = vld [vmem:[%s6 + $0x2] sm:$0x1]
        %v2192 = vlaneseq
        %v2193 = vshrl.u32 %v2192, 7
        %v2194 = vsub.s32 0, %v2193
        %v2195 = vrot.slane %v2191, %v2194
        %v2212 = vunpack.c.l.b16 %v2175
        %v2213 = vunpack.c.l.b16 %v2176
        %v2214 = vunpack.c.l.b16 %v2177
        %v2215 = vunpack.c.l.b16 %v2178
        %v2216 = vunpack.c.l.b16 %v2179
        %v2217 = vunpack.c.l.b16 %v2180
        %v2218 = vunpack.c.l.b16 %v2181
        %v2219 = vunpack.c.l.b16 %v2182
        %v2220 = vunpack.c.l.b16 %v2183
        %v2221 = vunpack.c.l.b16 %v2184
        %v2222 = vunpack.c.l.b16 %v2185
        %v2223 = vunpack.c.l.b16 %v2186
        %v2224 = vunpack.c.l.b16 %v2187
        %v2225 = vunpack.c.l.b16 %v2188
        %v2226 = vunpack.c.l.b16 %v2189
        %v2227 = vunpack.c.l.b16 %v2190
        %v2228 = vpack.c.b16 %v2213, %v2212
        %v2229 = vpack.c.b16 %v2215, %v2214
        %v2230 = vpack.c.b16 %v2217, %v2216
        %v2231 = vpack.c.b16 %v2219, %v2218
        %v2232 = vpack.c.b16 %v2221, %v2220
        %v2233 = vpack.c.b16 %v2223, %v2222
        %v2234 = vpack.c.b16 %v2225, %v2224
        %v2235 = vpack.c.b16 %v2227, %v2226
        %2244 = vmatprep.subr.bf16.mxu0 0
        %2245 = vmatpush1.bf16.msra.mxu0 %v2228
        %2246 = vmatprep.subr.bf16.mxu0 0
        %2247 = vmatpush1.bf16.msra.mxu0 %v2229
        %2248 = vmatprep.subr.bf16.mxu0 0
        %2249 = vmatpush1.bf16.msra.mxu0 %v2230
        %2250 = vmatprep.subr.bf16.mxu0 0
        %2251 = vmatpush1.bf16.msra.mxu0 %v2231
        %2252 = vmatprep.subr.bf16.mxu0 0
        %2253 = vmatpush1.bf16.msra.mxu0 %v2232
        %2254 = vmatprep.subr.bf16.mxu0 0
        %2255 = vmatpush1.bf16.msra.mxu0 %v2233
        %2256 = vmatprep.subr.bf16.mxu0 0
        %2257 = vmatpush1.bf16.msra.mxu0 %v2234
        %2258 = vmatprep.subr.bf16.mxu0 0
        %2259 = vmatpush1.bf16.msra.mxu0 %v2235
        %2260 = vmatprep.subr.bf16.mxu0 0
        %2261 = vmatpush1.bf16.msra.mxu0 0
        %2262 = vmatprep.subr.bf16.mxu0 0
        %2263 = vmatpush1.bf16.msra.mxu0 0
        %2264 = vmatprep.subr.bf16.mxu0 0
        %2265 = vmatpush1.bf16.msra.mxu0 0
        %2266 = vmatprep.subr.bf16.mxu0 0
        %2267 = vmatpush1.bf16.msra.mxu0 0
        %2268 = vmatprep.subr.bf16.mxu0 0
        %2269 = vmatpush1.bf16.msra.mxu0 0
        %2270 = vmatprep.subr.bf16.mxu0 0
        %2271 = vmatpush1.bf16.msra.mxu0 0
        %2272 = vmatprep.subr.bf16.mxu0 0
        %2273 = vmatpush1.bf16.msra.mxu0 0
        %2274 = vmatprep.subr.bf16.mxu0 0
        %2275 = vmatpush1.bf16.msra.mxu0 0
        %2276 = vmatprep.mubr.bf16.mxu0 0
        %2277 = vmatmul.mubr.bf16.gmra.mrb[0].mxu0 %v2173
        %v2278 = vpop.f32.mrb[0].mxu0
        %v2279 = vadd.f32 %v2195, %v2278
        %v2280 = vpop.f32.mrb[0].mxu0
        %v2281 = vpop.f32.mrb[0].mxu0
        %v2282 = vpop.f32.mrb[0].mxu0
        %2283 = vdwg.mxu0
        %v2284 = vtanh.pop %v2279
        %v2285 = vpack.c.bf16 %v2284, %v2284
        %s2286 = scalar_lea.vmem [#allocation3], 128
        %v2287 = vld [vmem:[%s2286] sm:$0xf]
        %v2288 = vld [vmem:[%s2286 + $0x4] sm:$0xf]
        %v2289 = vld [vmem:[%s2286 + $0x8] sm:$0xf]
        %v2290 = vld [vmem:[%s2286 + $0xc] sm:$0xf]
        %v2291 = vld [vmem:[%s2286 + $0x10] sm:$0xf]
        %v2292 = vld [vmem:[%s2286 + $0x14] sm:$0xf]
        %v2293 = vld [vmem:[%s2286 + $0x18] sm:$0xf]
        %v2294 = vld [vmem:[%s2286 + $0x1c] sm:$0xf]
        %v2295 = vld [vmem:[%s2286 + $0x20] sm:$0xf]
        %v2296 = vld [vmem:[%s2286 + $0x24] sm:$0xf]
        %v2297 = vld [vmem:[%s2286 + $0x28] sm:$0xf]
        %v2298 = vld [vmem:[%s2286 + $0x2c] sm:$0xf]
        %v2299 = vld [vmem:[%s2286 + $0x30] sm:$0xf]
        %v2300 = vld [vmem:[%s2286 + $0x34] sm:$0xf]
        %v2301 = vld [vmem:[%s2286 + $0x38] sm:$0xf]
        %v2302 = vld [vmem:[%s2286 + $0x3c] sm:$0xf]
        %v2303 = vld [vmem:[%s6 + $0x3] sm:$0x1]
        %v2304 = vlaneseq
        %v2305 = vshrl.u32 %v2304, 7
        %v2306 = vsub.s32 0, %v2305
        %v2307 = vrot.slane %v2303, %v2306
        %v2324 = vunpack.c.l.b16 %v2287
        %v2325 = vunpack.c.l.b16 %v2288
        %v2326 = vunpack.c.l.b16 %v2289
        %v2327 = vunpack.c.l.b16 %v2290
        %v2328 = vunpack.c.l.b16 %v2291
        %v2329 = vunpack.c.l.b16 %v2292
        %v2330 = vunpack.c.l.b16 %v2293
        %v2331 = vunpack.c.l.b16 %v2294
        %v2332 = vunpack.c.l.b16 %v2295
        %v2333 = vunpack.c.l.b16 %v2296
        %v2334 = vunpack.c.l.b16 %v2297
        %v2335 = vunpack.c.l.b16 %v2298
        %v2336 = vunpack.c.l.b16 %v2299
        %v2337 = vunpack.c.l.b16 %v2300
        %v2338 = vunpack.c.l.b16 %v2301
        %v2339 = vunpack.c.l.b16 %v2302
        %v2340 = vpack.c.b16 %v2325, %v2324
        %v2341 = vpack.c.b16 %v2327, %v2326
        %v2342 = vpack.c.b16 %v2329, %v2328
        %v2343 = vpack.c.b16 %v2331, %v2330
        %v2344 = vpack.c.b16 %v2333, %v2332
        %v2345 = vpack.c.b16 %v2335, %v2334
        %v2346 = vpack.c.b16 %v2337, %v2336
        %v2347 = vpack.c.b16 %v2339, %v2338
        %2356 = vmatprep.subr.bf16.mxu0 0
        %2357 = vmatpush1.bf16.msra.mxu0 %v2340
        %2358 = vmatprep.subr.bf16.mxu0 0
        %2359 = vmatpush1.bf16.msra.mxu0 %v2341
        %2360 = vmatprep.subr.bf16.mxu0 0
        %2361 = vmatpush1.bf16.msra.mxu0 %v2342
        %2362 = vmatprep.subr.bf16.mxu0 0
        %2363 = vmatpush1.bf16.msra.mxu0 %v2343
        %2364 = vmatprep.subr.bf16.mxu0 0
        %2365 = vmatpush1.bf16.msra.mxu0 %v2344
        %2366 = vmatprep.subr.bf16.mxu0 0
        %2367 = vmatpush1.bf16.msra.mxu0 %v2345
        %2368 = vmatprep.subr.bf16.mxu0 0
        %2369 = vmatpush1.bf16.msra.mxu0 %v2346
        %2370 = vmatprep.subr.bf16.mxu0 0
        %2371 = vmatpush1.bf16.msra.mxu0 %v2347
        %2372 = vmatprep.subr.bf16.mxu0 0
        %2373 = vmatpush1.bf16.msra.mxu0 0
        %2374 = vmatprep.subr.bf16.mxu0 0
        %2375 = vmatpush1.bf16.msra.mxu0 0
        %2376 = vmatprep.subr.bf16.mxu0 0
        %2377 = vmatpush1.bf16.msra.mxu0 0
        %2378 = vmatprep.subr.bf16.mxu0 0
        %2379 = vmatpush1.bf16.msra.mxu0 0
        %2380 = vmatprep.subr.bf16.mxu0 0
        %2381 = vmatpush1.bf16.msra.mxu0 0
        %2382 = vmatprep.subr.bf16.mxu0 0
        %2383 = vmatpush1.bf16.msra.mxu0 0
        %2384 = vmatprep.subr.bf16.mxu0 0
        %2385 = vmatpush1.bf16.msra.mxu0 0
        %2386 = vmatprep.subr.bf16.mxu0 0
        %2387 = vmatpush1.bf16.msra.mxu0 0
        %2388 = vmatprep.mubr.bf16.mxu0 0
        %2389 = vmatmul.mubr.bf16.gmra.mrb[0].mxu0 %v2285
        %v2390 = vpop.f32.mrb[0].mxu0
        %v2391 = vadd.f32 %v2307, %v2390
        %v2392 = vpop.f32.mrb[0].mxu0
        %v2393 = vpop.f32.mrb[0].mxu0
        %v2394 = vpop.f32.mrb[0].mxu0
        %2395 = vdwg.mxu0
        %v2396 = vld [vmem:[%s3] sm:$0xf]
        %v2397 = vld [vmem:[%s3 + $0x4] sm:$0xf]
        %v2398 = vld [vmem:[%s3 + $0x8] sm:$0xf]
        %v2399 = vld [vmem:[%s3 + $0xc] sm:$0xf]
        %v2400 = vld [vmem:[%s3 + $0x10] sm:$0xf]
        %v2401 = vld [vmem:[%s3 + $0x14] sm:$0xf]
        %v2402 = vld [vmem:[%s3 + $0x18] sm:$0xf]
        %v2403 = vld [vmem:[%s3 + $0x1c] sm:$0xf]
        %v2404 = vld [vmem:[%s6] sm:$0x1]
        %v2405 = vlaneseq
        %v2406 = vshrl.u32 %v2405, 7
        %v2407 = vsub.s32 0, %v2406
        %v2408 = vrot.slane %v2404, %v2407
        %v2417 = vunpack.c.l.b16 %v2396
        %v2418 = vunpack.c.l.b16 %v2397
        %v2419 = vunpack.c.l.b16 %v2398
        %v2420 = vunpack.c.l.b16 %v2399
        %v2421 = vunpack.c.l.b16 %v2400
        %v2422 = vunpack.c.l.b16 %v2401
        %v2423 = vunpack.c.l.b16 %v2402
        %v2424 = vunpack.c.l.b16 %v2403
        %v2425 = vpack.c.b16 %v2418, %v2417
        %v2426 = vpack.c.b16 %v2420, %v2419
        %v2427 = vpack.c.b16 %v2422, %v2421
        %v2428 = vpack.c.b16 %v2424, %v2423
        %v2434 = vsel %vm1620, %v367, 0
        %2436 = vmatprep.subr.bf16.mxu0 0
        %2437 = vmatpush1.bf16.msra.mxu0 %v2425
        %2438 = vmatprep.subr.bf16.mxu0 0
        %2439 = vmatpush1.bf16.msra.mxu0 %v2426
        %2440 = vmatprep.subr.bf16.mxu0 0
        %2441 = vmatpush1.bf16.msra.mxu0 %v2427
        %2442 = vmatprep.subr.bf16.mxu0 0
        %2443 = vmatpush1.bf16.msra.mxu0 %v2428
        %2444 = vmatprep.subr.bf16.mxu0 0
        %2445 = vmatpush1.bf16.msra.mxu0 0
        %2446 = vmatprep.subr.bf16.mxu0 0
        %2447 = vmatpush1.bf16.msra.mxu0 0
        %2448 = vmatprep.subr.bf16.mxu0 0
        %2449 = vmatpush1.bf16.msra.mxu0 0
        %2450 = vmatprep.subr.bf16.mxu0 0
        %2451 = vmatpush1.bf16.msra.mxu0 0
        %2452 = vmatprep.subr.bf16.mxu0 0
        %2453 = vmatpush1.bf16.msra.mxu0 0
        %2454 = vmatprep.subr.bf16.mxu0 0
        %2455 = vmatpush1.bf16.msra.mxu0 0
        %2456 = vmatprep.subr.bf16.mxu0 0
        %2457 = vmatpush1.bf16.msra.mxu0 0
        %2458 = vmatprep.subr.bf16.mxu0 0
        %2459 = vmatpush1.bf16.msra.mxu0 0
        %2460 = vmatprep.subr.bf16.mxu0 0
        %2461 = vmatpush1.bf16.msra.mxu0 0
        %2462 = vmatprep.subr.bf16.mxu0 0
        %2463 = vmatpush1.bf16.msra.mxu0 0
        %2464 = vmatprep.subr.bf16.mxu0 0
        %2465 = vmatpush1.bf16.msra.mxu0 0
        %2466 = vmatprep.subr.bf16.mxu0 0
        %2467 = vmatpush1.bf16.msra.mxu0 0
        %2468 = vmatprep.mubr.bf16.mxu0 0
        %2469 = vmatmul.mubr.bf16.gmra.mrb[0].mxu0 %v2434
        %v2470 = vpop.f32.mrb[0].mxu0
        %v2471 = vadd.f32 %v2408, %v2470
        %v2472 = vpop.f32.mrb[0].mxu0
        %v2473 = vpop.f32.mrb[0].mxu0
        %v2474 = vadd.f32 %v2408, %v2473
        %v2475 = vpop.f32.mrb[0].mxu0
        %2476 = vdwg.mxu0
        %v2481 = vcombine.low %v1626, %v1627
        %v2482 = vcombine.low %v1628, %v1629
        %v2485 = vadd.f32 %v2471, %v2481
        %v2486 = vadd.f32 %v2474, %v2482
        %v2487 = vmax.f32 %v2485, 0.0
        %v2488 = vmax.f32 %v2486, 0.0
        %v2489 = vpack.c.bf16 %v2488, %v2487
        %v2490 = vld [vmem:[#allocation3] sm:$0xf]
        %v2491 = vld [vmem:[#allocation3 + $0x4] sm:$0xf]
        %v2492 = vld [vmem:[#allocation3 + $0x8] sm:$0xf]
        %v2493 = vld [vmem:[#allocation3 + $0xc] sm:$0xf]
        %v2494 = vld [vmem:[#allocation3 + $0x10] sm:$0xf]
        %v2495 = vld [vmem:[#allocation3 + $0x14] sm:$0xf]
        %v2496 = vld [vmem:[#allocation3 + $0x18] sm:$0xf]
        %v2497 = vld [vmem:[#allocation3 + $0x1c] sm:$0xf]
        %v2498 = vld [vmem:[#allocation3 + $0x20] sm:$0xf]
        %v2499 = vld [vmem:[#allocation3 + $0x24] sm:$0xf]
        %v2500 = vld [vmem:[#allocation3 + $0x28] sm:$0xf]
        %v2501 = vld [vmem:[#allocation3 + $0x2c] sm:$0xf]
        %v2502 = vld [vmem:[#allocation3 + $0x30] sm:$0xf]
        %v2503 = vld [vmem:[#allocation3 + $0x34] sm:$0xf]
        %v2504 = vld [vmem:[#allocation3 + $0x38] sm:$0xf]
        %v2505 = vld [vmem:[#allocation3 + $0x3c] sm:$0xf]
        %v2506 = vld [vmem:[%s6 + $0x1] sm:$0x1]
        %v2507 = vlaneseq
        %v2508 = vshrl.u32 %v2507, 7
        %v2509 = vsub.s32 0, %v2508
        %v2510 = vrot.slane %v2506, %v2509
        %v2527 = vunpack.c.l.b16 %v2490
        %v2528 = vunpack.c.l.b16 %v2491
        %v2529 = vunpack.c.l.b16 %v2492
        %v2530 = vunpack.c.l.b16 %v2493
        %v2531 = vunpack.c.l.b16 %v2494
        %v2532 = vunpack.c.l.b16 %v2495
        %v2533 = vunpack.c.l.b16 %v2496
        %v2534 = vunpack.c.l.b16 %v2497
        %v2535 = vunpack.c.l.b16 %v2498
        %v2536 = vunpack.c.l.b16 %v2499
        %v2537 = vunpack.c.l.b16 %v2500
        %v2538 = vunpack.c.l.b16 %v2501
        %v2539 = vunpack.c.l.b16 %v2502
        %v2540 = vunpack.c.l.b16 %v2503
        %v2541 = vunpack.c.l.b16 %v2504
        %v2542 = vunpack.c.l.b16 %v2505
        %v2543 = vpack.c.b16 %v2528, %v2527
        %v2544 = vpack.c.b16 %v2530, %v2529
        %v2545 = vpack.c.b16 %v2532, %v2531
        %v2546 = vpack.c.b16 %v2534, %v2533
        %v2547 = vpack.c.b16 %v2536, %v2535
        %v2548 = vpack.c.b16 %v2538, %v2537
        %v2549 = vpack.c.b16 %v2540, %v2539
        %v2550 = vpack.c.b16 %v2542, %v2541
        %2559 = vmatprep.subr.bf16.mxu0 0
        %2560 = vmatpush1.bf16.msra.mxu0 %v2543
        %2561 = vmatprep.subr.bf16.mxu0 0
        %2562 = vmatpush1.bf16.msra.mxu0 %v2544
        %2563 = vmatprep.subr.bf16.mxu0 0
        %2564 = vmatpush1.bf16.msra.mxu0 %v2545
        %2565 = vmatprep.subr.bf16.mxu0 0
        %2566 = vmatpush1.bf16.msra.mxu0 %v2546
        %2567 = vmatprep.subr.bf16.mxu0 0
        %2568 = vmatpush1.bf16.msra.mxu0 %v2547
        %2569 = vmatprep.subr.bf16.mxu0 0
        %2570 = vmatpush1.bf16.msra.mxu0 %v2548
        %2571 = vmatprep.subr.bf16.mxu0 0
        %2572 = vmatpush1.bf16.msra.mxu0 %v2549
        %2573 = vmatprep.subr.bf16.mxu0 0
        %2574 = vmatpush1.bf16.msra.mxu0 %v2550
        %2575 = vmatprep.subr.bf16.mxu0 0
        %2576 = vmatpush1.bf16.msra.mxu0 0
        %2577 = vmatprep.subr.bf16.mxu0 0
        %2578 = vmatpush1.bf16.msra.mxu0 0
        %2579 = vmatprep.subr.bf16.mxu0 0
        %2580 = vmatpush1.bf16.msra.mxu0 0
        %2581 = vmatprep.subr.bf16.mxu0 0
        %2582 = vmatpush1.bf16.msra.mxu0 0
        %2583 = vmatprep.subr.bf16.mxu0 0
        %2584 = vmatpush1.bf16.msra.mxu0 0
        %2585 = vmatprep.subr.bf16.mxu0 0
        %2586 = vmatpush1.bf16.msra.mxu0 0
        %2587 = vmatprep.subr.bf16.mxu0 0
        %2588 = vmatpush1.bf16.msra.mxu0 0
        %2589 = vmatprep.subr.bf16.mxu0 0
        %2590 = vmatpush1.bf16.msra.mxu0 0
        %2591 = vmatprep.mubr.bf16.mxu0 0
        %2592 = vmatmul.mubr.bf16.gmra.mrb[0].mxu0 %v2489
        %v2593 = vpop.f32.mrb[0].mxu0
        %v2594 = vadd.f32 %v2510, %v2593
        %v2595 = vpop.f32.mrb[0].mxu0
        %v2596 = vpop.f32.mrb[0].mxu0
        %v2597 = vadd.f32 %v2510, %v2596
        %v2598 = vpop.f32.mrb[0].mxu0
        %2599 = vdwg.mxu0
        %v2602 = vcombine.high %v2594, %v2594
        %v2603 = vcombine.high %v2597, %v2597
        %v2608 = vunpack.c.l.s4 1966171168
        %v2609 = vunpack.c.0.s8 %v2608
        %v2610 = vlaneseq
        %v2611 = vshrl.u32 %v2610, 7
        %v2612 = vsub.s32 %v2609, %v2611
        %v2613 = vrot.slane %v2391, %v2612
        %v2614 = vcombine.high %v2613, %v2613
        %v2616 = vunpack.c.l.s4 1966171168
        %v2617 = vunpack.c.0.s8 %v2616
        %v2618 = vlaneseq
        %v2619 = vshrl.u32 %v2618, 7
        %v2620 = vsub.s32 %v2617, %v2619
        %v2621 = vrot.slane %v2613, %v2620
        %v2623 = vunpack.c.l.s4 1966171168
        %v2624 = vunpack.c.0.s8 %v2623
        %v2625 = vlaneseq
        %v2626 = vshrl.u32 %v2625, 7
        %v2627 = vsub.s32 %v2624, %v2626
        %v2628 = vrot.slane %v2614, %v2627
        %v2629 = vcombine.high %v2621, %v2621
        %v2630 = vcombine.high %v2628, %v2628
        %v2631 = vlaneseq
        %v2632 = vshrl.u32 %v2631, 7
        %v2633 = vsub.s32 0, %v2632
        %v2634 = vrot.slane %v2621, %v2633
        %v2635 = vlaneseq
        %v2636 = vshrl.u32 %v2635, 7
        %v2637 = vsub.s32 0, %v2636
        %v2638 = vrot.slane %v2628, %v2637
        %v2639 = vlaneseq
        %v2640 = vshrl.u32 %v2639, 7
        %v2641 = vsub.s32 0, %v2640
        %v2642 = vrot.slane %v2629, %v2641
        %v2643 = vlaneseq
        %v2644 = vshrl.u32 %v2643, 7
        %v2645 = vsub.s32 0, %v2644
        %v2646 = vrot.slane %v2630, %v2645
        %v2651 = vadd.f32 %v2594, %v2634
        %v2652 = vadd.f32 %v2602, %v2638
        %v2653 = vadd.f32 %v2597, %v2642
        %v2654 = vadd.f32 %v2603, %v2646
        %v2655 = vmax.f32 %v2651, 0.0
        %v2656 = vmax.f32 %v2652, 0.0
        %v2657 = vmax.f32 %v2653, 0.0
        %v2658 = vmax.f32 %v2654, 0.0
        %v2663 = vcombine.low %v2655, %v2656
        %v2664 = vcombine.low %v2657, %v2658
        %v2667 = vpack.c.bf16 %v2664, %v2663
        %s2668 = scalar_lea.vmem [#allocation3], 192
        %v2669 = vld [vmem:[%s2668] sm:$0xf]
        %v2670 = vld [vmem:[%s2668 + $0x4] sm:$0xf]
        %v2671 = vld [vmem:[%s2668 + $0x8] sm:$0xf]
        %v2672 = vld [vmem:[%s2668 + $0xc] sm:$0xf]
        %v2673 = vld [vmem:[%s2668 + $0x10] sm:$0xf]
        %v2674 = vld [vmem:[%s2668 + $0x14] sm:$0xf]
        %v2675 = vld [vmem:[%s2668 + $0x18] sm:$0xf]
        %v2676 = vld [vmem:[%s2668 + $0x1c] sm:$0xf]
        %v2677 = vld [vmem:[%s2668 + $0x20] sm:$0xf]
        %v2678 = vld [vmem:[%s2668 + $0x24] sm:$0xf]
        %v2679 = vld [vmem:[%s2668 + $0x28] sm:$0xf]
        %v2680 = vld [vmem:[%s2668 + $0x2c] sm:$0xf]
        %v2681 = vld [vmem:[%s2668 + $0x30] sm:$0xf]
        %v2682 = vld [vmem:[%s2668 + $0x34] sm:$0xf]
        %v2683 = vld [vmem:[%s2668 + $0x38] sm:$0xf]
        %v2684 = vld [vmem:[%s2668 + $0x3c] sm:$0xf]
        %v2685 = vld [vmem:[%s6 + $0x6] sm:$0x1]
        %v2686 = vlaneseq
        %v2687 = vshrl.u32 %v2686, 7
        %v2688 = vsub.s32 0, %v2687
        %v2689 = vrot.slane %v2685, %v2688
        %v2706 = vunpack.c.l.b16 %v2669
        %v2707 = vunpack.c.l.b16 %v2670
        %v2708 = vunpack.c.l.b16 %v2671
        %v2709 = vunpack.c.l.b16 %v2672
        %v2710 = vunpack.c.l.b16 %v2673
        %v2711 = vunpack.c.l.b16 %v2674
        %v2712 = vunpack.c.l.b16 %v2675
        %v2713 = vunpack.c.l.b16 %v2676
        %v2714 = vunpack.c.l.b16 %v2677
        %v2715 = vunpack.c.l.b16 %v2678
        %v2716 = vunpack.c.l.b16 %v2679
        %v2717 = vunpack.c.l.b16 %v2680
        %v2718 = vunpack.c.l.b16 %v2681
        %v2719 = vunpack.c.l.b16 %v2682
        %v2720 = vunpack.c.l.b16 %v2683
        %v2721 = vunpack.c.l.b16 %v2684
        %v2722 = vpack.c.b16 %v2707, %v2706
        %v2723 = vpack.c.b16 %v2709, %v2708
        %v2724 = vpack.c.b16 %v2711, %v2710
        %v2725 = vpack.c.b16 %v2713, %v2712
        %v2726 = vpack.c.b16 %v2715, %v2714
        %v2727 = vpack.c.b16 %v2717, %v2716
        %v2728 = vpack.c.b16 %v2719, %v2718
        %v2729 = vpack.c.b16 %v2721, %v2720
        %2738 = vmatprep.subr.bf16.mxu0 0
        %2739 = vmatpush1.bf16.msra.mxu0 %v2722
        %2740 = vmatprep.subr.bf16.mxu0 0
        %2741 = vmatpush1.bf16.msra.mxu0 %v2723
        %2742 = vmatprep.subr.bf16.mxu0 0
        %2743 = vmatpush1.bf16.msra.mxu0 %v2724
        %2744 = vmatprep.subr.bf16.mxu0 0
        %2745 = vmatpush1.bf16.msra.mxu0 %v2725
        %2746 = vmatprep.subr.bf16.mxu0 0
        %2747 = vmatpush1.bf16.msra.mxu0 %v2726
        %2748 = vmatprep.subr.bf16.mxu0 0
        %2749 = vmatpush1.bf16.msra.mxu0 %v2727
        %2750 = vmatprep.subr.bf16.mxu0 0
        %2751 = vmatpush1.bf16.msra.mxu0 %v2728
        %2752 = vmatprep.subr.bf16.mxu0 0
        %2753 = vmatpush1.bf16.msra.mxu0 %v2729
        %2754 = vmatprep.subr.bf16.mxu0 0
        %2755 = vmatpush1.bf16.msra.mxu0 0
        %2756 = vmatprep.subr.bf16.mxu0 0
        %2757 = vmatpush1.bf16.msra.mxu0 0
        %2758 = vmatprep.subr.bf16.mxu0 0
        %2759 = vmatpush1.bf16.msra.mxu0 0
        %2760 = vmatprep.subr.bf16.mxu0 0
        %2761 = vmatpush1.bf16.msra.mxu0 0
        %2762 = vmatprep.subr.bf16.mxu0 0
        %2763 = vmatpush1.bf16.msra.mxu0 0
        %2764 = vmatprep.subr.bf16.mxu0 0
        %2765 = vmatpush1.bf16.msra.mxu0 0
        %2766 = vmatprep.subr.bf16.mxu0 0
        %2767 = vmatpush1.bf16.msra.mxu0 0
        %2768 = vmatprep.subr.bf16.mxu0 0
        %2769 = vmatpush1.bf16.msra.mxu0 0
        %2770 = vmatprep.mubr.bf16.mxu0 0
        %2771 = vmatmul.mubr.bf16.gmra.mrb[0].mxu0 %v2667
        %v2772 = vpop.f32.mrb[0].mxu0
        %v2773 = vadd.f32 %v2689, %v2772
        %v2774 = vpop.f32.mrb[0].mxu0
        %v2775 = vpop.f32.mrb[0].mxu0
        %v2776 = vadd.f32 %v2689, %v2775
        %v2777 = vpop.f32.mrb[0].mxu0
        %2778 = vdwg.mxu0
        %v2779 = vtanh.pop %v2773
        %v2780 = vtanh.pop %v2776
        %v2781 = vpack.c.bf16 %v2780, %v2779
        %s2782 = scalar_lea.vmem [#allocation3], 256
        %v2783 = vld [vmem:[%s2782] sm:$0xf]
        %v2784 = vld [vmem:[%s2782 + $0x4] sm:$0xf]
        %v2785 = vld [vmem:[%s2782 + $0x8] sm:$0xf]
        %v2786 = vld [vmem:[%s2782 + $0xc] sm:$0xf]
        %v2787 = vld [vmem:[%s2782 + $0x10] sm:$0xf]
        %v2788 = vld [vmem:[%s2782 + $0x14] sm:$0xf]
        %v2789 = vld [vmem:[%s2782 + $0x18] sm:$0xf]
        %v2790 = vld [vmem:[%s2782 + $0x1c] sm:$0xf]
        %v2791 = vld [vmem:[%s2782 + $0x20] sm:$0xf]
        %v2792 = vld [vmem:[%s2782 + $0x24] sm:$0xf]
        %v2793 = vld [vmem:[%s2782 + $0x28] sm:$0xf]
        %v2794 = vld [vmem:[%s2782 + $0x2c] sm:$0xf]
        %v2795 = vld [vmem:[%s2782 + $0x30] sm:$0xf]
        %v2796 = vld [vmem:[%s2782 + $0x34] sm:$0xf]
        %v2797 = vld [vmem:[%s2782 + $0x38] sm:$0xf]
        %v2798 = vld [vmem:[%s2782 + $0x3c] sm:$0xf]
        %v2799 = vld [vmem:[%s6 + $0x7] sm:$0x1]
        %v2800 = vlaneseq
        %v2801 = vshrl.u32 %v2800, 7
        %v2802 = vsub.s32 0, %v2801
        %v2803 = vrot.slane %v2799, %v2802
        %v2820 = vunpack.c.l.b16 %v2783
        %v2821 = vunpack.c.l.b16 %v2784
        %v2822 = vunpack.c.l.b16 %v2785
        %v2823 = vunpack.c.l.b16 %v2786
        %v2824 = vunpack.c.l.b16 %v2787
        %v2825 = vunpack.c.l.b16 %v2788
        %v2826 = vunpack.c.l.b16 %v2789
        %v2827 = vunpack.c.l.b16 %v2790
        %v2828 = vunpack.c.l.b16 %v2791
        %v2829 = vunpack.c.l.b16 %v2792
        %v2830 = vunpack.c.l.b16 %v2793
        %v2831 = vunpack.c.l.b16 %v2794
        %v2832 = vunpack.c.l.b16 %v2795
        %v2833 = vunpack.c.l.b16 %v2796
        %v2834 = vunpack.c.l.b16 %v2797
        %v2835 = vunpack.c.l.b16 %v2798
        %v2836 = vpack.c.b16 %v2821, %v2820
        %v2837 = vpack.c.b16 %v2823, %v2822
        %v2838 = vpack.c.b16 %v2825, %v2824
        %v2839 = vpack.c.b16 %v2827, %v2826
        %v2840 = vpack.c.b16 %v2829, %v2828
        %v2841 = vpack.c.b16 %v2831, %v2830
        %v2842 = vpack.c.b16 %v2833, %v2832
        %v2843 = vpack.c.b16 %v2835, %v2834
        %2852 = vmatprep.subr.bf16.mxu0 0
        %2853 = vmatpush1.bf16.msra.mxu0 %v2836
        %2854 = vmatprep.subr.bf16.mxu0 0
        %2855 = vmatpush1.bf16.msra.mxu0 %v2837
        %2856 = vmatprep.subr.bf16.mxu0 0
        %2857 = vmatpush1.bf16.msra.mxu0 %v2838
        %2858 = vmatprep.subr.bf16.mxu0 0
        %2859 = vmatpush1.bf16.msra.mxu0 %v2839
        %2860 = vmatprep.subr.bf16.mxu0 0
        %2861 = vmatpush1.bf16.msra.mxu0 %v2840
        %2862 = vmatprep.subr.bf16.mxu0 0
        %2863 = vmatpush1.bf16.msra.mxu0 %v2841
        %2864 = vmatprep.subr.bf16.mxu0 0
        %2865 = vmatpush1.bf16.msra.mxu0 %v2842
        %2866 = vmatprep.subr.bf16.mxu0 0
        %2867 = vmatpush1.bf16.msra.mxu0 %v2843
        %2868 = vmatprep.subr.bf16.mxu0 0
        %2869 = vmatpush1.bf16.msra.mxu0 0
        %2870 = vmatprep.subr.bf16.mxu0 0
        %2871 = vmatpush1.bf16.msra.mxu0 0
        %2872 = vmatprep.subr.bf16.mxu0 0
        %2873 = vmatpush1.bf16.msra.mxu0 0
        %2874 = vmatprep.subr.bf16.mxu0 0
        %2875 = vmatpush1.bf16.msra.mxu0 0
        %2876 = vmatprep.subr.bf16.mxu0 0
        %2877 = vmatpush1.bf16.msra.mxu0 0
        %2878 = vmatprep.subr.bf16.mxu0 0
        %2879 = vmatpush1.bf16.msra.mxu0 0
        %2880 = vmatprep.subr.bf16.mxu0 0
        %2881 = vmatpush1.bf16.msra.mxu0 0
        %2882 = vmatprep.subr.bf16.mxu0 0
        %2883 = vmatpush1.bf16.msra.mxu0 0
        %2884 = vmatprep.mubr.bf16.mxu0 0
        %2885 = vmatmul.mubr.bf16.gmra.mrb[0].mxu0 %v2781
        %v2886 = vpop.f32.mrb[0].mxu0
        %v2887 = vadd.f32 %v2803, %v2886
        %v2888 = vpop.f32.mrb[0].mxu0
        %v2889 = vpop.f32.mrb[0].mxu0
        %v2890 = vadd.f32 %v2803, %v2889
        %v2891 = vpop.f32.mrb[0].mxu0
        %2892 = vdwg.mxu0
        %v2893 = vtanh.pop %v2887
        %v2894 = vtanh.pop %v2890
        %v2895 = vpack.c.bf16 %v2894, %v2893
        %s2896 = scalar_lea.vmem [#allocation3], 320
        %v2897 = vld [vmem:[%s2896] sm:$0xf]
        %v2898 = vld [vmem:[%s2896 + $0x4] sm:$0xf]
        %v2899 = vld [vmem:[%s2896 + $0x8] sm:$0xf]
        %v2900 = vld [vmem:[%s2896 + $0xc] sm:$0xf]
        %v2901 = vld [vmem:[%s2896 + $0x10] sm:$0xf]
        %v2902 = vld [vmem:[%s2896 + $0x14] sm:$0xf]
        %v2903 = vld [vmem:[%s2896 + $0x18] sm:$0xf]
        %v2904 = vld [vmem:[%s2896 + $0x1c] sm:$0xf]
        %v2905 = vld [vmem:[%s2896 + $0x20] sm:$0xf]
        %v2906 = vld [vmem:[%s2896 + $0x24] sm:$0xf]
        %v2907 = vld [vmem:[%s2896 + $0x28] sm:$0xf]
        %v2908 = vld [vmem:[%s2896 + $0x2c] sm:$0xf]
        %v2909 = vld [vmem:[%s2896 + $0x30] sm:$0xf]
        %v2910 = vld [vmem:[%s2896 + $0x34] sm:$0xf]
        %v2911 = vld [vmem:[%s2896 + $0x38] sm:$0xf]
        %v2912 = vld [vmem:[%s2896 + $0x3c] sm:$0xf]
        %v2913 = vld [vmem:[%s6 + $0x8] sm:$0x1]
        %v2914 = vlaneseq
        %v2915 = vshrl.u32 %v2914, 7
        %v2916 = vsub.s32 0, %v2915
        %v2917 = vrot.slane %v2913, %v2916
        %v2934 = vunpack.c.l.b16 %v2897
        %v2935 = vunpack.c.l.b16 %v2898
        %v2936 = vunpack.c.l.b16 %v2899
        %v2937 = vunpack.c.l.b16 %v2900
        %v2938 = vunpack.c.l.b16 %v2901
        %v2939 = vunpack.c.l.b16 %v2902
        %v2940 = vunpack.c.l.b16 %v2903
        %v2941 = vunpack.c.l.b16 %v2904
        %v2942 = vunpack.c.l.b16 %v2905
        %v2943 = vunpack.c.l.b16 %v2906
        %v2944 = vunpack.c.l.b16 %v2907
        %v2945 = vunpack.c.l.b16 %v2908
        %v2946 = vunpack.c.l.b16 %v2909
        %v2947 = vunpack.c.l.b16 %v2910
        %v2948 = vunpack.c.l.b16 %v2911
        %v2949 = vunpack.c.l.b16 %v2912
        %v2950 = vpack.c.b16 %v2935, %v2934
        %v2951 = vpack.c.b16 %v2937, %v2936
        %v2952 = vpack.c.b16 %v2939, %v2938
        %v2953 = vpack.c.b16 %v2941, %v2940
        %v2954 = vpack.c.b16 %v2943, %v2942
        %v2955 = vpack.c.b16 %v2945, %v2944
        %v2956 = vpack.c.b16 %v2947, %v2946
        %v2957 = vpack.c.b16 %v2949, %v2948
        %2966 = vmatprep.subr.bf16.mxu0 0
        %2967 = vmatpush1.bf16.msra.mxu0 %v2950
        %2968 = vmatprep.subr.bf16.mxu0 0
        %2969 = vmatpush1.bf16.msra.mxu0 %v2951
        %2970 = vmatprep.subr.bf16.mxu0 0
        %2971 = vmatpush1.bf16.msra.mxu0 %v2952
        %2972 = vmatprep.subr.bf16.mxu0 0
        %2973 = vmatpush1.bf16.msra.mxu0 %v2953
        %2974 = vmatprep.subr.bf16.mxu0 0
        %2975 = vmatpush1.bf16.msra.mxu0 %v2954
        %2976 = vmatprep.subr.bf16.mxu0 0
        %2977 = vmatpush1.bf16.msra.mxu0 %v2955
        %2978 = vmatprep.subr.bf16.mxu0 0
        %2979 = vmatpush1.bf16.msra.mxu0 %v2956
        %2980 = vmatprep.subr.bf16.mxu0 0
        %2981 = vmatpush1.bf16.msra.mxu0 %v2957
        %2982 = vmatprep.subr.bf16.mxu0 0
        %2983 = vmatpush1.bf16.msra.mxu0 0
        %2984 = vmatprep.subr.bf16.mxu0 0
        %2985 = vmatpush1.bf16.msra.mxu0 0
        %2986 = vmatprep.subr.bf16.mxu0 0
        %2987 = vmatpush1.bf16.msra.mxu0 0
        %2988 = vmatprep.subr.bf16.mxu0 0
        %2989 = vmatpush1.bf16.msra.mxu0 0
        %2990 = vmatprep.subr.bf16.mxu0 0
        %2991 = vmatpush1.bf16.msra.mxu0 0
        %2992 = vmatprep.subr.bf16.mxu0 0
        %2993 = vmatpush1.bf16.msra.mxu0 0
        %2994 = vmatprep.subr.bf16.mxu0 0
        %2995 = vmatpush1.bf16.msra.mxu0 0
        %2996 = vmatprep.subr.bf16.mxu0 0
        %2997 = vmatpush1.bf16.msra.mxu0 0
        %2998 = vmatprep.mubr.bf16.mxu0 0
        %2999 = vmatmul.mubr.bf16.gmra.mrb[0].mxu0 %v2895
        %v3000 = vpop.f32.mrb[0].mxu0
        %v3001 = vadd.f32 %v2917, %v3000
        %v3002 = vpop.f32.mrb[0].mxu0
        %v3003 = vpop.f32.mrb[0].mxu0
        %v3004 = vadd.f32 %v2917, %v3003
        %v3005 = vpop.f32.mrb[0].mxu0
        %3006 = vdwg.mxu0
        %3007 = vrot.lane.b32.xlu0 %v365, 124
        %v3008 = vpop.permute.xlu0 %3007
        %3009 = vrot.lane.b32.xlu0 %v366, 124
        %v3010 = vpop.permute.xlu0 %3009
        %v3013 = vsub.f32 %v3001, %v3008
        %v3014 = vsub.f32 %v3004, %v3010
        %3015 = vset.pattern.permute.xlu0 8
        %3016 = vperm.xlu0 %3015, %v365
        %v3017 = vpop.permute.xlu0 %3016
        %3019 = vset.pattern.permute.xlu0 8
        %3020 = vperm.xlu0 %3019, %v366
        %v3021 = vpop.permute.xlu0 %3020
        %v3023 = vmul.f32 %v3017, %v3013
        %v3024 = vmul.f32 %v3021, %v3014
        %v3025 = vmul.f32 %v3023, %v3023
        %v3026 = vmul.f32 %v3024, %v3024
        %vm3027 = vcmask 31744
        %v3028 = vsel %vm3027, %v3025, 0.0
        %v3029 = vsel %vm3027, %v3026, 0.0
        %v3030 = vadd.f32 %v3028, %v3029
        %v3031 = vrot.slane %v3030, 4
        %v3032 = vadd.f32 %v3030, %v3031
        %v3033 = vrot.slane %v3032, 2
        %v3034 = vadd.f32 %v3032, %v3033
        %v3035 = vrot.slane %v3034, 1
        %v3036 = vadd.f32 %v3034, %v3035
        %v3037 = vsel %vm3027, %v3036, 0.0
        %3038 = vadd.xlane.f32.xlu0 %v3037
        %v3039 = vpop.xlane.xlu0 %3038
        %v3040 = vadd.f32 %v3039, 0.0
        %3041 = vrot.lane.b32.xlu0 %v365, 12
        %v3042 = vpop.permute.xlu0 %3041
        %3043 = vrot.lane.b32.xlu0 %v366, 12
        %v3044 = vpop.permute.xlu0 %3043
        %v3047 = vsub.f32 %v3001, %v3042
        %v3048 = vsub.f32 %v3004, %v3044
        %3049 = vset.pattern.permute.xlu0 24
        %3050 = vperm.xlu0 %3049, %v365
        %v3051 = vpop.permute.xlu0 %3050
        %3053 = vset.pattern.permute.xlu0 24
        %3054 = vperm.xlu0 %3053, %v366
        %v3055 = vpop.permute.xlu0 %3054
        %v3057 = vmul.f32 %v3051, %v3047
        %v3058 = vmul.f32 %v3055, %v3048
        %v3059 = vmul.f32 %v3057, %v3057
        %v3060 = vmul.f32 %v3058, %v3058
        %vm3061 = vcmask 294144
        %v3062 = vsel %vm3061, %v3059, 0.0
        %v3063 = vsel %vm3061, %v3060, 0.0
        %v3064 = vadd.f32 %v3062, %v3063
        %v3065 = vrot.slane %v3064, 4
        %v3066 = vadd.f32 %v3064, %v3065
        %v3067 = vrot.slane %v3066, 2
        %v3068 = vadd.f32 %v3066, %v3067
        %v3069 = vrot.slane %v3068, 1
        %v3070 = vadd.f32 %v3068, %v3069
        %3072 = vrot.lane.b32.xlu0 %v3070, 96
        %v3073 = vpop.permute.xlu0 %3072
        %v3075 = vsel %vm3027, %v3073, 0.0
        %3076 = vadd.xlane.f32.xlu0 %v3075
        %v3077 = vpop.xlane.xlu0 %3076
        %v3078 = vadd.f32 %v3040, %v3077
        %3079 = vrot.lane.b32.xlu0 %v365, 28
        %v3080 = vpop.permute.xlu0 %3079
        %3081 = vrot.lane.b32.xlu0 %v366, 28
        %v3082 = vpop.permute.xlu0 %3081
        %v3085 = vsub.f32 %v3001, %v3080
        %v3086 = vsub.f32 %v3004, %v3082
        %3087 = vset.pattern.permute.xlu0 40
        %3088 = vperm.xlu0 %3087, %v365
        %v3089 = vpop.permute.xlu0 %3088
        %3091 = vset.pattern.permute.xlu0 40
        %3092 = vperm.xlu0 %3091, %v366
        %v3093 = vpop.permute.xlu0 %3092
        %v3095 = vmul.f32 %v3089, %v3085
        %v3096 = vmul.f32 %v3093, %v3086
        %v3097 = vmul.f32 %v3095, %v3095
        %v3098 = vmul.f32 %v3096, %v3096
        %vm3099 = vcmask 556544
        %v3100 = vsel %vm3099, %v3097, 0.0
        %v3101 = vsel %vm3099, %v3098, 0.0
        %v3102 = vadd.f32 %v3100, %v3101
        %v3103 = vrot.slane %v3102, 4
        %v3104 = vadd.f32 %v3102, %v3103
        %v3105 = vrot.slane %v3104, 2
        %v3106 = vadd.f32 %v3104, %v3105
        %v3107 = vrot.slane %v3106, 1
        %v3108 = vadd.f32 %v3106, %v3107
        %3110 = vrot.lane.b32.xlu0 %v3108, 64
        %v3111 = vpop.permute.xlu0 %3110
        %v3113 = vsel %vm3027, %v3111, 0.0
        %3114 = vadd.xlane.f32.xlu0 %v3113
        %v3115 = vpop.xlane.xlu0 %3114
        %v3116 = vadd.f32 %v3078, %v3115
        %3117 = vrot.lane.b32.xlu0 %v365, 44
        %v3118 = vpop.permute.xlu0 %3117
        %3119 = vrot.lane.b32.xlu0 %v366, 44
        %v3120 = vpop.permute.xlu0 %3119
        %v3123 = vsub.f32 %v3001, %v3118
        %v3124 = vsub.f32 %v3004, %v3120
        %3125 = vset.pattern.permute.xlu0 56
        %3126 = vperm.xlu0 %3125, %v365
        %v3127 = vpop.permute.xlu0 %3126
        %3129 = vset.pattern.permute.xlu0 56
        %3130 = vperm.xlu0 %3129, %v366
        %v3131 = vpop.permute.xlu0 %3130
        %v3133 = vmul.f32 %v3127, %v3123
        %v3134 = vmul.f32 %v3131, %v3124
        %v3135 = vmul.f32 %v3133, %v3133
        %v3136 = vmul.f32 %v3134, %v3134
        %vm3137 = vcmask 818944
        %v3138 = vsel %vm3137, %v3135, 0.0
        %v3139 = vsel %vm3137, %v3136, 0.0
        %v3140 = vadd.f32 %v3138, %v3139
        %v3141 = vrot.slane %v3140, 4
        %v3142 = vadd.f32 %v3140, %v3141
        %v3143 = vrot.slane %v3142, 2
        %v3144 = vadd.f32 %v3142, %v3143
        %v3145 = vrot.slane %v3144, 1
        %v3146 = vadd.f32 %v3144, %v3145
        %3148 = vrot.lane.b32.xlu0 %v3146, 32
        %v3149 = vpop.permute.xlu0 %3148
        %v3151 = vsel %vm3027, %v3149, 0.0
        %3152 = vadd.xlane.f32.xlu0 %v3151
        %v3153 = vpop.xlane.xlu0 %3152
        %v3154 = vadd.f32 %v3116, %v3153
        %v3155 = vmul.f32 %v3154, 0.25
        %vm3156 = vcmask 0
        %3157 = vst.msk [vmem:[%s363] sm:$0x1] %vm3156, %v3155
        %p3158 = scmp.lt.s32.totalorder %s21, 1
        %s3159 = scalar_select %p3158, %s21, 1
        %s3160 = scalar_lea.vmem %s8, %s3159
        // Predicated region
        $region57: #{tpu_custom_call.1} parent=51 // pred_check
          %p3161 = pneg %p222
        $region58: #{tpu_custom_call.1} parent=51 // pred_check_branch
          %3163 = sbr.rel (%p3161) target = $region60
        $region59: #{tpu_custom_call.1} parent=51 // pred_region
          _
        $region60: #{tpu_custom_call.1} parent=51 // pred_fallthru
          _
      $region52: #{tpu_custom_call.1} parent=5 // pred_fallthru
        _
      %p3164 = scmp.le.s32.totalorder 2, %s16
      // Predicated region
      $region61: #{tpu_custom_call.1} parent=5 // pred_check
        %p3165 = pneg %p3164
      $region62: #{tpu_custom_call.1} parent=5 // pred_check_branch
        %3167 = sbr.rel (%p3165) target = $region64
      $region63: #{tpu_custom_call.1} parent=5 // pred_region
        %s3168 = ssub.s32 %s16, 2
        // Predicated region
        $region65: #{tpu_custom_call.1} parent=63 // pred_check
          %p3169 = pneg %p228
        $region66: #{tpu_custom_call.1} parent=63 // pred_check_branch
          %3171 = sbr.rel (%p3169) target = $region68
        $region67: #{tpu_custom_call.1} parent=63 // pred_region
          %p3172 = scmp.lt.s32.totalorder %s22, 1
          %s3173 = scalar_select %p3172, %s22, 1
          %s3174 = scalar_lea.vmem %s8, %s3173
        $region68: #{tpu_custom_call.1} parent=63 // pred_fallthru
          _
      $region64: #{tpu_custom_call.1} parent=5 // pred_fallthru
        _
    $region6: #{tpu_custom_call.1} parent=1 // loop_footer
      %s20 = sadd.s32 1, %s16
    $region7: #{tpu_custom_call.1} parent=1 // loop_footer_branch
      %15 = sbr.rel target = $region3
    $region8: #{tpu_custom_call.1} parent=1 // loop_exit
      _
    %3175 = vsyncpa [#allocation4], 1
    %s3176 = scalar_lea.sflag [#allocation4], 1
    %3177 = vsyncpa %s3176, 1

</llo_original>
